<compile_context>
chip_gen: v6e
topology: v6e:2x2x1
jax: 0.10.0
libtpu: 0.0.40
codegen_flags: <defaults>
</compile_context>

<pallas_src>
import numpy as np
import jax
import jax.numpy as jnp
from jax import lax
from jax.experimental import pallas as pl
from jax.experimental.pallas import tpu as pltpu


def _make_kernel(n_heads: int, batch: int, length: int):
    H, B, N = n_heads, batch, length

    def kernel(x_ref, wqkv_ref, bqkv_ref, wm_ref, bm_ref,
               w1x_ref, w1m_ref, b1_ref, gamma_ref, beta_ref,
               w2_ref, b2_ref, out_ref,
               qkv_ref, attn_ref, h1_ref):
        C, BN = x_ref.shape                       # (C, B*N) folded layout
        D = C // H
        f32 = jnp.float32

        x = x_ref[...]                            # (C, B*N), lane-dense

        # ---- fused Q/K/V projection: one (3C, C) x (C, B*N) MXU matmul --------
        # 1/sqrt(D) is already folded into the Q rows of wqkv/bqkv.
        qkv_ref[...] = (jnp.dot(wqkv_ref[...], x, preferred_element_type=f32)
                        + bqkv_ref[...])

        # ---- per-batch, per-head attention (scores must not mix batches) ------
        for b in range(B):
            for h in range(H):
                qh = qkv_ref[pl.ds(h * D, D), pl.ds(b * N, N)]            # (D, N)
                kh = qkv_ref[pl.ds(C + h * D, D), pl.ds(b * N, N)]        # (D, N)
                vh = qkv_ref[pl.ds(2 * C + h * D, D), pl.ds(b * N, N)]    # (D, N)

                # scores[n, m] = sum_d q[d, n] * k[d, m]   (scale pre-folded)
                s = lax.dot_general(qh, kh, (((0,), (0,)), ((), ())),
                                    preferred_element_type=f32)           # (N, N)
                s = s - jnp.max(s, axis=-1, keepdims=True)
                e = jnp.exp(s)
                p = e * pl.reciprocal(jnp.sum(e, axis=-1, keepdims=True),
                                      approx=True)                        # softmax

                # attn[d, n] = sum_m p[n, m] * v[d, m] -> write into head slot of
                # the (C, B*N) slab (no concatenate).
                attn_ref[pl.ds(h * D, D), pl.ds(b * N, N)] = lax.dot_general(
                    vh, p, (((1,), (1,)), ((), ())), preferred_element_type=f32)

        # ---- merge conv + first MLP conv (concat-free, lane-dense) ------------
        message = (jnp.dot(wm_ref[...], attn_ref[...], preferred_element_type=f32)
                   + bm_ref[...])                                          # (C, B*N)
        h1_ref[...] = (jnp.dot(w1x_ref[...], x, preferred_element_type=f32)
                       + jnp.dot(w1m_ref[...], message, preferred_element_type=f32)
                       + b1_ref[...])                                      # (2C, B*N)

        # ---- BatchNorm1d (training-mode stats over batch*length) + ReLU -------
        h1 = h1_ref[...]
        inv_cnt = 1.0 / float(BN)
        mean = jnp.sum(h1, axis=1, keepdims=True) * inv_cnt                # (2C, 1)
        centered = h1 - mean
        var = jnp.sum(centered * centered, axis=1, keepdims=True) * inv_cnt
        y = centered * (lax.rsqrt(var + 1e-5) * gamma_ref[...]) + beta_ref[...]
        y = jnp.maximum(y, 0.0)                                            # ReLU

        # ---- final conv ---------------------------------------------------------
        out_ref[...] = (jnp.dot(w2_ref[...], y, preferred_element_type=f32)
                        + b2_ref[...]).astype(out_ref.dtype)

    return kernel


def attentional_propagation(x, params, n_heads):
    """x: (B, C, N) float32. params: dict of PyTorch-layout weights."""
    B, C, N = x.shape
    H = n_heads
    D = C // H
    # Head-major channel permutation: new channel c' = h*D + d <- original c = d*H + h
    perm = np.array([d * H + h for h in range(H) for d in range(D)], dtype=np.int32)
    col = lambda v: v.reshape(-1, 1)
    scale = 1.0 / float(D) ** 0.5

    # Fused QKV weights (1/sqrt(D) folded into Q rows), head-major rows.
    wqkv = jnp.concatenate([params["wq"][perm, :] * scale,
                            params["wk"][perm, :],
                            params["wv"][perm, :]], axis=0)                # (3C, C)
    bqkv = jnp.concatenate([params["bq"][perm] * scale,
                            params["bk"][perm],
                            params["bv"][perm]]).reshape(-1, 1)            # (3C, 1)
    wm_p = params["wm"][:, perm]                                           # (C, C)
    w1 = params["w1"]
    w1_x, w1_m = w1[:, :C], w1[:, C:]                                      # (2C, C) each

    # Fold batch into the lane axis: (B, C, N) -> (C, B*N).
    x2d = jnp.transpose(x, (1, 0, 2)).reshape(C, B * N)

    args = (
        x2d,
        wqkv, bqkv,
        wm_p, col(params["bm"]),
        w1_x, w1_m, col(params["b1"]),
        col(params["gamma"]), col(params["beta"]),
        params["w2"], col(params["b2"]),
    )

    # Size the scoped VMEM limit to the real resident footprint (with headroom).
    elt = 4
    scratch_bytes = (3 * C + C + 2 * C) * (B * N) * elt
    arg_bytes = sum(int(np.prod(a.shape)) * elt for a in args)
    out_bytes = C * B * N * elt
    vmem_limit = int(min(2 * (arg_bytes + out_bytes + scratch_bytes) + (8 << 20),
                         56 << 20))

    out2d = pl.pallas_call(
        _make_kernel(H, B, N),
        out_shape=jax.ShapeDtypeStruct((C, B * N), x.dtype),
        in_specs=[pl.BlockSpec(memory_space=pltpu.MemorySpace.VMEM) for _ in args],
        out_specs=pl.BlockSpec(memory_space=pltpu.MemorySpace.VMEM),
        scratch_shapes=[
            pltpu.VMEM((3 * C, B * N), jnp.float32),   # fused q/k/v
            pltpu.VMEM((C, B * N), jnp.float32),       # attention slab (pre-merge)
            pltpu.VMEM((2 * C, B * N), jnp.float32),   # h1 (BN input)
        ],
        compiler_params=pltpu.CompilerParams(vmem_limit_bytes=vmem_limit),
    )(*args)

    return jnp.transpose(out2d.reshape(C, B, N), (1, 0, 2))               # (B, C, N)


# ---------------- pure-JAX reference (PyTorch semantics, original weights) -----------
def reference(x, params, n_heads):
    B, C, N = x.shape
    D = C // n_heads
    hp = jax.lax.Precision.HIGHEST

    def conv1x1(w, b, t):
        return jnp.einsum('oc,bcn->bon', w, t, precision=hp) + b[None, :, None]

    q = conv1x1(params['wq'], params['bq'], x).reshape(B, D, n_heads, N)
    k = conv1x1(params['wk'], params['bk'], x).reshape(B, D, n_heads, N)
    v = conv1x1(params['wv'], params['bv'], x).reshape(B, D, n_heads, N)
    scores = jnp.einsum('bdhn,bdhm->bhnm', q, k, precision=hp) / (D ** 0.5)
    attn_w = jax.nn.softmax(scores, axis=-1)
    attn = jnp.einsum('bhnm,bdhm->bdhn', attn_w, v, precision=hp).reshape(B, C, N)
    message = conv1x1(params['wm'], params['bm'], attn)

    cat = jnp.concatenate([x, message], axis=1)
    h1 = conv1x1(params['w1'], params['b1'], cat)
    mean = h1.mean(axis=(0, 2), keepdims=True)
    var = ((h1 - mean) ** 2).mean(axis=(0, 2), keepdims=True)   # biased
    y = ((h1 - mean) * lax.rsqrt(var + 1e-5)
         * params['gamma'][None, :, None] + params['beta'][None, :, None])
    y = jnp.maximum(y, 0.0)
    return conv1x1(params['w2'], params['b2'], y)


if __name__ == "__main__":
    feature_dim, n_heads, B, N = 32, 4, 2, 64   # B*N = 128 -> lane-dense folded layout

    key = jax.random.PRNGKey(0)
    ks = jax.random.split(key, 16)

    def w(k, shape, scale=0.1):
        return (scale * jax.random.normal(k, shape)).astype(jnp.float32)

    params = dict(
        wq=w(ks[0], (feature_dim, feature_dim)), bq=w(ks[1], (feature_dim,)),
        wk=w(ks[2], (feature_dim, feature_dim)), bk=w(ks[3], (feature_dim,)),
        wv=w(ks[4], (feature_dim, feature_dim)), bv=w(ks[5], (feature_dim,)),
        wm=w(ks[6], (feature_dim, feature_dim)), bm=w(ks[7], (feature_dim,)),
        w1=w(ks[8], (2 * feature_dim, 2 * feature_dim)), b1=w(ks[9], (2 * feature_dim,)),
        gamma=(jnp.ones((2 * feature_dim,), jnp.float32) + w(ks[10], (2 * feature_dim,))),
        beta=w(ks[11], (2 * feature_dim,)),
        w2=w(ks[12], (feature_dim, 2 * feature_dim)),
        b2=jnp.zeros((feature_dim,), jnp.float32),  # nn.init.constant_(mlp[-1].bias, 0.0)
    )
    x = jax.random.normal(ks[13], (B, feature_dim, N), dtype=jnp.float32)

    out = jax.block_until_ready(attentional_propagation(x, params, n_heads))

    ref = reference(x, params, n_heads)
    err = float(jnp.max(jnp.abs(out - ref)))
    if not np.isfinite(err) or err > 2e-2:
        raise AssertionError(f"kernel/reference mismatch, max abs err = {err}")

    print("KERNEL_OK")
</pallas_src>

<mosaic_0001>
module attributes {stable_mosaic.version = 11 : i64} {
  func.func @kernel(%arg0: memref<32x128xf32, #tpu.memory_space<vmem>>, %arg1: memref<96x32xf32, #tpu.memory_space<vmem>>, %arg2: memref<96x1xf32, #tpu.memory_space<vmem>>, %arg3: memref<32x32xf32, #tpu.memory_space<vmem>>, %arg4: memref<32x1xf32, #tpu.memory_space<vmem>>, %arg5: memref<64x32xf32, #tpu.memory_space<vmem>>, %arg6: memref<64x32xf32, #tpu.memory_space<vmem>>, %arg7: memref<64x1xf32, #tpu.memory_space<vmem>>, %arg8: memref<64x1xf32, #tpu.memory_space<vmem>>, %arg9: memref<64x1xf32, #tpu.memory_space<vmem>>, %arg10: memref<32x64xf32, #tpu.memory_space<vmem>>, %arg11: memref<32x1xf32, #tpu.memory_space<vmem>>, %arg12: memref<32x128xf32, #tpu.memory_space<vmem>>, %arg13: memref<96x128xf32, #tpu.memory_space<vmem>>, %arg14: memref<32x128xf32, #tpu.memory_space<vmem>>, %arg15: memref<64x128xf32, #tpu.memory_space<vmem>>) attributes {dimension_semantics = [], scalar_prefetch = 0 : i64, scratch_operands = 3 : i64, tpu.core_type = #tpu.core_type<tc>} {
    %c0 = arith.constant 0 : index
    %c0_0 = arith.constant 0 : index
    %0 = vector.load %arg0[%c0, %c0_0] : memref<32x128xf32, #tpu.memory_space<vmem>>, vector<32x128xf32>
    %c0_1 = arith.constant 0 : index
    %c0_2 = arith.constant 0 : index
    %1 = vector.load %arg1[%c0_1, %c0_2] : memref<96x32xf32, #tpu.memory_space<vmem>>, vector<96x32xf32>
    %cst = arith.constant dense<0.000000e+00> : vector<96x128xf32>
    %2 = tpu.matmul %1, %0, %cst {dimension_numbers = #tpu.dot_dimension_numbers<[1], [0], [0], [1], [0, 0, 1, 1], [], []>} : vector<96x32xf32>, vector<32x128xf32>, vector<96x128xf32> -> vector<96x128xf32>
    %c0_3 = arith.constant 0 : index
    %c0_4 = arith.constant 0 : index
    %3 = vector.load %arg2[%c0_3, %c0_4] : memref<96x1xf32, #tpu.memory_space<vmem>>, vector<96x1xf32>
    %4 = vector.broadcast %3 : vector<96x1xf32> to vector<96x128xf32>
    %5 = arith.addf %2, %4 : vector<96x128xf32>
    %c0_5 = arith.constant 0 : index
    %c0_6 = arith.constant 0 : index
    %6 = vector.load %arg13[%c0_5, %c0_6] : memref<96x128xf32, #tpu.memory_space<vmem>>, vector<96x128xf32>
    tpu.vector_store %arg13[%c0_5, %c0_6], %5 {strides = array<i32>} : memref<96x128xf32, #tpu.memory_space<vmem>>, vector<96x128xf32>,
    %c0_7 = arith.constant 0 : index
    %c0_8 = arith.constant 0 : index
    %7 = vector.load %arg13[%c0_7, %c0_8] : memref<96x128xf32, #tpu.memory_space<vmem>>, vector<8x64xf32>
    %c32 = arith.constant 32 : index
    %c0_9 = arith.constant 0 : index
    %8 = vector.load %arg13[%c32, %c0_9] : memref<96x128xf32, #tpu.memory_space<vmem>>, vector<8x64xf32>
    %c64 = arith.constant 64 : index
    %c0_10 = arith.constant 0 : index
    %9 = vector.load %arg13[%c64, %c0_10] : memref<96x128xf32, #tpu.memory_space<vmem>>, vector<8x64xf32>
    %cst_11 = arith.constant dense<0.000000e+00> : vector<64x64xf32>
    %10 = tpu.matmul %7, %8, %cst_11 {dimension_numbers = #tpu.dot_dimension_numbers<[0], [0], [1], [1], [0, 1, 1, 1], [], []>} : vector<8x64xf32>, vector<8x64xf32>, vector<64x64xf32> -> vector<64x64xf32>
    %cst_12 = arith.constant dense<0xFF800000> : vector<64xf32>
    %11 = vector.multi_reduction <maximumf>, %10, %cst_12 [1] : vector<64x64xf32> to vector<64xf32>
    %12 = vector.shape_cast %11 : vector<64xf32> to vector<64x1xf32>
    %13 = vector.broadcast %12 : vector<64x1xf32> to vector<64x64xf32>
    %14 = arith.subf %10, %13 : vector<64x64xf32>
    %15 = math.exp %14 : vector<64x64xf32>
    %cst_13 = arith.constant dense<0.000000e+00> : vector<64xf32>
    %16 = vector.multi_reduction <add>, %15, %cst_13 [1] : vector<64x64xf32> to vector<64xf32>
    %17 = vector.shape_cast %16 : vector<64xf32> to vector<64x1xf32>
    %18 = tpu.reciprocal %17 {approx = true} : vector<64x1xf32> -> vector<64x1xf32>
    %19 = vector.broadcast %18 : vector<64x1xf32> to vector<64x64xf32>
    %20 = arith.mulf %15, %19 : vector<64x64xf32>
    %cst_14 = arith.constant dense<0.000000e+00> : vector<8x64xf32>
    %21 = tpu.matmul %9, %20, %cst_14 {dimension_numbers = #tpu.dot_dimension_numbers<[1], [1], [0], [0], [0, 0, 1, 0], [], []>} : vector<8x64xf32>, vector<64x64xf32>, vector<8x64xf32> -> vector<8x64xf32>
    %c0_15 = arith.constant 0 : index
    %c0_16 = arith.constant 0 : index
    %22 = vector.load %arg14[%c0_15, %c0_16] : memref<32x128xf32, #tpu.memory_space<vmem>>, vector<8x64xf32>
    tpu.vector_store %arg14[%c0_15, %c0_16], %21 {strides = array<i32>} : memref<32x128xf32, #tpu.memory_space<vmem>>, vector<8x64xf32>,
    %c8 = arith.constant 8 : index
    %c0_17 = arith.constant 0 : index
    %23 = vector.load %arg13[%c8, %c0_17] : memref<96x128xf32, #tpu.memory_space<vmem>>, vector<8x64xf32>
    %c40 = arith.constant 40 : index
    %c0_18 = arith.constant 0 : index
    %24 = vector.load %arg13[%c40, %c0_18] : memref<96x128xf32, #tpu.memory_space<vmem>>, vector<8x64xf32>
    %c72 = arith.constant 72 : index
    %c0_19 = arith.constant 0 : index
    %25 = vector.load %arg13[%c72, %c0_19] : memref<96x128xf32, #tpu.memory_space<vmem>>, vector<8x64xf32>
    %cst_20 = arith.constant dense<0.000000e+00> : vector<64x64xf32>
    %26 = tpu.matmul %23, %24, %cst_20 {dimension_numbers = #tpu.dot_dimension_numbers<[0], [0], [1], [1], [0, 1, 1, 1], [], []>} : vector<8x64xf32>, vector<8x64xf32>, vector<64x64xf32> -> vector<64x64xf32>
    %cst_21 = arith.constant dense<0xFF800000> : vector<64xf32>
    %27 = vector.multi_reduction <maximumf>, %26, %cst_21 [1] : vector<64x64xf32> to vector<64xf32>
    %28 = vector.shape_cast %27 : vector<64xf32> to vector<64x1xf32>
    %29 = vector.broadcast %28 : vector<64x1xf32> to vector<64x64xf32>
    %30 = arith.subf %26, %29 : vector<64x64xf32>
    %31 = math.exp %30 : vector<64x64xf32>
    %cst_22 = arith.constant dense<0.000000e+00> : vector<64xf32>
    %32 = vector.multi_reduction <add>, %31, %cst_22 [1] : vector<64x64xf32> to vector<64xf32>
    %33 = vector.shape_cast %32 : vector<64xf32> to vector<64x1xf32>
    %34 = tpu.reciprocal %33 {approx = true} : vector<64x1xf32> -> vector<64x1xf32>
    %35 = vector.broadcast %34 : vector<64x1xf32> to vector<64x64xf32>
    %36 = arith.mulf %31, %35 : vector<64x64xf32>
    %cst_23 = arith.constant dense<0.000000e+00> : vector<8x64xf32>
    %37 = tpu.matmul %25, %36, %cst_23 {dimension_numbers = #tpu.dot_dimension_numbers<[1], [1], [0], [0], [0, 0, 1, 0], [], []>} : vector<8x64xf32>, vector<64x64xf32>, vector<8x64xf32> -> vector<8x64xf32>
    %c8_24 = arith.constant 8 : index
    %c0_25 = arith.constant 0 : index
    %38 = vector.load %arg14[%c8_24, %c0_25] : memref<32x128xf32, #tpu.memory_space<vmem>>, vector<8x64xf32>
    tpu.vector_store %arg14[%c8_24, %c0_25], %37 {strides = array<i32>} : memref<32x128xf32, #tpu.memory_space<vmem>>, vector<8x64xf32>,
    %c16 = arith.constant 16 : index
    %c0_26 = arith.constant 0 : index
    %39 = vector.load %arg13[%c16, %c0_26] : memref<96x128xf32, #tpu.memory_space<vmem>>, vector<8x64xf32>
    %c48 = arith.constant 48 : index
    %c0_27 = arith.constant 0 : index
    %40 = vector.load %arg13[%c48, %c0_27] : memref<96x128xf32, #tpu.memory_space<vmem>>, vector<8x64xf32>
    %c80 = arith.constant 80 : index
    %c0_28 = arith.constant 0 : index
    %41 = vector.load %arg13[%c80, %c0_28] : memref<96x128xf32, #tpu.memory_space<vmem>>, vector<8x64xf32>
    %cst_29 = arith.constant dense<0.000000e+00> : vector<64x64xf32>
    %42 = tpu.matmul %39, %40, %cst_29 {dimension_numbers = #tpu.dot_dimension_numbers<[0], [0], [1], [1], [0, 1, 1, 1], [], []>} : vector<8x64xf32>, vector<8x64xf32>, vector<64x64xf32> -> vector<64x64xf32>
    %cst_30 = arith.constant dense<0xFF800000> : vector<64xf32>
    %43 = vector.multi_reduction <maximumf>, %42, %cst_30 [1] : vector<64x64xf32> to vector<64xf32>
    %44 = vector.shape_cast %43 : vector<64xf32> to vector<64x1xf32>
    %45 = vector.broadcast %44 : vector<64x1xf32> to vector<64x64xf32>
    %46 = arith.subf %42, %45 : vector<64x64xf32>
    %47 = math.exp %46 : vector<64x64xf32>
    %cst_31 = arith.constant dense<0.000000e+00> : vector<64xf32>
    %48 = vector.multi_reduction <add>, %47, %cst_31 [1] : vector<64x64xf32> to vector<64xf32>
    %49 = vector.shape_cast %48 : vector<64xf32> to vector<64x1xf32>
    %50 = tpu.reciprocal %49 {approx = true} : vector<64x1xf32> -> vector<64x1xf32>
    %51 = vector.broadcast %50 : vector<64x1xf32> to vector<64x64xf32>
    %52 = arith.mulf %47, %51 : vector<64x64xf32>
    %cst_32 = arith.constant dense<0.000000e+00> : vector<8x64xf32>
    %53 = tpu.matmul %41, %52, %cst_32 {dimension_numbers = #tpu.dot_dimension_numbers<[1], [1], [0], [0], [0, 0, 1, 0], [], []>} : vector<8x64xf32>, vector<64x64xf32>, vector<8x64xf32> -> vector<8x64xf32>
    %c16_33 = arith.constant 16 : index
    %c0_34 = arith.constant 0 : index
    %54 = vector.load %arg14[%c16_33, %c0_34] : memref<32x128xf32, #tpu.memory_space<vmem>>, vector<8x64xf32>
    tpu.vector_store %arg14[%c16_33, %c0_34], %53 {strides = array<i32>} : memref<32x128xf32, #tpu.memory_space<vmem>>, vector<8x64xf32>,
    %c24 = arith.constant 24 : index
    %c0_35 = arith.constant 0 : index
    %55 = vector.load %arg13[%c24, %c0_35] : memref<96x128xf32, #tpu.memory_space<vmem>>, vector<8x64xf32>
    %c56 = arith.constant 56 : index
    %c0_36 = arith.constant 0 : index
    %56 = vector.load %arg13[%c56, %c0_36] : memref<96x128xf32, #tpu.memory_space<vmem>>, vector<8x64xf32>
    %c88 = arith.constant 88 : index
    %c0_37 = arith.constant 0 : index
    %57 = vector.load %arg13[%c88, %c0_37] : memref<96x128xf32, #tpu.memory_space<vmem>>, vector<8x64xf32>
    %cst_38 = arith.constant dense<0.000000e+00> : vector<64x64xf32>
    %58 = tpu.matmul %55, %56, %cst_38 {dimension_numbers = #tpu.dot_dimension_numbers<[0], [0], [1], [1], [0, 1, 1, 1], [], []>} : vector<8x64xf32>, vector<8x64xf32>, vector<64x64xf32> -> vector<64x64xf32>
    %cst_39 = arith.constant dense<0xFF800000> : vector<64xf32>
    %59 = vector.multi_reduction <maximumf>, %58, %cst_39 [1] : vector<64x64xf32> to vector<64xf32>
    %60 = vector.shape_cast %59 : vector<64xf32> to vector<64x1xf32>
    %61 = vector.broadcast %60 : vector<64x1xf32> to vector<64x64xf32>
    %62 = arith.subf %58, %61 : vector<64x64xf32>
    %63 = math.exp %62 : vector<64x64xf32>
    %cst_40 = arith.constant dense<0.000000e+00> : vector<64xf32>
    %64 = vector.multi_reduction <add>, %63, %cst_40 [1] : vector<64x64xf32> to vector<64xf32>
    %65 = vector.shape_cast %64 : vector<64xf32> to vector<64x1xf32>
    %66 = tpu.reciprocal %65 {approx = true} : vector<64x1xf32> -> vector<64x1xf32>
    %67 = vector.broadcast %66 : vector<64x1xf32> to vector<64x64xf32>
    %68 = arith.mulf %63, %67 : vector<64x64xf32>
    %cst_41 = arith.constant dense<0.000000e+00> : vector<8x64xf32>
    %69 = tpu.matmul %57, %68, %cst_41 {dimension_numbers = #tpu.dot_dimension_numbers<[1], [1], [0], [0], [0, 0, 1, 0], [], []>} : vector<8x64xf32>, vector<64x64xf32>, vector<8x64xf32> -> vector<8x64xf32>
    %c24_42 = arith.constant 24 : index
    %c0_43 = arith.constant 0 : index
    %70 = vector.load %arg14[%c24_42, %c0_43] : memref<32x128xf32, #tpu.memory_space<vmem>>, vector<8x64xf32>
    tpu.vector_store %arg14[%c24_42, %c0_43], %69 {strides = array<i32>} : memref<32x128xf32, #tpu.memory_space<vmem>>, vector<8x64xf32>,
    %c0_44 = arith.constant 0 : index
    %c64_45 = arith.constant 64 : index
    %71 = vector.load %arg13[%c0_44, %c64_45] : memref<96x128xf32, #tpu.memory_space<vmem>>, vector<8x64xf32>
    %c32_46 = arith.constant 32 : index
    %c64_47 = arith.constant 64 : index
    %72 = vector.load %arg13[%c32_46, %c64_47] : memref<96x128xf32, #tpu.memory_space<vmem>>, vector<8x64xf32>
    %c64_48 = arith.constant 64 : index
    %c64_49 = arith.constant 64 : index
    %73 = vector.load %arg13[%c64_48, %c64_49] : memref<96x128xf32, #tpu.memory_space<vmem>>, vector<8x64xf32>
    %cst_50 = arith.constant dense<0.000000e+00> : vector<64x64xf32>
    %74 = tpu.matmul %71, %72, %cst_50 {dimension_numbers = #tpu.dot_dimension_numbers<[0], [0], [1], [1], [0, 1, 1, 1], [], []>} : vector<8x64xf32>, vector<8x64xf32>, vector<64x64xf32> -> vector<64x64xf32>
    %cst_51 = arith.constant dense<0xFF800000> : vector<64xf32>
    %75 = vector.multi_reduction <maximumf>, %74, %cst_51 [1] : vector<64x64xf32> to vector<64xf32>
    %76 = vector.shape_cast %75 : vector<64xf32> to vector<64x1xf32>
    %77 = vector.broadcast %76 : vector<64x1xf32> to vector<64x64xf32>
    %78 = arith.subf %74, %77 : vector<64x64xf32>
    %79 = math.exp %78 : vector<64x64xf32>
    %cst_52 = arith.constant dense<0.000000e+00> : vector<64xf32>
    %80 = vector.multi_reduction <add>, %79, %cst_52 [1] : vector<64x64xf32> to vector<64xf32>
    %81 = vector.shape_cast %80 : vector<64xf32> to vector<64x1xf32>
    %82 = tpu.reciprocal %81 {approx = true} : vector<64x1xf32> -> vector<64x1xf32>
    %83 = vector.broadcast %82 : vector<64x1xf32> to vector<64x64xf32>
    %84 = arith.mulf %79, %83 : vector<64x64xf32>
    %cst_53 = arith.constant dense<0.000000e+00> : vector<8x64xf32>
    %85 = tpu.matmul %73, %84, %cst_53 {dimension_numbers = #tpu.dot_dimension_numbers<[1], [1], [0], [0], [0, 0, 1, 0], [], []>} : vector<8x64xf32>, vector<64x64xf32>, vector<8x64xf32> -> vector<8x64xf32>
    %c0_54 = arith.constant 0 : index
    %c64_55 = arith.constant 64 : index
    %86 = vector.load %arg14[%c0_54, %c64_55] : memref<32x128xf32, #tpu.memory_space<vmem>>, vector<8x64xf32>
    tpu.vector_store %arg14[%c0_54, %c64_55], %85 {strides = array<i32>} : memref<32x128xf32, #tpu.memory_space<vmem>>, vector<8x64xf32>,
    %c8_56 = arith.constant 8 : index
    %c64_57 = arith.constant 64 : index
    %87 = vector.load %arg13[%c8_56, %c64_57] : memref<96x128xf32, #tpu.memory_space<vmem>>, vector<8x64xf32>
    %c40_58 = arith.constant 40 : index
    %c64_59 = arith.constant 64 : index
    %88 = vector.load %arg13[%c40_58, %c64_59] : memref<96x128xf32, #tpu.memory_space<vmem>>, vector<8x64xf32>
    %c72_60 = arith.constant 72 : index
    %c64_61 = arith.constant 64 : index
    %89 = vector.load %arg13[%c72_60, %c64_61] : memref<96x128xf32, #tpu.memory_space<vmem>>, vector<8x64xf32>
    %cst_62 = arith.constant dense<0.000000e+00> : vector<64x64xf32>
    %90 = tpu.matmul %87, %88, %cst_62 {dimension_numbers = #tpu.dot_dimension_numbers<[0], [0], [1], [1], [0, 1, 1, 1], [], []>} : vector<8x64xf32>, vector<8x64xf32>, vector<64x64xf32> -> vector<64x64xf32>
    %cst_63 = arith.constant dense<0xFF800000> : vector<64xf32>
    %91 = vector.multi_reduction <maximumf>, %90, %cst_63 [1] : vector<64x64xf32> to vector<64xf32>
    %92 = vector.shape_cast %91 : vector<64xf32> to vector<64x1xf32>
    %93 = vector.broadcast %92 : vector<64x1xf32> to vector<64x64xf32>
    %94 = arith.subf %90, %93 : vector<64x64xf32>
    %95 = math.exp %94 : vector<64x64xf32>
    %cst_64 = arith.constant dense<0.000000e+00> : vector<64xf32>
    %96 = vector.multi_reduction <add>, %95, %cst_64 [1] : vector<64x64xf32> to vector<64xf32>
    %97 = vector.shape_cast %96 : vector<64xf32> to vector<64x1xf32>
    %98 = tpu.reciprocal %97 {approx = true} : vector<64x1xf32> -> vector<64x1xf32>
    %99 = vector.broadcast %98 : vector<64x1xf32> to vector<64x64xf32>
    %100 = arith.mulf %95, %99 : vector<64x64xf32>
    %cst_65 = arith.constant dense<0.000000e+00> : vector<8x64xf32>
    %101 = tpu.matmul %89, %100, %cst_65 {dimension_numbers = #tpu.dot_dimension_numbers<[1], [1], [0], [0], [0, 0, 1, 0], [], []>} : vector<8x64xf32>, vector<64x64xf32>, vector<8x64xf32> -> vector<8x64xf32>
    %c8_66 = arith.constant 8 : index
    %c64_67 = arith.constant 64 : index
    %102 = vector.load %arg14[%c8_66, %c64_67] : memref<32x128xf32, #tpu.memory_space<vmem>>, vector<8x64xf32>
    tpu.vector_store %arg14[%c8_66, %c64_67], %101 {strides = array<i32>} : memref<32x128xf32, #tpu.memory_space<vmem>>, vector<8x64xf32>,
    %c16_68 = arith.constant 16 : index
    %c64_69 = arith.constant 64 : index
    %103 = vector.load %arg13[%c16_68, %c64_69] : memref<96x128xf32, #tpu.memory_space<vmem>>, vector<8x64xf32>
    %c48_70 = arith.constant 48 : index
    %c64_71 = arith.constant 64 : index
    %104 = vector.load %arg13[%c48_70, %c64_71] : memref<96x128xf32, #tpu.memory_space<vmem>>, vector<8x64xf32>
    %c80_72 = arith.constant 80 : index
    %c64_73 = arith.constant 64 : index
    %105 = vector.load %arg13[%c80_72, %c64_73] : memref<96x128xf32, #tpu.memory_space<vmem>>, vector<8x64xf32>
    %cst_74 = arith.constant dense<0.000000e+00> : vector<64x64xf32>
    %106 = tpu.matmul %103, %104, %cst_74 {dimension_numbers = #tpu.dot_dimension_numbers<[0], [0], [1], [1], [0, 1, 1, 1], [], []>} : vector<8x64xf32>, vector<8x64xf32>, vector<64x64xf32> -> vector<64x64xf32>
    %cst_75 = arith.constant dense<0xFF800000> : vector<64xf32>
    %107 = vector.multi_reduction <maximumf>, %106, %cst_75 [1] : vector<64x64xf32> to vector<64xf32>
    %108 = vector.shape_cast %107 : vector<64xf32> to vector<64x1xf32>
    %109 = vector.broadcast %108 : vector<64x1xf32> to vector<64x64xf32>
    %110 = arith.subf %106, %109 : vector<64x64xf32>
    %111 = math.exp %110 : vector<64x64xf32>
    %cst_76 = arith.constant dense<0.000000e+00> : vector<64xf32>
    %112 = vector.multi_reduction <add>, %111, %cst_76 [1] : vector<64x64xf32> to vector<64xf32>
    %113 = vector.shape_cast %112 : vector<64xf32> to vector<64x1xf32>
    %114 = tpu.reciprocal %113 {approx = true} : vector<64x1xf32> -> vector<64x1xf32>
    %115 = vector.broadcast %114 : vector<64x1xf32> to vector<64x64xf32>
    %116 = arith.mulf %111, %115 : vector<64x64xf32>
    %cst_77 = arith.constant dense<0.000000e+00> : vector<8x64xf32>
    %117 = tpu.matmul %105, %116, %cst_77 {dimension_numbers = #tpu.dot_dimension_numbers<[1], [1], [0], [0], [0, 0, 1, 0], [], []>} : vector<8x64xf32>, vector<64x64xf32>, vector<8x64xf32> -> vector<8x64xf32>
    %c16_78 = arith.constant 16 : index
    %c64_79 = arith.constant 64 : index
    %118 = vector.load %arg14[%c16_78, %c64_79] : memref<32x128xf32, #tpu.memory_space<vmem>>, vector<8x64xf32>
    tpu.vector_store %arg14[%c16_78, %c64_79], %117 {strides = array<i32>} : memref<32x128xf32, #tpu.memory_space<vmem>>, vector<8x64xf32>,
    %c24_80 = arith.constant 24 : index
    %c64_81 = arith.constant 64 : index
    %119 = vector.load %arg13[%c24_80, %c64_81] : memref<96x128xf32, #tpu.memory_space<vmem>>, vector<8x64xf32>
    %c56_82 = arith.constant 56 : index
    %c64_83 = arith.constant 64 : index
    %120 = vector.load %arg13[%c56_82, %c64_83] : memref<96x128xf32, #tpu.memory_space<vmem>>, vector<8x64xf32>
    %c88_84 = arith.constant 88 : index
    %c64_85 = arith.constant 64 : index
    %121 = vector.load %arg13[%c88_84, %c64_85] : memref<96x128xf32, #tpu.memory_space<vmem>>, vector<8x64xf32>
    %cst_86 = arith.constant dense<0.000000e+00> : vector<64x64xf32>
    %122 = tpu.matmul %119, %120, %cst_86 {dimension_numbers = #tpu.dot_dimension_numbers<[0], [0], [1], [1], [0, 1, 1, 1], [], []>} : vector<8x64xf32>, vector<8x64xf32>, vector<64x64xf32> -> vector<64x64xf32>
    %cst_87 = arith.constant dense<0xFF800000> : vector<64xf32>
    %123 = vector.multi_reduction <maximumf>, %122, %cst_87 [1] : vector<64x64xf32> to vector<64xf32>
    %124 = vector.shape_cast %123 : vector<64xf32> to vector<64x1xf32>
    %125 = vector.broadcast %124 : vector<64x1xf32> to vector<64x64xf32>
    %126 = arith.subf %122, %125 : vector<64x64xf32>
    %127 = math.exp %126 : vector<64x64xf32>
    %cst_88 = arith.constant dense<0.000000e+00> : vector<64xf32>
    %128 = vector.multi_reduction <add>, %127, %cst_88 [1] : vector<64x64xf32> to vector<64xf32>
    %129 = vector.shape_cast %128 : vector<64xf32> to vector<64x1xf32>
    %130 = tpu.reciprocal %129 {approx = true} : vector<64x1xf32> -> vector<64x1xf32>
    %131 = vector.broadcast %130 : vector<64x1xf32> to vector<64x64xf32>
    %132 = arith.mulf %127, %131 : vector<64x64xf32>
    %cst_89 = arith.constant dense<0.000000e+00> : vector<8x64xf32>
    %133 = tpu.matmul %121, %132, %cst_89 {dimension_numbers = #tpu.dot_dimension_numbers<[1], [1], [0], [0], [0, 0, 1, 0], [], []>} : vector<8x64xf32>, vector<64x64xf32>, vector<8x64xf32> -> vector<8x64xf32>
    %c24_90 = arith.constant 24 : index
    %c64_91 = arith.constant 64 : index
    %134 = vector.load %arg14[%c24_90, %c64_91] : memref<32x128xf32, #tpu.memory_space<vmem>>, vector<8x64xf32>
    tpu.vector_store %arg14[%c24_90, %c64_91], %133 {strides = array<i32>} : memref<32x128xf32, #tpu.memory_space<vmem>>, vector<8x64xf32>,
    %c0_92 = arith.constant 0 : index
    %c0_93 = arith.constant 0 : index
    %135 = vector.load %arg3[%c0_92, %c0_93] : memref<32x32xf32, #tpu.memory_space<vmem>>, vector<32x32xf32>
    %c0_94 = arith.constant 0 : index
    %c0_95 = arith.constant 0 : index
    %136 = vector.load %arg14[%c0_94, %c0_95] : memref<32x128xf32, #tpu.memory_space<vmem>>, vector<32x128xf32>
    %cst_96 = arith.constant dense<0.000000e+00> : vector<32x128xf32>
    %137 = tpu.matmul %135, %136, %cst_96 {dimension_numbers = #tpu.dot_dimension_numbers<[1], [0], [0], [1], [0, 0, 1, 1], [], []>} : vector<32x32xf32>, vector<32x128xf32>, vector<32x128xf32> -> vector<32x128xf32>
    %c0_97 = arith.constant 0 : index
    %c0_98 = arith.constant 0 : index
    %138 = vector.load %arg4[%c0_97, %c0_98] : memref<32x1xf32, #tpu.memory_space<vmem>>, vector<32x1xf32>
    %139 = vector.broadcast %138 : vector<32x1xf32> to vector<32x128xf32>
    %140 = arith.addf %137, %139 : vector<32x128xf32>
    %c0_99 = arith.constant 0 : index
    %c0_100 = arith.constant 0 : index
    %141 = vector.load %arg5[%c0_99, %c0_100] : memref<64x32xf32, #tpu.memory_space<vmem>>, vector<64x32xf32>
    %cst_101 = arith.constant dense<0.000000e+00> : vector<64x128xf32>
    %142 = tpu.matmul %141, %0, %cst_101 {dimension_numbers = #tpu.dot_dimension_numbers<[1], [0], [0], [1], [0, 0, 1, 1], [], []>} : vector<64x32xf32>, vector<32x128xf32>, vector<64x128xf32> -> vector<64x128xf32>
    %c0_102 = arith.constant 0 : index
    %c0_103 = arith.constant 0 : index
    %143 = vector.load %arg6[%c0_102, %c0_103] : memref<64x32xf32, #tpu.memory_space<vmem>>, vector<64x32xf32>
    %cst_104 = arith.constant dense<0.000000e+00> : vector<64x128xf32>
    %144 = tpu.matmul %143, %140, %cst_104 {dimension_numbers = #tpu.dot_dimension_numbers<[1], [0], [0], [1], [0, 0, 1, 1], [], []>} : vector<64x32xf32>, vector<32x128xf32>, vector<64x128xf32> -> vector<64x128xf32>
    %145 = arith.addf %142, %144 : vector<64x128xf32>
    %c0_105 = arith.constant 0 : index
    %c0_106 = arith.constant 0 : index
    %146 = vector.load %arg7[%c0_105, %c0_106] : memref<64x1xf32, #tpu.memory_space<vmem>>, vector<64x1xf32>
    %147 = vector.broadcast %146 : vector<64x1xf32> to vector<64x128xf32>
    %148 = arith.addf %145, %147 : vector<64x128xf32>
    %c0_107 = arith.constant 0 : index
    %c0_108 = arith.constant 0 : index
    %149 = vector.load %arg15[%c0_107, %c0_108] : memref<64x128xf32, #tpu.memory_space<vmem>>, vector<64x128xf32>
    tpu.vector_store %arg15[%c0_107, %c0_108], %148 {strides = array<i32>} : memref<64x128xf32, #tpu.memory_space<vmem>>, vector<64x128xf32>,
    %c0_109 = arith.constant 0 : index
    %c0_110 = arith.constant 0 : index
    %150 = vector.load %arg15[%c0_109, %c0_110] : memref<64x128xf32, #tpu.memory_space<vmem>>, vector<64x128xf32>
    %cst_111 = arith.constant dense<0.000000e+00> : vector<64xf32>
    %151 = vector.multi_reduction <add>, %150, %cst_111 [1] : vector<64x128xf32> to vector<64xf32>
    %152 = vector.shape_cast %151 : vector<64xf32> to vector<64x1xf32>
    %cst_112 = arith.constant 7.812500e-03 : f32
    %153 = vector.broadcast %cst_112 : f32 to vector<64x1xf32>
    %154 = arith.mulf %152, %153 : vector<64x1xf32>
    %155 = vector.broadcast %154 : vector<64x1xf32> to vector<64x128xf32>
    %156 = arith.subf %150, %155 : vector<64x128xf32>
    %157 = arith.mulf %156, %156 : vector<64x128xf32>
    %cst_113 = arith.constant dense<0.000000e+00> : vector<64xf32>
    %158 = vector.multi_reduction <add>, %157, %cst_113 [1] : vector<64x128xf32> to vector<64xf32>
    %159 = vector.shape_cast %158 : vector<64xf32> to vector<64x1xf32>
    %cst_114 = arith.constant 7.812500e-03 : f32
    %160 = vector.broadcast %cst_114 : f32 to vector<64x1xf32>
    %161 = arith.mulf %159, %160 : vector<64x1xf32>
    %cst_115 = arith.constant 9.99999974E-6 : f32
    %162 = vector.broadcast %cst_115 : f32 to vector<64x1xf32>
    %163 = arith.addf %161, %162 : vector<64x1xf32>
    %164 = math.rsqrt %163 : vector<64x1xf32>
    %c0_116 = arith.constant 0 : index
    %c0_117 = arith.constant 0 : index
    %165 = vector.load %arg8[%c0_116, %c0_117] : memref<64x1xf32, #tpu.memory_space<vmem>>, vector<64x1xf32>
    %166 = arith.mulf %164, %165 : vector<64x1xf32>
    %167 = vector.broadcast %166 : vector<64x1xf32> to vector<64x128xf32>
    %168 = arith.mulf %156, %167 : vector<64x128xf32>
    %c0_118 = arith.constant 0 : index
    %c0_119 = arith.constant 0 : index
    %169 = vector.load %arg9[%c0_118, %c0_119] : memref<64x1xf32, #tpu.memory_space<vmem>>, vector<64x1xf32>
    %170 = vector.broadcast %169 : vector<64x1xf32> to vector<64x128xf32>
    %171 = arith.addf %168, %170 : vector<64x128xf32>
    %cst_120 = arith.constant 0.000000e+00 : f32
    %172 = vector.broadcast %cst_120 : f32 to vector<64x128xf32>
    %173 = arith.maximumf %171, %172 : vector<64x128xf32>
    %c0_121 = arith.constant 0 : index
    %c0_122 = arith.constant 0 : index
    %174 = vector.load %arg10[%c0_121, %c0_122] : memref<32x64xf32, #tpu.memory_space<vmem>>, vector<32x64xf32>
    %cst_123 = arith.constant dense<0.000000e+00> : vector<32x128xf32>
    %175 = tpu.matmul %174, %173, %cst_123 {dimension_numbers = #tpu.dot_dimension_numbers<[1], [0], [0], [1], [0, 0, 1, 1], [], []>} : vector<32x64xf32>, vector<64x128xf32>, vector<32x128xf32> -> vector<32x128xf32>
    %c0_124 = arith.constant 0 : index
    %c0_125 = arith.constant 0 : index
    %176 = vector.load %arg11[%c0_124, %c0_125] : memref<32x1xf32, #tpu.memory_space<vmem>>, vector<32x1xf32>
    %177 = vector.broadcast %176 : vector<32x1xf32> to vector<32x128xf32>
    %178 = arith.addf %175, %177 : vector<32x128xf32>
    %c0_126 = arith.constant 0 : index
    %c0_127 = arith.constant 0 : index
    %179 = vector.load %arg12[%c0_126, %c0_127] : memref<32x128xf32, #tpu.memory_space<vmem>>, vector<32x128xf32>
    tpu.vector_store %arg12[%c0_126, %c0_127], %178 {strides = array<i32>} : memref<32x128xf32, #tpu.memory_space<vmem>>, vector<32x128xf32>,
    return
  }
}

</mosaic_0001>

<llo_original>
// kernel: tpu_custom_call.1
$region0: #{tpu_custom_call.1}
  #allocation0 [shape = 'u32[]', space=smem, size = 0x4, offset = 0x4, fixed_abs, tag = 'smem constant byte address 0x4 - core index']
  #allocation1 [shape = 'u32[144,128]{1,0:T(1,128)}', space=vmem, size = 0x12000, scoped, tag = 'internal scratch']
  #allocation2 [shape = 'f32[96,128]{1,0:T(8,128)}', space=vmem, size = 0xc000, scoped, tag = 'scratch operand']
  #allocation3 [shape = 'f32[32,128]{1,0:T(8,128)}', space=vmem, size = 0x4000, scoped, tag = 'scratch operand']
  #allocation4 [shape = 'f32[64,128]{1,0:T(8,128)}', space=vmem, size = 0x8000, scoped, tag = 'scratch operand']
  %s0 = inlined_call_operand.vmem [shape: f32[32,128], index: 0, kind: input, shape index: {}]
  %s1 = inlined_call_operand.vmem [shape: f32[96,32], index: 1, kind: input, shape index: {}]
  %s2 = inlined_call_operand.vmem [shape: f32[96,1], index: 2, kind: input, shape index: {}]
  %s3 = inlined_call_operand.vmem [shape: f32[32,32], index: 3, kind: input, shape index: {}]
  %s4 = inlined_call_operand.vmem [shape: f32[32,1], index: 4, kind: input, shape index: {}]
  %s5 = inlined_call_operand.vmem [shape: f32[64,32], index: 5, kind: input, shape index: {}]
  %s6 = inlined_call_operand.vmem [shape: f32[64,32], index: 6, kind: input, shape index: {}]
  %s7 = inlined_call_operand.vmem [shape: f32[64,1], index: 7, kind: input, shape index: {}]
  %s8 = inlined_call_operand.vmem [shape: f32[64,1], index: 8, kind: input, shape index: {}]
  %s9 = inlined_call_operand.vmem [shape: f32[64,1], index: 9, kind: input, shape index: {}]
  %s10 = inlined_call_operand.vmem [shape: f32[32,64], index: 10, kind: input, shape index: {}]
  %s11 = inlined_call_operand.vmem [shape: f32[32,1], index: 11, kind: input, shape index: {}]
  %s12 = inlined_call_operand.hbm [shape: f32[32,128], index: 12, kind: output, shape index: {}]
  %s13 = sld [smem:[#allocation0]]
  $region58: #{tpu_custom_call.1} parent=0
    _
  %s15 = ssub.s32 1, %s13
  %s16 = scalar_select 0, %s15, %s13
  $region1: #{tpu_custom_call.1} parent=0
    #allocation5 [shape = 'u8[16384]{0}', space=vmem, size = 0x4000, scoped, tag = 'output window, operand 0, single buffered']
    #allocation6 [shape = 's32[1]{0}', space=sflag, size = 0x4, scoped, tag = 'scoped memory for tpu_custom_call.1']
    %17 = vsyncpa [#allocation6], 0
    // Predicated region
    $region2: #{tpu_custom_call.1} parent=1 // pred_check
      _
    $region3: #{tpu_custom_call.1} parent=1 // pred_check_branch
      %19 = sbr.rel (0) target = $region5
    $region4: #{tpu_custom_call.1} parent=1 // pred_region
      _
    $region5: #{tpu_custom_call.1} parent=1 // pred_fallthru
      _
    // Predicated region
    $region6: #{tpu_custom_call.1} parent=1 // pred_check
      _
    $region7: #{tpu_custom_call.1} parent=1 // pred_check_branch
      %21 = sbr.rel (0) target = $region9
    $region8: #{tpu_custom_call.1} parent=1 // pred_region
      _
    $region9: #{tpu_custom_call.1} parent=1 // pred_fallthru
      _
    // Predicated region
    $region10: #{tpu_custom_call.1} parent=1 // pred_check
      _
    $region11: #{tpu_custom_call.1} parent=1 // pred_check_branch
      %23 = sbr.rel (0) target = $region13
    $region12: #{tpu_custom_call.1} parent=1 // pred_region
      _
    $region13: #{tpu_custom_call.1} parent=1 // pred_fallthru
      _
    // Predicated region
    $region14: #{tpu_custom_call.1} parent=1 // pred_check
      _
    $region15: #{tpu_custom_call.1} parent=1 // pred_check_branch
      %25 = sbr.rel (0) target = $region17
    $region16: #{tpu_custom_call.1} parent=1 // pred_region
      _
    $region17: #{tpu_custom_call.1} parent=1 // pred_fallthru
      _
    // Predicated region
    $region18: #{tpu_custom_call.1} parent=1 // pred_check
      _
    $region19: #{tpu_custom_call.1} parent=1 // pred_check_branch
      %27 = sbr.rel (0) target = $region21
    $region20: #{tpu_custom_call.1} parent=1 // pred_region
      _
    $region21: #{tpu_custom_call.1} parent=1 // pred_fallthru
      _
    // Predicated region
    $region22: #{tpu_custom_call.1} parent=1 // pred_check
      _
    $region23: #{tpu_custom_call.1} parent=1 // pred_check_branch
      %29 = sbr.rel (0) target = $region25
    $region24: #{tpu_custom_call.1} parent=1 // pred_region
      _
    $region25: #{tpu_custom_call.1} parent=1 // pred_fallthru
      _
    // Predicated region
    $region26: #{tpu_custom_call.1} parent=1 // pred_check
      _
    $region27: #{tpu_custom_call.1} parent=1 // pred_check_branch
      %31 = sbr.rel (0) target = $region29
    $region28: #{tpu_custom_call.1} parent=1 // pred_region
      _
    $region29: #{tpu_custom_call.1} parent=1 // pred_fallthru
      _
    // Predicated region
    $region30: #{tpu_custom_call.1} parent=1 // pred_check
      _
    $region31: #{tpu_custom_call.1} parent=1 // pred_check_branch
      %33 = sbr.rel (0) target = $region33
    $region32: #{tpu_custom_call.1} parent=1 // pred_region
      _
    $region33: #{tpu_custom_call.1} parent=1 // pred_fallthru
      _
    // Predicated region
    $region34: #{tpu_custom_call.1} parent=1 // pred_check
      _
    $region35: #{tpu_custom_call.1} parent=1 // pred_check_branch
      %35 = sbr.rel (0) target = $region37
    $region36: #{tpu_custom_call.1} parent=1 // pred_region
      _
    $region37: #{tpu_custom_call.1} parent=1 // pred_fallthru
      _
    // Predicated region
    $region38: #{tpu_custom_call.1} parent=1 // pred_check
      _
    $region39: #{tpu_custom_call.1} parent=1 // pred_check_branch
      %37 = sbr.rel (0) target = $region41
    $region40: #{tpu_custom_call.1} parent=1 // pred_region
      _
    $region41: #{tpu_custom_call.1} parent=1 // pred_fallthru
      _
    // Predicated region
    $region42: #{tpu_custom_call.1} parent=1 // pred_check
      _
    $region43: #{tpu_custom_call.1} parent=1 // pred_check_branch
      %39 = sbr.rel (0) target = $region45
    $region44: #{tpu_custom_call.1} parent=1 // pred_region
      _
    $region45: #{tpu_custom_call.1} parent=1 // pred_fallthru
      _
    // Predicated region
    $region46: #{tpu_custom_call.1} parent=1 // pred_check
      _
    $region47: #{tpu_custom_call.1} parent=1 // pred_check_branch
      %41 = sbr.rel (0) target = $region49
    $region48: #{tpu_custom_call.1} parent=1 // pred_region
      _
    $region49: #{tpu_custom_call.1} parent=1 // pred_fallthru
      _
    %v42 = vld [vmem:[%s0] sm:$0xff]
    %v43 = vld [vmem:[%s0 + $0x8] sm:$0xff]
    %v44 = vld [vmem:[%s0 + $0x10] sm:$0xff]
    %v45 = vld [vmem:[%s0 + $0x18] sm:$0xff]
    %v46 = vld [vmem:[%s1] sm:$0xff]
    %v47 = vld [vmem:[%s1 + $0x8] sm:$0xff]
    %v48 = vld [vmem:[%s1 + $0x10] sm:$0xff]
    %v49 = vld [vmem:[%s1 + $0x18] sm:$0xff]
    %v50 = vld [vmem:[%s1 + $0x20] sm:$0xff]
    %v51 = vld [vmem:[%s1 + $0x28] sm:$0xff]
    %v52 = vld [vmem:[%s1 + $0x30] sm:$0xff]
    %v53 = vld [vmem:[%s1 + $0x38] sm:$0xff]
    %v54 = vld [vmem:[%s1 + $0x40] sm:$0xff]
    %v55 = vld [vmem:[%s1 + $0x48] sm:$0xff]
    %v56 = vld [vmem:[%s1 + $0x50] sm:$0xff]
    %v57 = vld [vmem:[%s1 + $0x58] sm:$0xff]
    %v58 = vld [vmem:[%s2] sm:$0xff]
    %v59 = vld [vmem:[%s2 + $0x8] sm:$0xff]
    %v60 = vld [vmem:[%s2 + $0x10] sm:$0xff]
    %v61 = vld [vmem:[%s2 + $0x18] sm:$0xff]
    %v62 = vld [vmem:[%s2 + $0x20] sm:$0xff]
    %v63 = vld [vmem:[%s2 + $0x28] sm:$0xff]
    %v64 = vld [vmem:[%s2 + $0x30] sm:$0xff]
    %v65 = vld [vmem:[%s2 + $0x38] sm:$0xff]
    %v66 = vld [vmem:[%s2 + $0x40] sm:$0xff]
    %v67 = vld [vmem:[%s2 + $0x48] sm:$0xff]
    %v68 = vld [vmem:[%s2 + $0x50] sm:$0xff]
    %v69 = vld [vmem:[%s2 + $0x58] sm:$0xff]
    %71 = vset.pattern.permute.xlu0 0
    %72 = vperm.xlu0 %71, %v58
    %v73 = vpop.permute.xlu0 %72
    %76 = vset.pattern.permute.xlu0 0
    %77 = vperm.xlu0 %76, %v59
    %v78 = vpop.permute.xlu0 %77
    %81 = vset.pattern.permute.xlu0 0
    %82 = vperm.xlu0 %81, %v60
    %v83 = vpop.permute.xlu0 %82
    %86 = vset.pattern.permute.xlu0 0
    %87 = vperm.xlu0 %86, %v61
    %v88 = vpop.permute.xlu0 %87
    %91 = vset.pattern.permute.xlu0 0
    %92 = vperm.xlu0 %91, %v62
    %v93 = vpop.permute.xlu0 %92
    %96 = vset.pattern.permute.xlu0 0
    %97 = vperm.xlu0 %96, %v63
    %v98 = vpop.permute.xlu0 %97
    %101 = vset.pattern.permute.xlu0 0
    %102 = vperm.xlu0 %101, %v64
    %v103 = vpop.permute.xlu0 %102
    %106 = vset.pattern.permute.xlu0 0
    %107 = vperm.xlu0 %106, %v65
    %v108 = vpop.permute.xlu0 %107
    %111 = vset.pattern.permute.xlu0 0
    %112 = vperm.xlu0 %111, %v66
    %v113 = vpop.permute.xlu0 %112
    %116 = vset.pattern.permute.xlu0 0
    %117 = vperm.xlu0 %116, %v67
    %v118 = vpop.permute.xlu0 %117
    %121 = vset.pattern.permute.xlu0 0
    %122 = vperm.xlu0 %121, %v68
    %v123 = vpop.permute.xlu0 %122
    %126 = vset.pattern.permute.xlu0 0
    %127 = vperm.xlu0 %126, %v69
    %v128 = vpop.permute.xlu0 %127
    %vm130 = vcmask 261120
    %v132 = vsel %vm130, %v46, 0
    %v135 = vsel %vm130, %v47, 0
    %v138 = vsel %vm130, %v48, 0
    %v141 = vsel %vm130, %v49, 0
    %v144 = vsel %vm130, %v50, 0
    %v147 = vsel %vm130, %v51, 0
    %v150 = vsel %vm130, %v52, 0
    %v153 = vsel %vm130, %v53, 0
    %v156 = vsel %vm130, %v54, 0
    %v159 = vsel %vm130, %v55, 0
    %v162 = vsel %vm130, %v56, 0
    %v165 = vsel %vm130, %v57, 0
    %167 = vmatprep.subr.mxu0 0.0
    %168 = vmatpush1.msra.mxu0 0.0
    %169 = vmatprep.subr.mxu0 0.0
    %170 = vmatpush1.msra.mxu0 0.0
    %171 = vmatprep.subr.mxu0 0.0
    %172 = vmatpush1.msra.mxu0 0.0
    %173 = vmatprep.subr.mxu0 0.0
    %174 = vmatpush1.msra.mxu0 0.0
    %175 = vmatprep.subr.mxu0 0.0
    %176 = vmatpush1.msra.mxu0 0.0
    %177 = vmatprep.subr.mxu0 0.0
    %178 = vmatpush1.msra.mxu0 0.0
    %179 = vmatprep.subr.mxu0 0.0
    %180 = vmatpush1.msra.mxu0 0.0
    %181 = vmatprep.subr.mxu0 0.0
    %182 = vmatpush1.msra.mxu0 0.0
    %183 = vmatprep.subr.mxu0 0.0
    %184 = vmatpush1.msra.mxu0 0.0
    %185 = vmatprep.subr.mxu0 0.0
    %186 = vmatpush1.msra.mxu0 0.0
    %187 = vmatprep.subr.mxu0 0.0
    %188 = vmatpush1.msra.mxu0 0.0
    %189 = vmatprep.subr.mxu0 0.0
    %190 = vmatpush1.msra.mxu0 0.0
    %191 = vmatprep.subr.mxu0 0.0
    %192 = vmatpush1.msra.mxu0 %v45
    %193 = vmatprep.subr.mxu0 0.0
    %194 = vmatpush1.msra.mxu0 %v44
    %195 = vmatprep.subr.mxu0 0.0
    %196 = vmatpush1.msra.mxu0 %v43
    %197 = vmatprep.subr.mxu0 0.0
    %198 = vmatpush1.msra.mxu0 %v42
    %199 = vmatprep.subr.mxu0 0.0
    %200 = vmatpush2.msra.mxu0 0.0
    %201 = vmatprep.subr.mxu0 0.0
    %202 = vmatpush2.msra.mxu0 0.0
    %203 = vmatprep.subr.mxu0 0.0
    %204 = vmatpush2.msra.mxu0 0.0
    %205 = vmatprep.subr.mxu0 0.0
    %206 = vmatpush2.msra.mxu0 0.0
    %207 = vmatprep.subr.mxu0 0.0
    %208 = vmatpush2.msra.mxu0 0.0
    %209 = vmatprep.subr.mxu0 0.0
    %210 = vmatpush2.msra.mxu0 0.0
    %211 = vmatprep.subr.mxu0 0.0
    %212 = vmatpush2.msra.mxu0 0.0
    %213 = vmatprep.subr.mxu0 0.0
    %214 = vmatpush2.msra.mxu0 0.0
    %215 = vmatprep.subr.mxu0 0.0
    %216 = vmatpush2.msra.mxu0 0.0
    %217 = vmatprep.subr.mxu0 0.0
    %218 = vmatpush2.msra.mxu0 0.0
    %219 = vmatprep.subr.mxu0 0.0
    %220 = vmatpush2.msra.mxu0 0.0
    %221 = vmatprep.subr.mxu0 0.0
    %222 = vmatpush2.msra.mxu0 0.0
    %223 = vmatprep.subr.mxu0 0.0
    %224 = vmatpush2.msra.mxu0 0.0
    %225 = vmatprep.subr.mxu0 0.0
    %226 = vmatpush2.msra.mxu0 0.0
    %227 = vmatprep.subr.mxu0 0.0
    %228 = vmatpush2.msra.mxu0 0.0
    %229 = vmatprep.subr.mxu0 0.0
    %230 = vmatpush2.msra.mxu0 0.0
    %231 = vmatprep.mubr.f32.mxu0 0.0
    %232 = vmatmul.mubr.f32.gmra.mxu0 %v132
    %v233 = vpop.f32.mrf.mxu0
    %v234 = vadd.f32 %v73, %v233
    %v235 = vpop.f32.mrf.mxu0
    %236 = vmatprep.mubr.f32.mxu0 0.0
    %237 = vmatmul.mubr.f32.gmra.mxu0 %v135
    %v238 = vpop.f32.mrf.mxu0
    %v239 = vadd.f32 %v78, %v238
    %v240 = vpop.f32.mrf.mxu0
    %241 = vmatprep.mubr.f32.mxu0 0.0
    %242 = vmatmul.mubr.f32.gmra.mxu0 %v138
    %v243 = vpop.f32.mrf.mxu0
    %v244 = vadd.f32 %v83, %v243
    %v245 = vpop.f32.mrf.mxu0
    %246 = vmatprep.mubr.f32.mxu0 0.0
    %247 = vmatmul.mubr.f32.gmra.mxu0 %v141
    %v248 = vpop.f32.mrf.mxu0
    %v249 = vadd.f32 %v88, %v248
    %v250 = vpop.f32.mrf.mxu0
    %251 = vmatprep.mubr.f32.mxu0 0.0
    %252 = vmatmul.mubr.f32.gmra.mxu0 %v144
    %v253 = vpop.f32.mrf.mxu0
    %v254 = vadd.f32 %v93, %v253
    %v255 = vpop.f32.mrf.mxu0
    %256 = vmatprep.mubr.f32.mxu0 0.0
    %257 = vmatmul.mubr.f32.gmra.mxu0 %v147
    %v258 = vpop.f32.mrf.mxu0
    %v259 = vadd.f32 %v98, %v258
    %v260 = vpop.f32.mrf.mxu0
    %261 = vmatprep.mubr.f32.mxu0 0.0
    %262 = vmatmul.mubr.f32.gmra.mxu0 %v150
    %v263 = vpop.f32.mrf.mxu0
    %v264 = vadd.f32 %v103, %v263
    %v265 = vpop.f32.mrf.mxu0
    %266 = vmatprep.mubr.f32.mxu0 0.0
    %267 = vmatmul.mubr.f32.gmra.mxu0 %v153
    %v268 = vpop.f32.mrf.mxu0
    %v269 = vadd.f32 %v108, %v268
    %v270 = vpop.f32.mrf.mxu0
    %271 = vmatprep.mubr.f32.mxu0 0.0
    %272 = vmatmul.mubr.f32.gmra.mxu0 %v156
    %v273 = vpop.f32.mrf.mxu0
    %v274 = vadd.f32 %v113, %v273
    %v275 = vpop.f32.mrf.mxu0
    %276 = vmatprep.mubr.f32.mxu0 0.0
    %277 = vmatmul.mubr.f32.gmra.mxu0 %v159
    %v278 = vpop.f32.mrf.mxu0
    %v279 = vadd.f32 %v118, %v278
    %v280 = vpop.f32.mrf.mxu0
    %281 = vmatprep.mubr.f32.mxu0 0.0
    %282 = vmatmul.mubr.f32.gmra.mxu0 %v162
    %v283 = vpop.f32.mrf.mxu0
    %v284 = vadd.f32 %v123, %v283
    %v285 = vpop.f32.mrf.mxu0
    %286 = vmatprep.mubr.f32.mxu0 0.0
    %287 = vmatmul.mubr.f32.gmra.mxu0 %v165
    %v288 = vpop.f32.mrf.mxu0
    %v289 = vadd.f32 %v128, %v288
    %v290 = vpop.f32.mrf.mxu0
    %291 = vdwg.mxu0
    %292 = vst [vmem:[#allocation2] sm:$0xff] %v234
    %293 = vst [vmem:[#allocation2 + $0x8] sm:$0xff] %v239
    %294 = vst [vmem:[#allocation2 + $0x10] sm:$0xff] %v244
    %295 = vst [vmem:[#allocation2 + $0x18] sm:$0xff] %v249
    %296 = vst [vmem:[#allocation2 + $0x20] sm:$0xff] %v254
    %297 = vst [vmem:[#allocation2 + $0x28] sm:$0xff] %v259
    %298 = vst [vmem:[#allocation2 + $0x30] sm:$0xff] %v264
    %299 = vst [vmem:[#allocation2 + $0x38] sm:$0xff] %v269
    %300 = vst [vmem:[#allocation2 + $0x40] sm:$0xff] %v274
    %301 = vst [vmem:[#allocation2 + $0x48] sm:$0xff] %v279
    %302 = vst [vmem:[#allocation2 + $0x50] sm:$0xff] %v284
    %303 = vst [vmem:[#allocation2 + $0x58] sm:$0xff] %v289
    %v304 = vld [vmem:[#allocation2] sm:$0xff]
    %v305 = vld [vmem:[#allocation2 + $0x20] sm:$0xff]
    %v306 = vld [vmem:[#allocation2 + $0x40] sm:$0xff]
    %307 = vxpose.xlu0.b32.start [1/16] %v304, 128
    %308 = vxpose.xlu0.b32.cont [2/16] 0.0, 128
    %309 = vxpose.xlu0.b32.cont [3/16] 0.0, 128
    %310 = vxpose.xlu0.b32.cont [4/16] 0.0, 128
    %311 = vxpose.xlu0.b32.cont [5/16] 0.0, 128
    %312 = vxpose.xlu0.b32.cont [6/16] 0.0, 128
    %313 = vxpose.xlu0.b32.cont [7/16] 0.0, 128
    %314 = vxpose.xlu0.b32.cont [8/16] 0.0, 128
    %315 = vxpose.xlu0.b32.cont [9/16] 0.0, 128
    %316 = vxpose.xlu0.b32.cont [10/16] 0.0, 128
    %317 = vxpose.xlu0.b32.cont [11/16] 0.0, 128
    %318 = vxpose.xlu0.b32.cont [12/16] 0.0, 128
    %319 = vxpose.xlu0.b32.cont [13/16] 0.0, 128
    %320 = vxpose.xlu0.b32.cont [14/16] 0.0, 128
    %321 = vxpose.xlu0.b32.cont [15/16] 0.0, 128
    %322 = vxpose.xlu0.b32.end [16/16] 0.0, 128
    %v323 = vpop.trf.xlu0
    %v324 = vpop.trf.xlu0
    %v325 = vpop.trf.xlu0
    %v326 = vpop.trf.xlu0
    %v327 = vpop.trf.xlu0
    %v328 = vpop.trf.xlu0
    %v329 = vpop.trf.xlu0
    %v330 = vpop.trf.xlu0
    %v331 = vpop.trf.xlu0
    %v332 = vpop.trf.xlu0
    %v333 = vpop.trf.xlu0
    %v334 = vpop.trf.xlu0
    %v335 = vpop.trf.xlu0
    %v336 = vpop.trf.xlu0
    %v337 = vpop.trf.xlu0
    %v338 = vpop.trf.xlu0
    %vm339 = vcmask 64512
    %v341 = vsel %vm339, %v323, 0
    %v344 = vsel %vm339, %v324, 0
    %v347 = vsel %vm339, %v325, 0
    %v350 = vsel %vm339, %v326, 0
    %v353 = vsel %vm339, %v327, 0
    %v356 = vsel %vm339, %v328, 0
    %v359 = vsel %vm339, %v329, 0
    %v362 = vsel %vm339, %v330, 0
    %364 = vmatprep.subr.mxu0 0.0
    %365 = vmatpush1.msra.mxu0 0.0
    %366 = vmatprep.subr.mxu0 0.0
    %367 = vmatpush1.msra.mxu0 0.0
    %368 = vmatprep.subr.mxu0 0.0
    %369 = vmatpush1.msra.mxu0 0.0
    %370 = vmatprep.subr.mxu0 0.0
    %371 = vmatpush1.msra.mxu0 0.0
    %372 = vmatprep.subr.mxu0 0.0
    %373 = vmatpush1.msra.mxu0 0.0
    %374 = vmatprep.subr.mxu0 0.0
    %375 = vmatpush1.msra.mxu0 0.0
    %376 = vmatprep.subr.mxu0 0.0
    %377 = vmatpush1.msra.mxu0 0.0
    %378 = vmatprep.subr.mxu0 0.0
    %379 = vmatpush1.msra.mxu0 0.0
    %380 = vmatprep.subr.mxu0 0.0
    %381 = vmatpush1.msra.mxu0 0.0
    %382 = vmatprep.subr.mxu0 0.0
    %383 = vmatpush1.msra.mxu0 0.0
    %384 = vmatprep.subr.mxu0 0.0
    %385 = vmatpush1.msra.mxu0 0.0
    %386 = vmatprep.subr.mxu0 0.0
    %387 = vmatpush1.msra.mxu0 0.0
    %388 = vmatprep.subr.mxu0 0.0
    %389 = vmatpush1.msra.mxu0 0.0
    %390 = vmatprep.subr.mxu0 0.0
    %391 = vmatpush1.msra.mxu0 0.0
    %392 = vmatprep.subr.mxu0 0.0
    %393 = vmatpush1.msra.mxu0 0.0
    %394 = vmatprep.subr.mxu0 0.0
    %395 = vmatpush1.msra.mxu0 %v305
    %396 = vmatprep.subr.mxu0 0.0
    %397 = vmatpush2.msra.mxu0 0.0
    %398 = vmatprep.subr.mxu0 0.0
    %399 = vmatpush2.msra.mxu0 0.0
    %400 = vmatprep.subr.mxu0 0.0
    %401 = vmatpush2.msra.mxu0 0.0
    %402 = vmatprep.subr.mxu0 0.0
    %403 = vmatpush2.msra.mxu0 0.0
    %404 = vmatprep.subr.mxu0 0.0
    %405 = vmatpush2.msra.mxu0 0.0
    %406 = vmatprep.subr.mxu0 0.0
    %407 = vmatpush2.msra.mxu0 0.0
    %408 = vmatprep.subr.mxu0 0.0
    %409 = vmatpush2.msra.mxu0 0.0
    %410 = vmatprep.subr.mxu0 0.0
    %411 = vmatpush2.msra.mxu0 0.0
    %412 = vmatprep.subr.mxu0 0.0
    %413 = vmatpush2.msra.mxu0 0.0
    %414 = vmatprep.subr.mxu0 0.0
    %415 = vmatpush2.msra.mxu0 0.0
    %416 = vmatprep.subr.mxu0 0.0
    %417 = vmatpush2.msra.mxu0 0.0
    %418 = vmatprep.subr.mxu0 0.0
    %419 = vmatpush2.msra.mxu0 0.0
    %420 = vmatprep.subr.mxu0 0.0
    %421 = vmatpush2.msra.mxu0 0.0
    %422 = vmatprep.subr.mxu0 0.0
    %423 = vmatpush2.msra.mxu0 0.0
    %424 = vmatprep.subr.mxu0 0.0
    %425 = vmatpush2.msra.mxu0 0.0
    %426 = vmatprep.subr.mxu0 0.0
    %427 = vmatpush2.msra.mxu0 0.0
    %428 = vmatprep.mubr.f32.mxu0 0.0
    %429 = vmatmul.mubr.f32.gmra.mxu0 %v341
    %v430 = vpop.f32.mrf.mxu0
    %v431 = vadd.f32 0.0, %v430
    %v432 = vpop.f32.mrf.mxu0
    %433 = vmatprep.mubr.f32.mxu0 0.0
    %434 = vmatmul.mubr.f32.gmra.mxu0 %v344
    %v435 = vpop.f32.mrf.mxu0
    %v436 = vadd.f32 0.0, %v435
    %v437 = vpop.f32.mrf.mxu0
    %438 = vmatprep.mubr.f32.mxu0 0.0
    %439 = vmatmul.mubr.f32.gmra.mxu0 %v347
    %v440 = vpop.f32.mrf.mxu0
    %v441 = vadd.f32 0.0, %v440
    %v442 = vpop.f32.mrf.mxu0
    %443 = vmatprep.mubr.f32.mxu0 0.0
    %444 = vmatmul.mubr.f32.gmra.mxu0 %v350
    %v445 = vpop.f32.mrf.mxu0
    %v446 = vadd.f32 0.0, %v445
    %v447 = vpop.f32.mrf.mxu0
    %448 = vmatprep.mubr.f32.mxu0 0.0
    %449 = vmatmul.mubr.f32.gmra.mxu0 %v353
    %v450 = vpop.f32.mrf.mxu0
    %v451 = vadd.f32 0.0, %v450
    %v452 = vpop.f32.mrf.mxu0
    %453 = vmatprep.mubr.f32.mxu0 0.0
    %454 = vmatmul.mubr.f32.gmra.mxu0 %v356
    %v455 = vpop.f32.mrf.mxu0
    %v456 = vadd.f32 0.0, %v455
    %v457 = vpop.f32.mrf.mxu0
    %458 = vmatprep.mubr.f32.mxu0 0.0
    %459 = vmatmul.mubr.f32.gmra.mxu0 %v359
    %v460 = vpop.f32.mrf.mxu0
    %v461 = vadd.f32 0.0, %v460
    %v462 = vpop.f32.mrf.mxu0
    %463 = vmatprep.mubr.f32.mxu0 0.0
    %464 = vmatmul.mubr.f32.gmra.mxu0 %v362
    %v465 = vpop.f32.mrf.mxu0
    %v466 = vadd.f32 0.0, %v465
    %v467 = vpop.f32.mrf.mxu0
    %468 = vdwg.mxu0
    %vm469 = vcmask 523264
    %v470 = vsel %vm469, %v431, -inf
    %471 = vmax.xlane.f32.xlu0 %v470
    %v472 = vpop.xlane.xlu0 %471
    %v473 = vsel %vm469, %v436, -inf
    %474 = vmax.xlane.f32.xlu0 %v473
    %v475 = vpop.xlane.xlu0 %474
    %v476 = vsel %vm469, %v441, -inf
    %477 = vmax.xlane.f32.xlu0 %v476
    %v478 = vpop.xlane.xlu0 %477
    %v479 = vsel %vm469, %v446, -inf
    %480 = vmax.xlane.f32.xlu0 %v479
    %v481 = vpop.xlane.xlu0 %480
    %v482 = vsel %vm469, %v451, -inf
    %483 = vmax.xlane.f32.xlu0 %v482
    %v484 = vpop.xlane.xlu0 %483
    %v485 = vsel %vm469, %v456, -inf
    %486 = vmax.xlane.f32.xlu0 %v485
    %v487 = vpop.xlane.xlu0 %486
    %v488 = vsel %vm469, %v461, -inf
    %489 = vmax.xlane.f32.xlu0 %v488
    %v490 = vpop.xlane.xlu0 %489
    %v491 = vsel %vm469, %v466, -inf
    %492 = vmax.xlane.f32.xlu0 %v491
    %v493 = vpop.xlane.xlu0 %492
    %v494 = vsub.f32 %v431, %v472
    %v495 = vsub.f32 %v436, %v475
    %v496 = vsub.f32 %v441, %v478
    %v497 = vsub.f32 %v446, %v481
    %v498 = vsub.f32 %v451, %v484
    %v499 = vsub.f32 %v456, %v487
    %v500 = vsub.f32 %v461, %v490
    %v501 = vsub.f32 %v466, %v493
    %v502 = vmul.f32 %v494, 1.442695
    %v503 = vpow.pop %v502
    %v504 = vmul.f32 %v495, 1.442695
    %v505 = vpow.pop %v504
    %v506 = vmul.f32 %v496, 1.442695
    %v507 = vpow.pop %v506
    %v508 = vmul.f32 %v497, 1.442695
    %v509 = vpow.pop %v508
    %v510 = vmul.f32 %v498, 1.442695
    %v511 = vpow.pop %v510
    %v512 = vmul.f32 %v499, 1.442695
    %v513 = vpow.pop %v512
    %v514 = vmul.f32 %v500, 1.442695
    %v515 = vpow.pop %v514
    %v516 = vmul.f32 %v501, 1.442695
    %v517 = vpow.pop %v516
    %v518 = vsel %vm469, %v503, 0.0
    %519 = vadd.xlane.f32.xlu0 %v518
    %v520 = vpop.xlane.xlu0 %519
    %v521 = vsel %vm469, %v505, 0.0
    %522 = vadd.xlane.f32.xlu0 %v521
    %v523 = vpop.xlane.xlu0 %522
    %v524 = vsel %vm469, %v507, 0.0
    %525 = vadd.xlane.f32.xlu0 %v524
    %v526 = vpop.xlane.xlu0 %525
    %v527 = vsel %vm469, %v509, 0.0
    %528 = vadd.xlane.f32.xlu0 %v527
    %v529 = vpop.xlane.xlu0 %528
    %v530 = vsel %vm469, %v511, 0.0
    %531 = vadd.xlane.f32.xlu0 %v530
    %v532 = vpop.xlane.xlu0 %531
    %v533 = vsel %vm469, %v513, 0.0
    %534 = vadd.xlane.f32.xlu0 %v533
    %v535 = vpop.xlane.xlu0 %534
    %v536 = vsel %vm469, %v515, 0.0
    %537 = vadd.xlane.f32.xlu0 %v536
    %v538 = vpop.xlane.xlu0 %537
    %v539 = vsel %vm469, %v517, 0.0
    %540 = vadd.xlane.f32.xlu0 %v539
    %v541 = vpop.xlane.xlu0 %540
    %v542 = vrcp.pop %v520
    %v543 = vrcp.pop %v523
    %v544 = vrcp.pop %v526
    %v545 = vrcp.pop %v529
    %v546 = vrcp.pop %v532
    %v547 = vrcp.pop %v535
    %v548 = vrcp.pop %v538
    %v549 = vrcp.pop %v541
    %v550 = vmul.f32 %v503, %v542
    %v551 = vmul.f32 %v505, %v543
    %v552 = vmul.f32 %v507, %v544
    %v553 = vmul.f32 %v509, %v545
    %v554 = vmul.f32 %v511, %v546
    %v555 = vmul.f32 %v513, %v547
    %v556 = vmul.f32 %v515, %v548
    %v557 = vmul.f32 %v517, %v549
    %v559 = vsel %vm469, %v306, 0
    %v562 = vsel %vm469, %v550, 0
    %v565 = vsel %vm469, %v551, 0
    %v568 = vsel %vm469, %v552, 0
    %v571 = vsel %vm469, %v553, 0
    %v574 = vsel %vm469, %v554, 0
    %v577 = vsel %vm469, %v555, 0
    %v580 = vsel %vm469, %v556, 0
    %v583 = vsel %vm469, %v557, 0
    %585 = vmatprep.subr.mxu0 0.0
    %586 = vmatpush1.xpose.msra.mxu0 0.0
    %587 = vmatprep.subr.mxu0 0.0
    %588 = vmatpush1.xpose.msra.mxu0 0.0
    %589 = vmatprep.subr.mxu0 0.0
    %590 = vmatpush1.xpose.msra.mxu0 0.0
    %591 = vmatprep.subr.mxu0 0.0
    %592 = vmatpush1.xpose.msra.mxu0 0.0
    %593 = vmatprep.subr.mxu0 0.0
    %594 = vmatpush1.xpose.msra.mxu0 0.0
    %595 = vmatprep.subr.mxu0 0.0
    %596 = vmatpush1.xpose.msra.mxu0 0.0
    %597 = vmatprep.subr.mxu0 0.0
    %598 = vmatpush1.xpose.msra.mxu0 0.0
    %599 = vmatprep.subr.mxu0 0.0
    %600 = vmatpush1.xpose.msra.mxu0 0.0
    %601 = vmatprep.subr.mxu0 0.0
    %602 = vmatpush1.xpose.msra.mxu0 %v583
    %603 = vmatprep.subr.mxu0 0.0
    %604 = vmatpush1.xpose.msra.mxu0 %v580
    %605 = vmatprep.subr.mxu0 0.0
    %606 = vmatpush1.xpose.msra.mxu0 %v577
    %607 = vmatprep.subr.mxu0 0.0
    %608 = vmatpush1.xpose.msra.mxu0 %v574
    %609 = vmatprep.subr.mxu0 0.0
    %610 = vmatpush1.xpose.msra.mxu0 %v571
    %611 = vmatprep.subr.mxu0 0.0
    %612 = vmatpush1.xpose.msra.mxu0 %v568
    %613 = vmatprep.subr.mxu0 0.0
    %614 = vmatpush1.xpose.msra.mxu0 %v565
    %615 = vmatprep.subr.mxu0 0.0
    %616 = vmatpush1.xpose.msra.mxu0 %v562
    %617 = vmatprep.subr.mxu0 0.0
    %618 = vmatpush2.xpose.msra.mxu0 0.0
    %619 = vmatprep.subr.mxu0 0.0
    %620 = vmatpush2.xpose.msra.mxu0 0.0
    %621 = vmatprep.subr.mxu0 0.0
    %622 = vmatpush2.xpose.msra.mxu0 0.0
    %623 = vmatprep.subr.mxu0 0.0
    %624 = vmatpush2.xpose.msra.mxu0 0.0
    %625 = vmatprep.subr.mxu0 0.0
    %626 = vmatpush2.xpose.msra.mxu0 0.0
    %627 = vmatprep.subr.mxu0 0.0
    %628 = vmatpush2.xpose.msra.mxu0 0.0
    %629 = vmatprep.subr.mxu0 0.0
    %630 = vmatpush2.xpose.msra.mxu0 0.0
    %631 = vmatprep.subr.mxu0 0.0
    %632 = vmatpush2.xpose.msra.mxu0 0.0
    %633 = vmatprep.subr.mxu0 0.0
    %634 = vmatpush2.xpose.msra.mxu0 0.0
    %635 = vmatprep.subr.mxu0 0.0
    %636 = vmatpush2.xpose.msra.mxu0 0.0
    %637 = vmatprep.subr.mxu0 0.0
    %638 = vmatpush2.xpose.msra.mxu0 0.0
    %639 = vmatprep.subr.mxu0 0.0
    %640 = vmatpush2.xpose.msra.mxu0 0.0
    %641 = vmatprep.subr.mxu0 0.0
    %642 = vmatpush2.xpose.msra.mxu0 0.0
    %643 = vmatprep.subr.mxu0 0.0
    %644 = vmatpush2.xpose.msra.mxu0 0.0
    %645 = vmatprep.subr.mxu0 0.0
    %646 = vmatpush2.xpose.msra.mxu0 0.0
    %647 = vmatprep.subr.mxu0 0.0
    %648 = vmatpush2.xpose.msra.mxu0 0.0
    %649 = vmatprep.mubr.f32.mxu0 0.0
    %650 = vmatmul.mubr.f32.gmra.mxu0 %v559
    %v651 = vpop.f32.mrf.mxu0
    %v652 = vadd.f32 0.0, %v651
    %v653 = vpop.f32.mrf.mxu0
    %654 = vdwg.mxu0
    %655 = vst.msk [vmem:[#allocation3] sm:$0xff] %vm469, %v652
    %v656 = vld [vmem:[#allocation2 + $0x8] sm:$0xff]
    %v657 = vld [vmem:[#allocation2 + $0x28] sm:$0xff]
    %v658 = vld [vmem:[#allocation2 + $0x48] sm:$0xff]
    %659 = vxpose.xlu0.b32.start [1/16] %v656, 128
    %660 = vxpose.xlu0.b32.cont [2/16] 0.0, 128
    %661 = vxpose.xlu0.b32.cont [3/16] 0.0, 128
    %662 = vxpose.xlu0.b32.cont [4/16] 0.0, 128
    %663 = vxpose.xlu0.b32.cont [5/16] 0.0, 128
    %664 = vxpose.xlu0.b32.cont [6/16] 0.0, 128
    %665 = vxpose.xlu0.b32.cont [7/16] 0.0, 128
    %666 = vxpose.xlu0.b32.cont [8/16] 0.0, 128
    %667 = vxpose.xlu0.b32.cont [9/16] 0.0, 128
    %668 = vxpose.xlu0.b32.cont [10/16] 0.0, 128
    %669 = vxpose.xlu0.b32.cont [11/16] 0.0, 128
    %670 = vxpose.xlu0.b32.cont [12/16] 0.0, 128
    %671 = vxpose.xlu0.b32.cont [13/16] 0.0, 128
    %672 = vxpose.xlu0.b32.cont [14/16] 0.0, 128
    %673 = vxpose.xlu0.b32.cont [15/16] 0.0, 128
    %674 = vxpose.xlu0.b32.end [16/16] 0.0, 128
    %v675 = vpop.trf.xlu0
    %v676 = vpop.trf.xlu0
    %v677 = vpop.trf.xlu0
    %v678 = vpop.trf.xlu0
    %v679 = vpop.trf.xlu0
    %v680 = vpop.trf.xlu0
    %v681 = vpop.trf.xlu0
    %v682 = vpop.trf.xlu0
    %v683 = vpop.trf.xlu0
    %v684 = vpop.trf.xlu0
    %v685 = vpop.trf.xlu0
    %v686 = vpop.trf.xlu0
    %v687 = vpop.trf.xlu0
    %v688 = vpop.trf.xlu0
    %v689 = vpop.trf.xlu0
    %v690 = vpop.trf.xlu0
    %v692 = vsel %vm339, %v675, 0
    %v695 = vsel %vm339, %v676, 0
    %v698 = vsel %vm339, %v677, 0
    %v701 = vsel %vm339, %v678, 0
    %v704 = vsel %vm339, %v679, 0
    %v707 = vsel %vm339, %v680, 0
    %v710 = vsel %vm339, %v681, 0
    %v713 = vsel %vm339, %v682, 0
    %715 = vmatprep.subr.mxu0 0.0
    %716 = vmatpush1.msra.mxu0 0.0
    %717 = vmatprep.subr.mxu0 0.0
    %718 = vmatpush1.msra.mxu0 0.0
    %719 = vmatprep.subr.mxu0 0.0
    %720 = vmatpush1.msra.mxu0 0.0
    %721 = vmatprep.subr.mxu0 0.0
    %722 = vmatpush1.msra.mxu0 0.0
    %723 = vmatprep.subr.mxu0 0.0
    %724 = vmatpush1.msra.mxu0 0.0
    %725 = vmatprep.subr.mxu0 0.0
    %726 = vmatpush1.msra.mxu0 0.0
    %727 = vmatprep.subr.mxu0 0.0
    %728 = vmatpush1.msra.mxu0 0.0
    %729 = vmatprep.subr.mxu0 0.0
    %730 = vmatpush1.msra.mxu0 0.0
    %731 = vmatprep.subr.mxu0 0.0
    %732 = vmatpush1.msra.mxu0 0.0
    %733 = vmatprep.subr.mxu0 0.0
    %734 = vmatpush1.msra.mxu0 0.0
    %735 = vmatprep.subr.mxu0 0.0
    %736 = vmatpush1.msra.mxu0 0.0
    %737 = vmatprep.subr.mxu0 0.0
    %738 = vmatpush1.msra.mxu0 0.0
    %739 = vmatprep.subr.mxu0 0.0
    %740 = vmatpush1.msra.mxu0 0.0
    %741 = vmatprep.subr.mxu0 0.0
    %742 = vmatpush1.msra.mxu0 0.0
    %743 = vmatprep.subr.mxu0 0.0
    %744 = vmatpush1.msra.mxu0 0.0
    %745 = vmatprep.subr.mxu0 0.0
    %746 = vmatpush1.msra.mxu0 %v657
    %747 = vmatprep.subr.mxu0 0.0
    %748 = vmatpush2.msra.mxu0 0.0
    %749 = vmatprep.subr.mxu0 0.0
    %750 = vmatpush2.msra.mxu0 0.0
    %751 = vmatprep.subr.mxu0 0.0
    %752 = vmatpush2.msra.mxu0 0.0
    %753 = vmatprep.subr.mxu0 0.0
    %754 = vmatpush2.msra.mxu0 0.0
    %755 = vmatprep.subr.mxu0 0.0
    %756 = vmatpush2.msra.mxu0 0.0
    %757 = vmatprep.subr.mxu0 0.0
    %758 = vmatpush2.msra.mxu0 0.0
    %759 = vmatprep.subr.mxu0 0.0
    %760 = vmatpush2.msra.mxu0 0.0
    %761 = vmatprep.subr.mxu0 0.0
    %762 = vmatpush2.msra.mxu0 0.0
    %763 = vmatprep.subr.mxu0 0.0
    %764 = vmatpush2.msra.mxu0 0.0
    %765 = vmatprep.subr.mxu0 0.0
    %766 = vmatpush2.msra.mxu0 0.0
    %767 = vmatprep.subr.mxu0 0.0
    %768 = vmatpush2.msra.mxu0 0.0
    %769 = vmatprep.subr.mxu0 0.0
    %770 = vmatpush2.msra.mxu0 0.0
    %771 = vmatprep.subr.mxu0 0.0
    %772 = vmatpush2.msra.mxu0 0.0
    %773 = vmatprep.subr.mxu0 0.0
    %774 = vmatpush2.msra.mxu0 0.0
    %775 = vmatprep.subr.mxu0 0.0
    %776 = vmatpush2.msra.mxu0 0.0
    %777 = vmatprep.subr.mxu0 0.0
    %778 = vmatpush2.msra.mxu0 0.0
    %779 = vmatprep.mubr.f32.mxu0 0.0
    %780 = vmatmul.mubr.f32.gmra.mxu0 %v692
    %v781 = vpop.f32.mrf.mxu0
    %v782 = vadd.f32 0.0, %v781
    %v783 = vpop.f32.mrf.mxu0
    %784 = vmatprep.mubr.f32.mxu0 0.0
    %785 = vmatmul.mubr.f32.gmra.mxu0 %v695
    %v786 = vpop.f32.mrf.mxu0
    %v787 = vadd.f32 0.0, %v786
    %v788 = vpop.f32.mrf.mxu0
    %789 = vmatprep.mubr.f32.mxu0 0.0
    %790 = vmatmul.mubr.f32.gmra.mxu0 %v698
    %v791 = vpop.f32.mrf.mxu0
    %v792 = vadd.f32 0.0, %v791
    %v793 = vpop.f32.mrf.mxu0
    %794 = vmatprep.mubr.f32.mxu0 0.0
    %795 = vmatmul.mubr.f32.gmra.mxu0 %v701
    %v796 = vpop.f32.mrf.mxu0
    %v797 = vadd.f32 0.0, %v796
    %v798 = vpop.f32.mrf.mxu0
    %799 = vmatprep.mubr.f32.mxu0 0.0
    %800 = vmatmul.mubr.f32.gmra.mxu0 %v704
    %v801 = vpop.f32.mrf.mxu0
    %v802 = vadd.f32 0.0, %v801
    %v803 = vpop.f32.mrf.mxu0
    %804 = vmatprep.mubr.f32.mxu0 0.0
    %805 = vmatmul.mubr.f32.gmra.mxu0 %v707
    %v806 = vpop.f32.mrf.mxu0
    %v807 = vadd.f32 0.0, %v806
    %v808 = vpop.f32.mrf.mxu0
    %809 = vmatprep.mubr.f32.mxu0 0.0
    %810 = vmatmul.mubr.f32.gmra.mxu0 %v710
    %v811 = vpop.f32.mrf.mxu0
    %v812 = vadd.f32 0.0, %v811
    %v813 = vpop.f32.mrf.mxu0
    %814 = vmatprep.mubr.f32.mxu0 0.0
    %815 = vmatmul.mubr.f32.gmra.mxu0 %v713
    %v816 = vpop.f32.mrf.mxu0
    %v817 = vadd.f32 0.0, %v816
    %v818 = vpop.f32.mrf.mxu0
    %819 = vdwg.mxu0
    %v820 = vsel %vm469, %v782, -inf
    %821 = vmax.xlane.f32.xlu0 %v820
    %v822 = vpop.xlane.xlu0 %821
    %v823 = vsel %vm469, %v787, -inf
    %824 = vmax.xlane.f32.xlu0 %v823
    %v825 = vpop.xlane.xlu0 %824
    %v826 = vsel %vm469, %v792, -inf
    %827 = vmax.xlane.f32.xlu0 %v826
    %v828 = vpop.xlane.xlu0 %827
    %v829 = vsel %vm469, %v797, -inf
    %830 = vmax.xlane.f32.xlu0 %v829
    %v831 = vpop.xlane.xlu0 %830
    %v832 = vsel %vm469, %v802, -inf
    %833 = vmax.xlane.f32.xlu0 %v832
    %v834 = vpop.xlane.xlu0 %833
    %v835 = vsel %vm469, %v807, -inf
    %836 = vmax.xlane.f32.xlu0 %v835
    %v837 = vpop.xlane.xlu0 %836
    %v838 = vsel %vm469, %v812, -inf
    %839 = vmax.xlane.f32.xlu0 %v838
    %v840 = vpop.xlane.xlu0 %839
    %v841 = vsel %vm469, %v817, -inf
    %842 = vmax.xlane.f32.xlu0 %v841
    %v843 = vpop.xlane.xlu0 %842
    %v844 = vsub.f32 %v782, %v822
    %v845 = vsub.f32 %v787, %v825
    %v846 = vsub.f32 %v792, %v828
    %v847 = vsub.f32 %v797, %v831
    %v848 = vsub.f32 %v802, %v834
    %v849 = vsub.f32 %v807, %v837
    %v850 = vsub.f32 %v812, %v840
    %v851 = vsub.f32 %v817, %v843
    %v852 = vmul.f32 %v844, 1.442695
    %v853 = vpow.pop %v852
    %v854 = vmul.f32 %v845, 1.442695
    %v855 = vpow.pop %v854
    %v856 = vmul.f32 %v846, 1.442695
    %v857 = vpow.pop %v856
    %v858 = vmul.f32 %v847, 1.442695
    %v859 = vpow.pop %v858
    %v860 = vmul.f32 %v848, 1.442695
    %v861 = vpow.pop %v860
    %v862 = vmul.f32 %v849, 1.442695
    %v863 = vpow.pop %v862
    %v864 = vmul.f32 %v850, 1.442695
    %v865 = vpow.pop %v864
    %v866 = vmul.f32 %v851, 1.442695
    %v867 = vpow.pop %v866
    %v868 = vsel %vm469, %v853, 0.0
    %869 = vadd.xlane.f32.xlu0 %v868
    %v870 = vpop.xlane.xlu0 %869
    %v871 = vsel %vm469, %v855, 0.0
    %872 = vadd.xlane.f32.xlu0 %v871
    %v873 = vpop.xlane.xlu0 %872
    %v874 = vsel %vm469, %v857, 0.0
    %875 = vadd.xlane.f32.xlu0 %v874
    %v876 = vpop.xlane.xlu0 %875
    %v877 = vsel %vm469, %v859, 0.0
    %878 = vadd.xlane.f32.xlu0 %v877
    %v879 = vpop.xlane.xlu0 %878
    %v880 = vsel %vm469, %v861, 0.0
    %881 = vadd.xlane.f32.xlu0 %v880
    %v882 = vpop.xlane.xlu0 %881
    %v883 = vsel %vm469, %v863, 0.0
    %884 = vadd.xlane.f32.xlu0 %v883
    %v885 = vpop.xlane.xlu0 %884
    %v886 = vsel %vm469, %v865, 0.0
    %887 = vadd.xlane.f32.xlu0 %v886
    %v888 = vpop.xlane.xlu0 %887
    %v889 = vsel %vm469, %v867, 0.0
    %890 = vadd.xlane.f32.xlu0 %v889
    %v891 = vpop.xlane.xlu0 %890
    %v892 = vrcp.pop %v870
    %v893 = vrcp.pop %v873
    %v894 = vrcp.pop %v876
    %v895 = vrcp.pop %v879
    %v896 = vrcp.pop %v882
    %v897 = vrcp.pop %v885
    %v898 = vrcp.pop %v888
    %v899 = vrcp.pop %v891
    %v900 = vmul.f32 %v853, %v892
    %v901 = vmul.f32 %v855, %v893
    %v902 = vmul.f32 %v857, %v894
    %v903 = vmul.f32 %v859, %v895
    %v904 = vmul.f32 %v861, %v896
    %v905 = vmul.f32 %v863, %v897
    %v906 = vmul.f32 %v865, %v898
    %v907 = vmul.f32 %v867, %v899
    %v909 = vsel %vm469, %v658, 0
    %v912 = vsel %vm469, %v900, 0
    %v915 = vsel %vm469, %v901, 0
    %v918 = vsel %vm469, %v902, 0
    %v921 = vsel %vm469, %v903, 0
    %v924 = vsel %vm469, %v904, 0
    %v927 = vsel %vm469, %v905, 0
    %v930 = vsel %vm469, %v906, 0
    %v933 = vsel %vm469, %v907, 0
    %935 = vmatprep.subr.mxu0 0.0
    %936 = vmatpush1.xpose.msra.mxu0 0.0
    %937 = vmatprep.subr.mxu0 0.0
    %938 = vmatpush1.xpose.msra.mxu0 0.0
    %939 = vmatprep.subr.mxu0 0.0
    %940 = vmatpush1.xpose.msra.mxu0 0.0
    %941 = vmatprep.subr.mxu0 0.0
    %942 = vmatpush1.xpose.msra.mxu0 0.0
    %943 = vmatprep.subr.mxu0 0.0
    %944 = vmatpush1.xpose.msra.mxu0 0.0
    %945 = vmatprep.subr.mxu0 0.0
    %946 = vmatpush1.xpose.msra.mxu0 0.0
    %947 = vmatprep.subr.mxu0 0.0
    %948 = vmatpush1.xpose.msra.mxu0 0.0
    %949 = vmatprep.subr.mxu0 0.0
    %950 = vmatpush1.xpose.msra.mxu0 0.0
    %951 = vmatprep.subr.mxu0 0.0
    %952 = vmatpush1.xpose.msra.mxu0 %v933
    %953 = vmatprep.subr.mxu0 0.0
    %954 = vmatpush1.xpose.msra.mxu0 %v930
    %955 = vmatprep.subr.mxu0 0.0
    %956 = vmatpush1.xpose.msra.mxu0 %v927
    %957 = vmatprep.subr.mxu0 0.0
    %958 = vmatpush1.xpose.msra.mxu0 %v924
    %959 = vmatprep.subr.mxu0 0.0
    %960 = vmatpush1.xpose.msra.mxu0 %v921
    %961 = vmatprep.subr.mxu0 0.0
    %962 = vmatpush1.xpose.msra.mxu0 %v918
    %963 = vmatprep.subr.mxu0 0.0
    %964 = vmatpush1.xpose.msra.mxu0 %v915
    %965 = vmatprep.subr.mxu0 0.0
    %966 = vmatpush1.xpose.msra.mxu0 %v912
    %967 = vmatprep.subr.mxu0 0.0
    %968 = vmatpush2.xpose.msra.mxu0 0.0
    %969 = vmatprep.subr.mxu0 0.0
    %970 = vmatpush2.xpose.msra.mxu0 0.0
    %971 = vmatprep.subr.mxu0 0.0
    %972 = vmatpush2.xpose.msra.mxu0 0.0
    %973 = vmatprep.subr.mxu0 0.0
    %974 = vmatpush2.xpose.msra.mxu0 0.0
    %975 = vmatprep.subr.mxu0 0.0
    %976 = vmatpush2.xpose.msra.mxu0 0.0
    %977 = vmatprep.subr.mxu0 0.0
    %978 = vmatpush2.xpose.msra.mxu0 0.0
    %979 = vmatprep.subr.mxu0 0.0
    %980 = vmatpush2.xpose.msra.mxu0 0.0
    %981 = vmatprep.subr.mxu0 0.0
    %982 = vmatpush2.xpose.msra.mxu0 0.0
    %983 = vmatprep.subr.mxu0 0.0
    %984 = vmatpush2.xpose.msra.mxu0 0.0
    %985 = vmatprep.subr.mxu0 0.0
    %986 = vmatpush2.xpose.msra.mxu0 0.0
    %987 = vmatprep.subr.mxu0 0.0
    %988 = vmatpush2.xpose.msra.mxu0 0.0
    %989 = vmatprep.subr.mxu0 0.0
    %990 = vmatpush2.xpose.msra.mxu0 0.0
    %991 = vmatprep.subr.mxu0 0.0
    %992 = vmatpush2.xpose.msra.mxu0 0.0
    %993 = vmatprep.subr.mxu0 0.0
    %994 = vmatpush2.xpose.msra.mxu0 0.0
    %995 = vmatprep.subr.mxu0 0.0
    %996 = vmatpush2.xpose.msra.mxu0 0.0
    %997 = vmatprep.subr.mxu0 0.0
    %998 = vmatpush2.xpose.msra.mxu0 0.0
    %999 = vmatprep.mubr.f32.mxu0 0.0
    %1000 = vmatmul.mubr.f32.gmra.mxu0 %v909
    %v1001 = vpop.f32.mrf.mxu0
    %v1002 = vadd.f32 0.0, %v1001
    %v1003 = vpop.f32.mrf.mxu0
    %1004 = vdwg.mxu0
    %1005 = vst.msk [vmem:[#allocation3 + $0x8] sm:$0xff] %vm469, %v1002
    %v1006 = vld [vmem:[#allocation2 + $0x10] sm:$0xff]
    %v1007 = vld [vmem:[#allocation2 + $0x30] sm:$0xff]
    %v1008 = vld [vmem:[#allocation2 + $0x50] sm:$0xff]
    %1009 = vxpose.xlu0.b32.start [1/16] %v1006, 128
    %1010 = vxpose.xlu0.b32.cont [2/16] 0.0, 128
    %1011 = vxpose.xlu0.b32.cont [3/16] 0.0, 128
    %1012 = vxpose.xlu0.b32.cont [4/16] 0.0, 128
    %1013 = vxpose.xlu0.b32.cont [5/16] 0.0, 128
    %1014 = vxpose.xlu0.b32.cont [6/16] 0.0, 128
    %1015 = vxpose.xlu0.b32.cont [7/16] 0.0, 128
    %1016 = vxpose.xlu0.b32.cont [8/16] 0.0, 128
    %1017 = vxpose.xlu0.b32.cont [9/16] 0.0, 128
    %1018 = vxpose.xlu0.b32.cont [10/16] 0.0, 128
    %1019 = vxpose.xlu0.b32.cont [11/16] 0.0, 128
    %1020 = vxpose.xlu0.b32.cont [12/16] 0.0, 128
    %1021 = vxpose.xlu0.b32.cont [13/16] 0.0, 128
    %1022 = vxpose.xlu0.b32.cont [14/16] 0.0, 128
    %1023 = vxpose.xlu0.b32.cont [15/16] 0.0, 128
    %1024 = vxpose.xlu0.b32.end [16/16] 0.0, 128
    %v1025 = vpop.trf.xlu0
    %v1026 = vpop.trf.xlu0
    %v1027 = vpop.trf.xlu0
    %v1028 = vpop.trf.xlu0
    %v1029 = vpop.trf.xlu0
    %v1030 = vpop.trf.xlu0
    %v1031 = vpop.trf.xlu0
    %v1032 = vpop.trf.xlu0
    %v1033 = vpop.trf.xlu0
    %v1034 = vpop.trf.xlu0
    %v1035 = vpop.trf.xlu0
    %v1036 = vpop.trf.xlu0
    %v1037 = vpop.trf.xlu0
    %v1038 = vpop.trf.xlu0
    %v1039 = vpop.trf.xlu0
    %v1040 = vpop.trf.xlu0
    %v1042 = vsel %vm339, %v1025, 0
    %v1045 = vsel %vm339, %v1026, 0
    %v1048 = vsel %vm339, %v1027, 0
    %v1051 = vsel %vm339, %v1028, 0
    %v1054 = vsel %vm339, %v1029, 0
    %v1057 = vsel %vm339, %v1030, 0
    %v1060 = vsel %vm339, %v1031, 0
    %v1063 = vsel %vm339, %v1032, 0
    %1065 = vmatprep.subr.mxu0 0.0
    %1066 = vmatpush1.msra.mxu0 0.0
    %1067 = vmatprep.subr.mxu0 0.0
    %1068 = vmatpush1.msra.mxu0 0.0
    %1069 = vmatprep.subr.mxu0 0.0
    %1070 = vmatpush1.msra.mxu0 0.0
    %1071 = vmatprep.subr.mxu0 0.0
    %1072 = vmatpush1.msra.mxu0 0.0
    %1073 = vmatprep.subr.mxu0 0.0
    %1074 = vmatpush1.msra.mxu0 0.0
    %1075 = vmatprep.subr.mxu0 0.0
    %1076 = vmatpush1.msra.mxu0 0.0
    %1077 = vmatprep.subr.mxu0 0.0
    %1078 = vmatpush1.msra.mxu0 0.0
    %1079 = vmatprep.subr.mxu0 0.0
    %1080 = vmatpush1.msra.mxu0 0.0
    %1081 = vmatprep.subr.mxu0 0.0
    %1082 = vmatpush1.msra.mxu0 0.0
    %1083 = vmatprep.subr.mxu0 0.0
    %1084 = vmatpush1.msra.mxu0 0.0
    %1085 = vmatprep.subr.mxu0 0.0
    %1086 = vmatpush1.msra.mxu0 0.0
    %1087 = vmatprep.subr.mxu0 0.0
    %1088 = vmatpush1.msra.mxu0 0.0
    %1089 = vmatprep.subr.mxu0 0.0
    %1090 = vmatpush1.msra.mxu0 0.0
    %1091 = vmatprep.subr.mxu0 0.0
    %1092 = vmatpush1.msra.mxu0 0.0
    %1093 = vmatprep.subr.mxu0 0.0
    %1094 = vmatpush1.msra.mxu0 0.0
    %1095 = vmatprep.subr.mxu0 0.0
    %1096 = vmatpush1.msra.mxu0 %v1007
    %1097 = vmatprep.subr.mxu0 0.0
    %1098 = vmatpush2.msra.mxu0 0.0
    %1099 = vmatprep.subr.mxu0 0.0
    %1100 = vmatpush2.msra.mxu0 0.0
    %1101 = vmatprep.subr.mxu0 0.0
    %1102 = vmatpush2.msra.mxu0 0.0
    %1103 = vmatprep.subr.mxu0 0.0
    %1104 = vmatpush2.msra.mxu0 0.0
    %1105 = vmatprep.subr.mxu0 0.0
    %1106 = vmatpush2.msra.mxu0 0.0
    %1107 = vmatprep.subr.mxu0 0.0
    %1108 = vmatpush2.msra.mxu0 0.0
    %1109 = vmatprep.subr.mxu0 0.0
    %1110 = vmatpush2.msra.mxu0 0.0
    %1111 = vmatprep.subr.mxu0 0.0
    %1112 = vmatpush2.msra.mxu0 0.0
    %1113 = vmatprep.subr.mxu0 0.0
    %1114 = vmatpush2.msra.mxu0 0.0
    %1115 = vmatprep.subr.mxu0 0.0
    %1116 = vmatpush2.msra.mxu0 0.0
    %1117 = vmatprep.subr.mxu0 0.0
    %1118 = vmatpush2.msra.mxu0 0.0
    %1119 = vmatprep.subr.mxu0 0.0
    %1120 = vmatpush2.msra.mxu0 0.0
    %1121 = vmatprep.subr.mxu0 0.0
    %1122 = vmatpush2.msra.mxu0 0.0
    %1123 = vmatprep.subr.mxu0 0.0
    %1124 = vmatpush2.msra.mxu0 0.0
    %1125 = vmatprep.subr.mxu0 0.0
    %1126 = vmatpush2.msra.mxu0 0.0
    %1127 = vmatprep.subr.mxu0 0.0
    %1128 = vmatpush2.msra.mxu0 0.0
    %1129 = vmatprep.mubr.f32.mxu0 0.0
    %1130 = vmatmul.mubr.f32.gmra.mxu0 %v1042
    %v1131 = vpop.f32.mrf.mxu0
    %v1132 = vadd.f32 0.0, %v1131
    %v1133 = vpop.f32.mrf.mxu0
    %1134 = vmatprep.mubr.f32.mxu0 0.0
    %1135 = vmatmul.mubr.f32.gmra.mxu0 %v1045
    %v1136 = vpop.f32.mrf.mxu0
    %v1137 = vadd.f32 0.0, %v1136
    %v1138 = vpop.f32.mrf.mxu0
    %1139 = vmatprep.mubr.f32.mxu0 0.0
    %1140 = vmatmul.mubr.f32.gmra.mxu0 %v1048
    %v1141 = vpop.f32.mrf.mxu0
    %v1142 = vadd.f32 0.0, %v1141
    %v1143 = vpop.f32.mrf.mxu0
    %1144 = vmatprep.mubr.f32.mxu0 0.0
    %1145 = vmatmul.mubr.f32.gmra.mxu0 %v1051
    %v1146 = vpop.f32.mrf.mxu0
    %v1147 = vadd.f32 0.0, %v1146
    %v1148 = vpop.f32.mrf.mxu0
    %1149 = vmatprep.mubr.f32.mxu0 0.0
    %1150 = vmatmul.mubr.f32.gmra.mxu0 %v1054
    %v1151 = vpop.f32.mrf.mxu0
    %v1152 = vadd.f32 0.0, %v1151
    %v1153 = vpop.f32.mrf.mxu0
    %1154 = vmatprep.mubr.f32.mxu0 0.0
    %1155 = vmatmul.mubr.f32.gmra.mxu0 %v1057
    %v1156 = vpop.f32.mrf.mxu0
    %v1157 = vadd.f32 0.0, %v1156
    %v1158 = vpop.f32.mrf.mxu0
    %1159 = vmatprep.mubr.f32.mxu0 0.0
    %1160 = vmatmul.mubr.f32.gmra.mxu0 %v1060
    %v1161 = vpop.f32.mrf.mxu0
    %v1162 = vadd.f32 0.0, %v1161
    %v1163 = vpop.f32.mrf.mxu0
    %1164 = vmatprep.mubr.f32.mxu0 0.0
    %1165 = vmatmul.mubr.f32.gmra.mxu0 %v1063
    %v1166 = vpop.f32.mrf.mxu0
    %v1167 = vadd.f32 0.0, %v1166
    %v1168 = vpop.f32.mrf.mxu0
    %1169 = vdwg.mxu0
    %v1170 = vsel %vm469, %v1132, -inf
    %1171 = vmax.xlane.f32.xlu0 %v1170
    %v1172 = vpop.xlane.xlu0 %1171
    %v1173 = vsel %vm469, %v1137, -inf
    %1174 = vmax.xlane.f32.xlu0 %v1173
    %v1175 = vpop.xlane.xlu0 %1174
    %v1176 = vsel %vm469, %v1142, -inf
    %1177 = vmax.xlane.f32.xlu0 %v1176
    %v1178 = vpop.xlane.xlu0 %1177
    %v1179 = vsel %vm469, %v1147, -inf
    %1180 = vmax.xlane.f32.xlu0 %v1179
    %v1181 = vpop.xlane.xlu0 %1180
    %v1182 = vsel %vm469, %v1152, -inf
    %1183 = vmax.xlane.f32.xlu0 %v1182
    %v1184 = vpop.xlane.xlu0 %1183
    %v1185 = vsel %vm469, %v1157, -inf
    %1186 = vmax.xlane.f32.xlu0 %v1185
    %v1187 = vpop.xlane.xlu0 %1186
    %v1188 = vsel %vm469, %v1162, -inf
    %1189 = vmax.xlane.f32.xlu0 %v1188
    %v1190 = vpop.xlane.xlu0 %1189
    %v1191 = vsel %vm469, %v1167, -inf
    %1192 = vmax.xlane.f32.xlu0 %v1191
    %v1193 = vpop.xlane.xlu0 %1192
    %v1194 = vsub.f32 %v1132, %v1172
    %v1195 = vsub.f32 %v1137, %v1175
    %v1196 = vsub.f32 %v1142, %v1178
    %v1197 = vsub.f32 %v1147, %v1181
    %v1198 = vsub.f32 %v1152, %v1184
    %v1199 = vsub.f32 %v1157, %v1187
    %v1200 = vsub.f32 %v1162, %v1190
    %v1201 = vsub.f32 %v1167, %v1193
    %v1202 = vmul.f32 %v1194, 1.442695
    %v1203 = vpow.pop %v1202
    %v1204 = vmul.f32 %v1195, 1.442695
    %v1205 = vpow.pop %v1204
    %v1206 = vmul.f32 %v1196, 1.442695
    %v1207 = vpow.pop %v1206
    %v1208 = vmul.f32 %v1197, 1.442695
    %v1209 = vpow.pop %v1208
    %v1210 = vmul.f32 %v1198, 1.442695
    %v1211 = vpow.pop %v1210
    %v1212 = vmul.f32 %v1199, 1.442695
    %v1213 = vpow.pop %v1212
    %v1214 = vmul.f32 %v1200, 1.442695
    %v1215 = vpow.pop %v1214
    %v1216 = vmul.f32 %v1201, 1.442695
    %v1217 = vpow.pop %v1216
    %v1218 = vsel %vm469, %v1203, 0.0
    %1219 = vadd.xlane.f32.xlu0 %v1218
    %v1220 = vpop.xlane.xlu0 %1219
    %v1221 = vsel %vm469, %v1205, 0.0
    %1222 = vadd.xlane.f32.xlu0 %v1221
    %v1223 = vpop.xlane.xlu0 %1222
    %v1224 = vsel %vm469, %v1207, 0.0
    %1225 = vadd.xlane.f32.xlu0 %v1224
    %v1226 = vpop.xlane.xlu0 %1225
    %v1227 = vsel %vm469, %v1209, 0.0
    %1228 = vadd.xlane.f32.xlu0 %v1227
    %v1229 = vpop.xlane.xlu0 %1228
    %v1230 = vsel %vm469, %v1211, 0.0
    %1231 = vadd.xlane.f32.xlu0 %v1230
    %v1232 = vpop.xlane.xlu0 %1231
    %v1233 = vsel %vm469, %v1213, 0.0
    %1234 = vadd.xlane.f32.xlu0 %v1233
    %v1235 = vpop.xlane.xlu0 %1234
    %v1236 = vsel %vm469, %v1215, 0.0
    %1237 = vadd.xlane.f32.xlu0 %v1236
    %v1238 = vpop.xlane.xlu0 %1237
    %v1239 = vsel %vm469, %v1217, 0.0
    %1240 = vadd.xlane.f32.xlu0 %v1239
    %v1241 = vpop.xlane.xlu0 %1240
    %v1242 = vrcp.pop %v1220
    %v1243 = vrcp.pop %v1223
    %v1244 = vrcp.pop %v1226
    %v1245 = vrcp.pop %v1229
    %v1246 = vrcp.pop %v1232
    %v1247 = vrcp.pop %v1235
    %v1248 = vrcp.pop %v1238
    %v1249 = vrcp.pop %v1241
    %v1250 = vmul.f32 %v1203, %v1242
    %v1251 = vmul.f32 %v1205, %v1243
    %v1252 = vmul.f32 %v1207, %v1244
    %v1253 = vmul.f32 %v1209, %v1245
    %v1254 = vmul.f32 %v1211, %v1246
    %v1255 = vmul.f32 %v1213, %v1247
    %v1256 = vmul.f32 %v1215, %v1248
    %v1257 = vmul.f32 %v1217, %v1249
    %v1259 = vsel %vm469, %v1008, 0
    %v1262 = vsel %vm469, %v1250, 0
    %v1265 = vsel %vm469, %v1251, 0
    %v1268 = vsel %vm469, %v1252, 0
    %v1271 = vsel %vm469, %v1253, 0
    %v1274 = vsel %vm469, %v1254, 0
    %v1277 = vsel %vm469, %v1255, 0
    %v1280 = vsel %vm469, %v1256, 0
    %v1283 = vsel %vm469, %v1257, 0
    %1285 = vmatprep.subr.mxu0 0.0
    %1286 = vmatpush1.xpose.msra.mxu0 0.0
    %1287 = vmatprep.subr.mxu0 0.0
    %1288 = vmatpush1.xpose.msra.mxu0 0.0
    %1289 = vmatprep.subr.mxu0 0.0
    %1290 = vmatpush1.xpose.msra.mxu0 0.0
    %1291 = vmatprep.subr.mxu0 0.0
    %1292 = vmatpush1.xpose.msra.mxu0 0.0
    %1293 = vmatprep.subr.mxu0 0.0
    %1294 = vmatpush1.xpose.msra.mxu0 0.0
    %1295 = vmatprep.subr.mxu0 0.0
    %1296 = vmatpush1.xpose.msra.mxu0 0.0
    %1297 = vmatprep.subr.mxu0 0.0
    %1298 = vmatpush1.xpose.msra.mxu0 0.0
    %1299 = vmatprep.subr.mxu0 0.0
    %1300 = vmatpush1.xpose.msra.mxu0 0.0
    %1301 = vmatprep.subr.mxu0 0.0
    %1302 = vmatpush1.xpose.msra.mxu0 %v1283
    %1303 = vmatprep.subr.mxu0 0.0
    %1304 = vmatpush1.xpose.msra.mxu0 %v1280
    %1305 = vmatprep.subr.mxu0 0.0
    %1306 = vmatpush1.xpose.msra.mxu0 %v1277
    %1307 = vmatprep.subr.mxu0 0.0
    %1308 = vmatpush1.xpose.msra.mxu0 %v1274
    %1309 = vmatprep.subr.mxu0 0.0
    %1310 = vmatpush1.xpose.msra.mxu0 %v1271
    %1311 = vmatprep.subr.mxu0 0.0
    %1312 = vmatpush1.xpose.msra.mxu0 %v1268
    %1313 = vmatprep.subr.mxu0 0.0
    %1314 = vmatpush1.xpose.msra.mxu0 %v1265
    %1315 = vmatprep.subr.mxu0 0.0
    %1316 = vmatpush1.xpose.msra.mxu0 %v1262
    %1317 = vmatprep.subr.mxu0 0.0
    %1318 = vmatpush2.xpose.msra.mxu0 0.0
    %1319 = vmatprep.subr.mxu0 0.0
    %1320 = vmatpush2.xpose.msra.mxu0 0.0
    %1321 = vmatprep.subr.mxu0 0.0
    %1322 = vmatpush2.xpose.msra.mxu0 0.0
    %1323 = vmatprep.subr.mxu0 0.0
    %1324 = vmatpush2.xpose.msra.mxu0 0.0
    %1325 = vmatprep.subr.mxu0 0.0
    %1326 = vmatpush2.xpose.msra.mxu0 0.0
    %1327 = vmatprep.subr.mxu0 0.0
    %1328 = vmatpush2.xpose.msra.mxu0 0.0
    %1329 = vmatprep.subr.mxu0 0.0
    %1330 = vmatpush2.xpose.msra.mxu0 0.0
    %1331 = vmatprep.subr.mxu0 0.0
    %1332 = vmatpush2.xpose.msra.mxu0 0.0
    %1333 = vmatprep.subr.mxu0 0.0
    %1334 = vmatpush2.xpose.msra.mxu0 0.0
    %1335 = vmatprep.subr.mxu0 0.0
    %1336 = vmatpush2.xpose.msra.mxu0 0.0
    %1337 = vmatprep.subr.mxu0 0.0
    %1338 = vmatpush2.xpose.msra.mxu0 0.0
    %1339 = vmatprep.subr.mxu0 0.0
    %1340 = vmatpush2.xpose.msra.mxu0 0.0
    %1341 = vmatprep.subr.mxu0 0.0
    %1342 = vmatpush2.xpose.msra.mxu0 0.0
    %1343 = vmatprep.subr.mxu0 0.0
    %1344 = vmatpush2.xpose.msra.mxu0 0.0
    %1345 = vmatprep.subr.mxu0 0.0
    %1346 = vmatpush2.xpose.msra.mxu0 0.0
    %1347 = vmatprep.subr.mxu0 0.0
    %1348 = vmatpush2.xpose.msra.mxu0 0.0
    %1349 = vmatprep.mubr.f32.mxu0 0.0
    %1350 = vmatmul.mubr.f32.gmra.mxu0 %v1259
    %v1351 = vpop.f32.mrf.mxu0
    %v1352 = vadd.f32 0.0, %v1351
    %v1353 = vpop.f32.mrf.mxu0
    %1354 = vdwg.mxu0
    %1355 = vst.msk [vmem:[#allocation3 + $0x10] sm:$0xff] %vm469, %v1352
    %v1356 = vld [vmem:[#allocation2 + $0x18] sm:$0xff]
    %v1357 = vld [vmem:[#allocation2 + $0x38] sm:$0xff]
    %v1358 = vld [vmem:[#allocation2 + $0x58] sm:$0xff]
    %1359 = vxpose.xlu0.b32.start [1/16] %v1356, 128
    %1360 = vxpose.xlu0.b32.cont [2/16] 0.0, 128
    %1361 = vxpose.xlu0.b32.cont [3/16] 0.0, 128
    %1362 = vxpose.xlu0.b32.cont [4/16] 0.0, 128
    %1363 = vxpose.xlu0.b32.cont [5/16] 0.0, 128
    %1364 = vxpose.xlu0.b32.cont [6/16] 0.0, 128
    %1365 = vxpose.xlu0.b32.cont [7/16] 0.0, 128
    %1366 = vxpose.xlu0.b32.cont [8/16] 0.0, 128
    %1367 = vxpose.xlu0.b32.cont [9/16] 0.0, 128
    %1368 = vxpose.xlu0.b32.cont [10/16] 0.0, 128
    %1369 = vxpose.xlu0.b32.cont [11/16] 0.0, 128
    %1370 = vxpose.xlu0.b32.cont [12/16] 0.0, 128
    %1371 = vxpose.xlu0.b32.cont [13/16] 0.0, 128
    %1372 = vxpose.xlu0.b32.cont [14/16] 0.0, 128
    %1373 = vxpose.xlu0.b32.cont [15/16] 0.0, 128
    %1374 = vxpose.xlu0.b32.end [16/16] 0.0, 128
    %v1375 = vpop.trf.xlu0
    %v1376 = vpop.trf.xlu0
    %v1377 = vpop.trf.xlu0
    %v1378 = vpop.trf.xlu0
    %v1379 = vpop.trf.xlu0
    %v1380 = vpop.trf.xlu0
    %v1381 = vpop.trf.xlu0
    %v1382 = vpop.trf.xlu0
    %v1383 = vpop.trf.xlu0
    %v1384 = vpop.trf.xlu0
    %v1385 = vpop.trf.xlu0
    %v1386 = vpop.trf.xlu0
    %v1387 = vpop.trf.xlu0
    %v1388 = vpop.trf.xlu0
    %v1389 = vpop.trf.xlu0
    %v1390 = vpop.trf.xlu0
    %v1392 = vsel %vm339, %v1375, 0
    %v1395 = vsel %vm339, %v1376, 0
    %v1398 = vsel %vm339, %v1377, 0
    %v1401 = vsel %vm339, %v1378, 0
    %v1404 = vsel %vm339, %v1379, 0
    %v1407 = vsel %vm339, %v1380, 0
    %v1410 = vsel %vm339, %v1381, 0
    %v1413 = vsel %vm339, %v1382, 0
    %1415 = vmatprep.subr.mxu0 0.0
    %1416 = vmatpush1.msra.mxu0 0.0
    %1417 = vmatprep.subr.mxu0 0.0
    %1418 = vmatpush1.msra.mxu0 0.0
    %1419 = vmatprep.subr.mxu0 0.0
    %1420 = vmatpush1.msra.mxu0 0.0
    %1421 = vmatprep.subr.mxu0 0.0
    %1422 = vmatpush1.msra.mxu0 0.0
    %1423 = vmatprep.subr.mxu0 0.0
    %1424 = vmatpush1.msra.mxu0 0.0
    %1425 = vmatprep.subr.mxu0 0.0
    %1426 = vmatpush1.msra.mxu0 0.0
    %1427 = vmatprep.subr.mxu0 0.0
    %1428 = vmatpush1.msra.mxu0 0.0
    %1429 = vmatprep.subr.mxu0 0.0
    %1430 = vmatpush1.msra.mxu0 0.0
    %1431 = vmatprep.subr.mxu0 0.0
    %1432 = vmatpush1.msra.mxu0 0.0
    %1433 = vmatprep.subr.mxu0 0.0
    %1434 = vmatpush1.msra.mxu0 0.0
    %1435 = vmatprep.subr.mxu0 0.0
    %1436 = vmatpush1.msra.mxu0 0.0
    %1437 = vmatprep.subr.mxu0 0.0
    %1438 = vmatpush1.msra.mxu0 0.0
    %1439 = vmatprep.subr.mxu0 0.0
    %1440 = vmatpush1.msra.mxu0 0.0
    %1441 = vmatprep.subr.mxu0 0.0
    %1442 = vmatpush1.msra.mxu0 0.0
    %1443 = vmatprep.subr.mxu0 0.0
    %1444 = vmatpush1.msra.mxu0 0.0
    %1445 = vmatprep.subr.mxu0 0.0
    %1446 = vmatpush1.msra.mxu0 %v1357
    %1447 = vmatprep.subr.mxu0 0.0
    %1448 = vmatpush2.msra.mxu0 0.0
    %1449 = vmatprep.subr.mxu0 0.0
    %1450 = vmatpush2.msra.mxu0 0.0
    %1451 = vmatprep.subr.mxu0 0.0
    %1452 = vmatpush2.msra.mxu0 0.0
    %1453 = vmatprep.subr.mxu0 0.0
    %1454 = vmatpush2.msra.mxu0 0.0
    %1455 = vmatprep.subr.mxu0 0.0
    %1456 = vmatpush2.msra.mxu0 0.0
    %1457 = vmatprep.subr.mxu0 0.0
    %1458 = vmatpush2.msra.mxu0 0.0
    %1459 = vmatprep.subr.mxu0 0.0
    %1460 = vmatpush2.msra.mxu0 0.0
    %1461 = vmatprep.subr.mxu0 0.0
    %1462 = vmatpush2.msra.mxu0 0.0
    %1463 = vmatprep.subr.mxu0 0.0
    %1464 = vmatpush2.msra.mxu0 0.0
    %1465 = vmatprep.subr.mxu0 0.0
    %1466 = vmatpush2.msra.mxu0 0.0
    %1467 = vmatprep.subr.mxu0 0.0
    %1468 = vmatpush2.msra.mxu0 0.0
    %1469 = vmatprep.subr.mxu0 0.0
    %1470 = vmatpush2.msra.mxu0 0.0
    %1471 = vmatprep.subr.mxu0 0.0
    %1472 = vmatpush2.msra.mxu0 0.0
    %1473 = vmatprep.subr.mxu0 0.0
    %1474 = vmatpush2.msra.mxu0 0.0
    %1475 = vmatprep.subr.mxu0 0.0
    %1476 = vmatpush2.msra.mxu0 0.0
    %1477 = vmatprep.subr.mxu0 0.0
    %1478 = vmatpush2.msra.mxu0 0.0
    %1479 = vmatprep.mubr.f32.mxu0 0.0
    %1480 = vmatmul.mubr.f32.gmra.mxu0 %v1392
    %v1481 = vpop.f32.mrf.mxu0
    %v1482 = vadd.f32 0.0, %v1481
    %v1483 = vpop.f32.mrf.mxu0
    %1484 = vmatprep.mubr.f32.mxu0 0.0
    %1485 = vmatmul.mubr.f32.gmra.mxu0 %v1395
    %v1486 = vpop.f32.mrf.mxu0
    %v1487 = vadd.f32 0.0, %v1486
    %v1488 = vpop.f32.mrf.mxu0
    %1489 = vmatprep.mubr.f32.mxu0 0.0
    %1490 = vmatmul.mubr.f32.gmra.mxu0 %v1398
    %v1491 = vpop.f32.mrf.mxu0
    %v1492 = vadd.f32 0.0, %v1491
    %v1493 = vpop.f32.mrf.mxu0
    %1494 = vmatprep.mubr.f32.mxu0 0.0
    %1495 = vmatmul.mubr.f32.gmra.mxu0 %v1401
    %v1496 = vpop.f32.mrf.mxu0
    %v1497 = vadd.f32 0.0, %v1496
    %v1498 = vpop.f32.mrf.mxu0
    %1499 = vmatprep.mubr.f32.mxu0 0.0
    %1500 = vmatmul.mubr.f32.gmra.mxu0 %v1404
    %v1501 = vpop.f32.mrf.mxu0
    %v1502 = vadd.f32 0.0, %v1501
    %v1503 = vpop.f32.mrf.mxu0
    %1504 = vmatprep.mubr.f32.mxu0 0.0
    %1505 = vmatmul.mubr.f32.gmra.mxu0 %v1407
    %v1506 = vpop.f32.mrf.mxu0
    %v1507 = vadd.f32 0.0, %v1506
    %v1508 = vpop.f32.mrf.mxu0
    %1509 = vmatprep.mubr.f32.mxu0 0.0
    %1510 = vmatmul.mubr.f32.gmra.mxu0 %v1410
    %v1511 = vpop.f32.mrf.mxu0
    %v1512 = vadd.f32 0.0, %v1511
    %v1513 = vpop.f32.mrf.mxu0
    %1514 = vmatprep.mubr.f32.mxu0 0.0
    %1515 = vmatmul.mubr.f32.gmra.mxu0 %v1413
    %v1516 = vpop.f32.mrf.mxu0
    %v1517 = vadd.f32 0.0, %v1516
    %v1518 = vpop.f32.mrf.mxu0
    %1519 = vdwg.mxu0
    %v1520 = vsel %vm469, %v1482, -inf
    %1521 = vmax.xlane.f32.xlu0 %v1520
    %v1522 = vpop.xlane.xlu0 %1521
    %v1523 = vsel %vm469, %v1487, -inf
    %1524 = vmax.xlane.f32.xlu0 %v1523
    %v1525 = vpop.xlane.xlu0 %1524
    %v1526 = vsel %vm469, %v1492, -inf
    %1527 = vmax.xlane.f32.xlu0 %v1526
    %v1528 = vpop.xlane.xlu0 %1527
    %v1529 = vsel %vm469, %v1497, -inf
    %1530 = vmax.xlane.f32.xlu0 %v1529
    %v1531 = vpop.xlane.xlu0 %1530
    %v1532 = vsel %vm469, %v1502, -inf
    %1533 = vmax.xlane.f32.xlu0 %v1532
    %v1534 = vpop.xlane.xlu0 %1533
    %v1535 = vsel %vm469, %v1507, -inf
    %1536 = vmax.xlane.f32.xlu0 %v1535
    %v1537 = vpop.xlane.xlu0 %1536
    %v1538 = vsel %vm469, %v1512, -inf
    %1539 = vmax.xlane.f32.xlu0 %v1538
    %v1540 = vpop.xlane.xlu0 %1539
    %v1541 = vsel %vm469, %v1517, -inf
    %1542 = vmax.xlane.f32.xlu0 %v1541
    %v1543 = vpop.xlane.xlu0 %1542
    %v1544 = vsub.f32 %v1482, %v1522
    %v1545 = vsub.f32 %v1487, %v1525
    %v1546 = vsub.f32 %v1492, %v1528
    %v1547 = vsub.f32 %v1497, %v1531
    %v1548 = vsub.f32 %v1502, %v1534
    %v1549 = vsub.f32 %v1507, %v1537
    %v1550 = vsub.f32 %v1512, %v1540
    %v1551 = vsub.f32 %v1517, %v1543
    %v1552 = vmul.f32 %v1544, 1.442695
    %v1553 = vpow.pop %v1552
    %v1554 = vmul.f32 %v1545, 1.442695
    %v1555 = vpow.pop %v1554
    %v1556 = vmul.f32 %v1546, 1.442695
    %v1557 = vpow.pop %v1556
    %v1558 = vmul.f32 %v1547, 1.442695
    %v1559 = vpow.pop %v1558
    %v1560 = vmul.f32 %v1548, 1.442695
    %v1561 = vpow.pop %v1560
    %v1562 = vmul.f32 %v1549, 1.442695
    %v1563 = vpow.pop %v1562
    %v1564 = vmul.f32 %v1550, 1.442695
    %v1565 = vpow.pop %v1564
    %v1566 = vmul.f32 %v1551, 1.442695
    %v1567 = vpow.pop %v1566
    %v1568 = vsel %vm469, %v1553, 0.0
    %1569 = vadd.xlane.f32.xlu0 %v1568
    %v1570 = vpop.xlane.xlu0 %1569
    %v1571 = vsel %vm469, %v1555, 0.0
    %1572 = vadd.xlane.f32.xlu0 %v1571
    %v1573 = vpop.xlane.xlu0 %1572
    %v1574 = vsel %vm469, %v1557, 0.0
    %1575 = vadd.xlane.f32.xlu0 %v1574
    %v1576 = vpop.xlane.xlu0 %1575
    %v1577 = vsel %vm469, %v1559, 0.0
    %1578 = vadd.xlane.f32.xlu0 %v1577
    %v1579 = vpop.xlane.xlu0 %1578
    %v1580 = vsel %vm469, %v1561, 0.0
    %1581 = vadd.xlane.f32.xlu0 %v1580
    %v1582 = vpop.xlane.xlu0 %1581
    %v1583 = vsel %vm469, %v1563, 0.0
    %1584 = vadd.xlane.f32.xlu0 %v1583
    %v1585 = vpop.xlane.xlu0 %1584
    %v1586 = vsel %vm469, %v1565, 0.0
    %1587 = vadd.xlane.f32.xlu0 %v1586
    %v1588 = vpop.xlane.xlu0 %1587
    %v1589 = vsel %vm469, %v1567, 0.0
    %1590 = vadd.xlane.f32.xlu0 %v1589
    %v1591 = vpop.xlane.xlu0 %1590
    %v1592 = vrcp.pop %v1570
    %v1593 = vrcp.pop %v1573
    %v1594 = vrcp.pop %v1576
    %v1595 = vrcp.pop %v1579
    %v1596 = vrcp.pop %v1582
    %v1597 = vrcp.pop %v1585
    %v1598 = vrcp.pop %v1588
    %v1599 = vrcp.pop %v1591
    %v1600 = vmul.f32 %v1553, %v1592
    %v1601 = vmul.f32 %v1555, %v1593
    %v1602 = vmul.f32 %v1557, %v1594
    %v1603 = vmul.f32 %v1559, %v1595
    %v1604 = vmul.f32 %v1561, %v1596
    %v1605 = vmul.f32 %v1563, %v1597
    %v1606 = vmul.f32 %v1565, %v1598
    %v1607 = vmul.f32 %v1567, %v1599
    %v1609 = vsel %vm469, %v1358, 0
    %v1612 = vsel %vm469, %v1600, 0
    %v1615 = vsel %vm469, %v1601, 0
    %v1618 = vsel %vm469, %v1602, 0
    %v1621 = vsel %vm469, %v1603, 0
    %v1624 = vsel %vm469, %v1604, 0
    %v1627 = vsel %vm469, %v1605, 0
    %v1630 = vsel %vm469, %v1606, 0
    %v1633 = vsel %vm469, %v1607, 0
    %1635 = vmatprep.subr.mxu0 0.0
    %1636 = vmatpush1.xpose.msra.mxu0 0.0
    %1637 = vmatprep.subr.mxu0 0.0
    %1638 = vmatpush1.xpose.msra.mxu0 0.0
    %1639 = vmatprep.subr.mxu0 0.0
    %1640 = vmatpush1.xpose.msra.mxu0 0.0
    %1641 = vmatprep.subr.mxu0 0.0
    %1642 = vmatpush1.xpose.msra.mxu0 0.0
    %1643 = vmatprep.subr.mxu0 0.0
    %1644 = vmatpush1.xpose.msra.mxu0 0.0
    %1645 = vmatprep.subr.mxu0 0.0
    %1646 = vmatpush1.xpose.msra.mxu0 0.0
    %1647 = vmatprep.subr.mxu0 0.0
    %1648 = vmatpush1.xpose.msra.mxu0 0.0
    %1649 = vmatprep.subr.mxu0 0.0
    %1650 = vmatpush1.xpose.msra.mxu0 0.0
    %1651 = vmatprep.subr.mxu0 0.0
    %1652 = vmatpush1.xpose.msra.mxu0 %v1633
    %1653 = vmatprep.subr.mxu0 0.0
    %1654 = vmatpush1.xpose.msra.mxu0 %v1630
    %1655 = vmatprep.subr.mxu0 0.0
    %1656 = vmatpush1.xpose.msra.mxu0 %v1627
    %1657 = vmatprep.subr.mxu0 0.0
    %1658 = vmatpush1.xpose.msra.mxu0 %v1624
    %1659 = vmatprep.subr.mxu0 0.0
    %1660 = vmatpush1.xpose.msra.mxu0 %v1621
    %1661 = vmatprep.subr.mxu0 0.0
    %1662 = vmatpush1.xpose.msra.mxu0 %v1618
    %1663 = vmatprep.subr.mxu0 0.0
    %1664 = vmatpush1.xpose.msra.mxu0 %v1615
    %1665 = vmatprep.subr.mxu0 0.0
    %1666 = vmatpush1.xpose.msra.mxu0 %v1612
    %1667 = vmatprep.subr.mxu0 0.0
    %1668 = vmatpush2.xpose.msra.mxu0 0.0
    %1669 = vmatprep.subr.mxu0 0.0
    %1670 = vmatpush2.xpose.msra.mxu0 0.0
    %1671 = vmatprep.subr.mxu0 0.0
    %1672 = vmatpush2.xpose.msra.mxu0 0.0
    %1673 = vmatprep.subr.mxu0 0.0
    %1674 = vmatpush2.xpose.msra.mxu0 0.0
    %1675 = vmatprep.subr.mxu0 0.0
    %1676 = vmatpush2.xpose.msra.mxu0 0.0
    %1677 = vmatprep.subr.mxu0 0.0
    %1678 = vmatpush2.xpose.msra.mxu0 0.0
    %1679 = vmatprep.subr.mxu0 0.0
    %1680 = vmatpush2.xpose.msra.mxu0 0.0
    %1681 = vmatprep.subr.mxu0 0.0
    %1682 = vmatpush2.xpose.msra.mxu0 0.0
    %1683 = vmatprep.subr.mxu0 0.0
    %1684 = vmatpush2.xpose.msra.mxu0 0.0
    %1685 = vmatprep.subr.mxu0 0.0
    %1686 = vmatpush2.xpose.msra.mxu0 0.0
    %1687 = vmatprep.subr.mxu0 0.0
    %1688 = vmatpush2.xpose.msra.mxu0 0.0
    %1689 = vmatprep.subr.mxu0 0.0
    %1690 = vmatpush2.xpose.msra.mxu0 0.0
    %1691 = vmatprep.subr.mxu0 0.0
    %1692 = vmatpush2.xpose.msra.mxu0 0.0
    %1693 = vmatprep.subr.mxu0 0.0
    %1694 = vmatpush2.xpose.msra.mxu0 0.0
    %1695 = vmatprep.subr.mxu0 0.0
    %1696 = vmatpush2.xpose.msra.mxu0 0.0
    %1697 = vmatprep.subr.mxu0 0.0
    %1698 = vmatpush2.xpose.msra.mxu0 0.0
    %1699 = vmatprep.mubr.f32.mxu0 0.0
    %1700 = vmatmul.mubr.f32.gmra.mxu0 %v1609
    %v1701 = vpop.f32.mrf.mxu0
    %v1702 = vadd.f32 0.0, %v1701
    %v1703 = vpop.f32.mrf.mxu0
    %1704 = vdwg.mxu0
    %1705 = vst.msk [vmem:[#allocation3 + $0x18] sm:$0xff] %vm469, %v1702
    %v1706 = vld [vmem:[#allocation2] sm:$0xff]
    %v1707 = vld [vmem:[#allocation2 + $0x20] sm:$0xff]
    %v1708 = vld [vmem:[#allocation2 + $0x40] sm:$0xff]
    %1710 = vrot.lane.b32.xlu0 %v1706, 64
    %v1711 = vpop.permute.xlu0 %1710
    %1713 = vxpose.xlu0.b32.start [1/16] %v1711, 128
    %1714 = vxpose.xlu0.b32.cont [2/16] 0.0, 128
    %1715 = vxpose.xlu0.b32.cont [3/16] 0.0, 128
    %1716 = vxpose.xlu0.b32.cont [4/16] 0.0, 128
    %1717 = vxpose.xlu0.b32.cont [5/16] 0.0, 128
    %1718 = vxpose.xlu0.b32.cont [6/16] 0.0, 128
    %1719 = vxpose.xlu0.b32.cont [7/16] 0.0, 128
    %1720 = vxpose.xlu0.b32.cont [8/16] 0.0, 128
    %1721 = vxpose.xlu0.b32.cont [9/16] 0.0, 128
    %1722 = vxpose.xlu0.b32.cont [10/16] 0.0, 128
    %1723 = vxpose.xlu0.b32.cont [11/16] 0.0, 128
    %1724 = vxpose.xlu0.b32.cont [12/16] 0.0, 128
    %1725 = vxpose.xlu0.b32.cont [13/16] 0.0, 128
    %1726 = vxpose.xlu0.b32.cont [14/16] 0.0, 128
    %1727 = vxpose.xlu0.b32.cont [15/16] 0.0, 128
    %1728 = vxpose.xlu0.b32.end [16/16] 0.0, 128
    %v1729 = vpop.trf.xlu0
    %v1730 = vpop.trf.xlu0
    %v1731 = vpop.trf.xlu0
    %v1732 = vpop.trf.xlu0
    %v1733 = vpop.trf.xlu0
    %v1734 = vpop.trf.xlu0
    %v1735 = vpop.trf.xlu0
    %v1736 = vpop.trf.xlu0
    %v1737 = vpop.trf.xlu0
    %v1738 = vpop.trf.xlu0
    %v1739 = vpop.trf.xlu0
    %v1740 = vpop.trf.xlu0
    %v1741 = vpop.trf.xlu0
    %v1742 = vpop.trf.xlu0
    %v1743 = vpop.trf.xlu0
    %v1744 = vpop.trf.xlu0
    %1746 = vrot.lane.b32.xlu0 %v1707, 64
    %v1747 = vpop.permute.xlu0 %1746
    %v1750 = vsel %vm339, %v1729, 0
    %v1753 = vsel %vm339, %v1730, 0
    %v1756 = vsel %vm339, %v1731, 0
    %v1759 = vsel %vm339, %v1732, 0
    %v1762 = vsel %vm339, %v1733, 0
    %v1765 = vsel %vm339, %v1734, 0
    %v1768 = vsel %vm339, %v1735, 0
    %v1771 = vsel %vm339, %v1736, 0
    %1773 = vmatprep.subr.mxu0 0.0
    %1774 = vmatpush1.msra.mxu0 0.0
    %1775 = vmatprep.subr.mxu0 0.0
    %1776 = vmatpush1.msra.mxu0 0.0
    %1777 = vmatprep.subr.mxu0 0.0
    %1778 = vmatpush1.msra.mxu0 0.0
    %1779 = vmatprep.subr.mxu0 0.0
    %1780 = vmatpush1.msra.mxu0 0.0
    %1781 = vmatprep.subr.mxu0 0.0
    %1782 = vmatpush1.msra.mxu0 0.0
    %1783 = vmatprep.subr.mxu0 0.0
    %1784 = vmatpush1.msra.mxu0 0.0
    %1785 = vmatprep.subr.mxu0 0.0
    %1786 = vmatpush1.msra.mxu0 0.0
    %1787 = vmatprep.subr.mxu0 0.0
    %1788 = vmatpush1.msra.mxu0 0.0
    %1789 = vmatprep.subr.mxu0 0.0
    %1790 = vmatpush1.msra.mxu0 0.0
    %1791 = vmatprep.subr.mxu0 0.0
    %1792 = vmatpush1.msra.mxu0 0.0
    %1793 = vmatprep.subr.mxu0 0.0
    %1794 = vmatpush1.msra.mxu0 0.0
    %1795 = vmatprep.subr.mxu0 0.0
    %1796 = vmatpush1.msra.mxu0 0.0
    %1797 = vmatprep.subr.mxu0 0.0
    %1798 = vmatpush1.msra.mxu0 0.0
    %1799 = vmatprep.subr.mxu0 0.0
    %1800 = vmatpush1.msra.mxu0 0.0
    %1801 = vmatprep.subr.mxu0 0.0
    %1802 = vmatpush1.msra.mxu0 0.0
    %1803 = vmatprep.subr.mxu0 0.0
    %1804 = vmatpush1.msra.mxu0 %v1747
    %1805 = vmatprep.subr.mxu0 0.0
    %1806 = vmatpush2.msra.mxu0 0.0
    %1807 = vmatprep.subr.mxu0 0.0
    %1808 = vmatpush2.msra.mxu0 0.0
    %1809 = vmatprep.subr.mxu0 0.0
    %1810 = vmatpush2.msra.mxu0 0.0
    %1811 = vmatprep.subr.mxu0 0.0
    %1812 = vmatpush2.msra.mxu0 0.0
    %1813 = vmatprep.subr.mxu0 0.0
    %1814 = vmatpush2.msra.mxu0 0.0
    %1815 = vmatprep.subr.mxu0 0.0
    %1816 = vmatpush2.msra.mxu0 0.0
    %1817 = vmatprep.subr.mxu0 0.0
    %1818 = vmatpush2.msra.mxu0 0.0
    %1819 = vmatprep.subr.mxu0 0.0
    %1820 = vmatpush2.msra.mxu0 0.0
    %1821 = vmatprep.subr.mxu0 0.0
    %1822 = vmatpush2.msra.mxu0 0.0
    %1823 = vmatprep.subr.mxu0 0.0
    %1824 = vmatpush2.msra.mxu0 0.0
    %1825 = vmatprep.subr.mxu0 0.0
    %1826 = vmatpush2.msra.mxu0 0.0
    %1827 = vmatprep.subr.mxu0 0.0
    %1828 = vmatpush2.msra.mxu0 0.0
    %1829 = vmatprep.subr.mxu0 0.0
    %1830 = vmatpush2.msra.mxu0 0.0
    %1831 = vmatprep.subr.mxu0 0.0
    %1832 = vmatpush2.msra.mxu0 0.0
    %1833 = vmatprep.subr.mxu0 0.0
    %1834 = vmatpush2.msra.mxu0 0.0
    %1835 = vmatprep.subr.mxu0 0.0
    %1836 = vmatpush2.msra.mxu0 0.0
    %1837 = vmatprep.mubr.f32.mxu0 0.0
    %1838 = vmatmul.mubr.f32.gmra.mxu0 %v1750
    %v1839 = vpop.f32.mrf.mxu0
    %v1840 = vadd.f32 0.0, %v1839
    %v1841 = vpop.f32.mrf.mxu0
    %1842 = vmatprep.mubr.f32.mxu0 0.0
    %1843 = vmatmul.mubr.f32.gmra.mxu0 %v1753
    %v1844 = vpop.f32.mrf.mxu0
    %v1845 = vadd.f32 0.0, %v1844
    %v1846 = vpop.f32.mrf.mxu0
    %1847 = vmatprep.mubr.f32.mxu0 0.0
    %1848 = vmatmul.mubr.f32.gmra.mxu0 %v1756
    %v1849 = vpop.f32.mrf.mxu0
    %v1850 = vadd.f32 0.0, %v1849
    %v1851 = vpop.f32.mrf.mxu0
    %1852 = vmatprep.mubr.f32.mxu0 0.0
    %1853 = vmatmul.mubr.f32.gmra.mxu0 %v1759
    %v1854 = vpop.f32.mrf.mxu0
    %v1855 = vadd.f32 0.0, %v1854
    %v1856 = vpop.f32.mrf.mxu0
    %1857 = vmatprep.mubr.f32.mxu0 0.0
    %1858 = vmatmul.mubr.f32.gmra.mxu0 %v1762
    %v1859 = vpop.f32.mrf.mxu0
    %v1860 = vadd.f32 0.0, %v1859
    %v1861 = vpop.f32.mrf.mxu0
    %1862 = vmatprep.mubr.f32.mxu0 0.0
    %1863 = vmatmul.mubr.f32.gmra.mxu0 %v1765
    %v1864 = vpop.f32.mrf.mxu0
    %v1865 = vadd.f32 0.0, %v1864
    %v1866 = vpop.f32.mrf.mxu0
    %1867 = vmatprep.mubr.f32.mxu0 0.0
    %1868 = vmatmul.mubr.f32.gmra.mxu0 %v1768
    %v1869 = vpop.f32.mrf.mxu0
    %v1870 = vadd.f32 0.0, %v1869
    %v1871 = vpop.f32.mrf.mxu0
    %1872 = vmatprep.mubr.f32.mxu0 0.0
    %1873 = vmatmul.mubr.f32.gmra.mxu0 %v1771
    %v1874 = vpop.f32.mrf.mxu0
    %v1875 = vadd.f32 0.0, %v1874
    %v1876 = vpop.f32.mrf.mxu0
    %1877 = vdwg.mxu0
    %v1878 = vsel %vm469, %v1840, -inf
    %1879 = vmax.xlane.f32.xlu0 %v1878
    %v1880 = vpop.xlane.xlu0 %1879
    %v1881 = vsel %vm469, %v1845, -inf
    %1882 = vmax.xlane.f32.xlu0 %v1881
    %v1883 = vpop.xlane.xlu0 %1882
    %v1884 = vsel %vm469, %v1850, -inf
    %1885 = vmax.xlane.f32.xlu0 %v1884
    %v1886 = vpop.xlane.xlu0 %1885
    %v1887 = vsel %vm469, %v1855, -inf
    %1888 = vmax.xlane.f32.xlu0 %v1887
    %v1889 = vpop.xlane.xlu0 %1888
    %v1890 = vsel %vm469, %v1860, -inf
    %1891 = vmax.xlane.f32.xlu0 %v1890
    %v1892 = vpop.xlane.xlu0 %1891
    %v1893 = vsel %vm469, %v1865, -inf
    %1894 = vmax.xlane.f32.xlu0 %v1893
    %v1895 = vpop.xlane.xlu0 %1894
    %v1896 = vsel %vm469, %v1870, -inf
    %1897 = vmax.xlane.f32.xlu0 %v1896
    %v1898 = vpop.xlane.xlu0 %1897
    %v1899 = vsel %vm469, %v1875, -inf
    %1900 = vmax.xlane.f32.xlu0 %v1899
    %v1901 = vpop.xlane.xlu0 %1900
    %v1902 = vsub.f32 %v1840, %v1880
    %v1903 = vsub.f32 %v1845, %v1883
    %v1904 = vsub.f32 %v1850, %v1886
    %v1905 = vsub.f32 %v1855, %v1889
    %v1906 = vsub.f32 %v1860, %v1892
    %v1907 = vsub.f32 %v1865, %v1895
    %v1908 = vsub.f32 %v1870, %v1898
    %v1909 = vsub.f32 %v1875, %v1901
    %v1910 = vmul.f32 %v1902, 1.442695
    %v1911 = vpow.pop %v1910
    %v1912 = vmul.f32 %v1903, 1.442695
    %v1913 = vpow.pop %v1912
    %v1914 = vmul.f32 %v1904, 1.442695
    %v1915 = vpow.pop %v1914
    %v1916 = vmul.f32 %v1905, 1.442695
    %v1917 = vpow.pop %v1916
    %v1918 = vmul.f32 %v1906, 1.442695
    %v1919 = vpow.pop %v1918
    %v1920 = vmul.f32 %v1907, 1.442695
    %v1921 = vpow.pop %v1920
    %v1922 = vmul.f32 %v1908, 1.442695
    %v1923 = vpow.pop %v1922
    %v1924 = vmul.f32 %v1909, 1.442695
    %v1925 = vpow.pop %v1924
    %v1926 = vsel %vm469, %v1911, 0.0
    %1927 = vadd.xlane.f32.xlu0 %v1926
    %v1928 = vpop.xlane.xlu0 %1927
    %v1929 = vsel %vm469, %v1913, 0.0
    %1930 = vadd.xlane.f32.xlu0 %v1929
    %v1931 = vpop.xlane.xlu0 %1930
    %v1932 = vsel %vm469, %v1915, 0.0
    %1933 = vadd.xlane.f32.xlu0 %v1932
    %v1934 = vpop.xlane.xlu0 %1933
    %v1935 = vsel %vm469, %v1917, 0.0
    %1936 = vadd.xlane.f32.xlu0 %v1935
    %v1937 = vpop.xlane.xlu0 %1936
    %v1938 = vsel %vm469, %v1919, 0.0
    %1939 = vadd.xlane.f32.xlu0 %v1938
    %v1940 = vpop.xlane.xlu0 %1939
    %v1941 = vsel %vm469, %v1921, 0.0
    %1942 = vadd.xlane.f32.xlu0 %v1941
    %v1943 = vpop.xlane.xlu0 %1942
    %v1944 = vsel %vm469, %v1923, 0.0
    %1945 = vadd.xlane.f32.xlu0 %v1944
    %v1946 = vpop.xlane.xlu0 %1945
    %v1947 = vsel %vm469, %v1925, 0.0
    %1948 = vadd.xlane.f32.xlu0 %v1947
    %v1949 = vpop.xlane.xlu0 %1948
    %v1950 = vrcp.pop %v1928
    %v1951 = vrcp.pop %v1931
    %v1952 = vrcp.pop %v1934
    %v1953 = vrcp.pop %v1937
    %v1954 = vrcp.pop %v1940
    %v1955 = vrcp.pop %v1943
    %v1956 = vrcp.pop %v1946
    %v1957 = vrcp.pop %v1949
    %v1958 = vmul.f32 %v1911, %v1950
    %v1959 = vmul.f32 %v1913, %v1951
    %v1960 = vmul.f32 %v1915, %v1952
    %v1961 = vmul.f32 %v1917, %v1953
    %v1962 = vmul.f32 %v1919, %v1954
    %v1963 = vmul.f32 %v1921, %v1955
    %v1964 = vmul.f32 %v1923, %v1956
    %v1965 = vmul.f32 %v1925, %v1957
    %1967 = vrot.lane.b32.xlu0 %v1708, 64
    %v1968 = vpop.permute.xlu0 %1967
    %v1969 = vsel %vm469, %v1968, 0
    %v1972 = vsel %vm469, %v1958, 0
    %v1975 = vsel %vm469, %v1959, 0
    %v1978 = vsel %vm469, %v1960, 0
    %v1981 = vsel %vm469, %v1961, 0
    %v1984 = vsel %vm469, %v1962, 0
    %v1987 = vsel %vm469, %v1963, 0
    %v1990 = vsel %vm469, %v1964, 0
    %v1993 = vsel %vm469, %v1965, 0
    %1995 = vmatprep.subr.mxu0 0.0
    %1996 = vmatpush1.xpose.msra.mxu0 0.0
    %1997 = vmatprep.subr.mxu0 0.0
    %1998 = vmatpush1.xpose.msra.mxu0 0.0
    %1999 = vmatprep.subr.mxu0 0.0
    %2000 = vmatpush1.xpose.msra.mxu0 0.0
    %2001 = vmatprep.subr.mxu0 0.0
    %2002 = vmatpush1.xpose.msra.mxu0 0.0
    %2003 = vmatprep.subr.mxu0 0.0
    %2004 = vmatpush1.xpose.msra.mxu0 0.0
    %2005 = vmatprep.subr.mxu0 0.0
    %2006 = vmatpush1.xpose.msra.mxu0 0.0
    %2007 = vmatprep.subr.mxu0 0.0
    %2008 = vmatpush1.xpose.msra.mxu0 0.0
    %2009 = vmatprep.subr.mxu0 0.0
    %2010 = vmatpush1.xpose.msra.mxu0 0.0
    %2011 = vmatprep.subr.mxu0 0.0
    %2012 = vmatpush1.xpose.msra.mxu0 %v1993
    %2013 = vmatprep.subr.mxu0 0.0
    %2014 = vmatpush1.xpose.msra.mxu0 %v1990
    %2015 = vmatprep.subr.mxu0 0.0
    %2016 = vmatpush1.xpose.msra.mxu0 %v1987
    %2017 = vmatprep.subr.mxu0 0.0
    %2018 = vmatpush1.xpose.msra.mxu0 %v1984
    %2019 = vmatprep.subr.mxu0 0.0
    %2020 = vmatpush1.xpose.msra.mxu0 %v1981
    %2021 = vmatprep.subr.mxu0 0.0
    %2022 = vmatpush1.xpose.msra.mxu0 %v1978
    %2023 = vmatprep.subr.mxu0 0.0
    %2024 = vmatpush1.xpose.msra.mxu0 %v1975
    %2025 = vmatprep.subr.mxu0 0.0
    %2026 = vmatpush1.xpose.msra.mxu0 %v1972
    %2027 = vmatprep.subr.mxu0 0.0
    %2028 = vmatpush2.xpose.msra.mxu0 0.0
    %2029 = vmatprep.subr.mxu0 0.0
    %2030 = vmatpush2.xpose.msra.mxu0 0.0
    %2031 = vmatprep.subr.mxu0 0.0
    %2032 = vmatpush2.xpose.msra.mxu0 0.0
    %2033 = vmatprep.subr.mxu0 0.0
    %2034 = vmatpush2.xpose.msra.mxu0 0.0
    %2035 = vmatprep.subr.mxu0 0.0
    %2036 = vmatpush2.xpose.msra.mxu0 0.0
    %2037 = vmatprep.subr.mxu0 0.0
    %2038 = vmatpush2.xpose.msra.mxu0 0.0
    %2039 = vmatprep.subr.mxu0 0.0
    %2040 = vmatpush2.xpose.msra.mxu0 0.0
    %2041 = vmatprep.subr.mxu0 0.0
    %2042 = vmatpush2.xpose.msra.mxu0 0.0
    %2043 = vmatprep.subr.mxu0 0.0
    %2044 = vmatpush2.xpose.msra.mxu0 0.0
    %2045 = vmatprep.subr.mxu0 0.0
    %2046 = vmatpush2.xpose.msra.mxu0 0.0
    %2047 = vmatprep.subr.mxu0 0.0
    %2048 = vmatpush2.xpose.msra.mxu0 0.0
    %2049 = vmatprep.subr.mxu0 0.0
    %2050 = vmatpush2.xpose.msra.mxu0 0.0
    %2051 = vmatprep.subr.mxu0 0.0
    %2052 = vmatpush2.xpose.msra.mxu0 0.0
    %2053 = vmatprep.subr.mxu0 0.0
    %2054 = vmatpush2.xpose.msra.mxu0 0.0
    %2055 = vmatprep.subr.mxu0 0.0
    %2056 = vmatpush2.xpose.msra.mxu0 0.0
    %2057 = vmatprep.subr.mxu0 0.0
    %2058 = vmatpush2.xpose.msra.mxu0 0.0
    %2059 = vmatprep.mubr.f32.mxu0 0.0
    %2060 = vmatmul.mubr.f32.gmra.mxu0 %v1969
    %v2061 = vpop.f32.mrf.mxu0
    %v2062 = vadd.f32 0.0, %v2061
    %v2063 = vpop.f32.mrf.mxu0
    %2064 = vdwg.mxu0
    %2066 = vrot.lane.b32.xlu0 %v2062, 64
    %v2067 = vpop.permute.xlu0 %2066
    %vm2069 = vcmask 1048064
    %2070 = vst.msk [vmem:[#allocation3] sm:$0xff] %vm2069, %v2067
    %v2071 = vld [vmem:[#allocation2 + $0x8] sm:$0xff]
    %v2072 = vld [vmem:[#allocation2 + $0x28] sm:$0xff]
    %v2073 = vld [vmem:[#allocation2 + $0x48] sm:$0xff]
    %2075 = vrot.lane.b32.xlu0 %v2071, 64
    %v2076 = vpop.permute.xlu0 %2075
    %2078 = vxpose.xlu0.b32.start [1/16] %v2076, 128
    %2079 = vxpose.xlu0.b32.cont [2/16] 0.0, 128
    %2080 = vxpose.xlu0.b32.cont [3/16] 0.0, 128
    %2081 = vxpose.xlu0.b32.cont [4/16] 0.0, 128
    %2082 = vxpose.xlu0.b32.cont [5/16] 0.0, 128
    %2083 = vxpose.xlu0.b32.cont [6/16] 0.0, 128
    %2084 = vxpose.xlu0.b32.cont [7/16] 0.0, 128
    %2085 = vxpose.xlu0.b32.cont [8/16] 0.0, 128
    %2086 = vxpose.xlu0.b32.cont [9/16] 0.0, 128
    %2087 = vxpose.xlu0.b32.cont [10/16] 0.0, 128
    %2088 = vxpose.xlu0.b32.cont [11/16] 0.0, 128
    %2089 = vxpose.xlu0.b32.cont [12/16] 0.0, 128
    %2090 = vxpose.xlu0.b32.cont [13/16] 0.0, 128
    %2091 = vxpose.xlu0.b32.cont [14/16] 0.0, 128
    %2092 = vxpose.xlu0.b32.cont [15/16] 0.0, 128
    %2093 = vxpose.xlu0.b32.end [16/16] 0.0, 128
    %v2094 = vpop.trf.xlu0
    %v2095 = vpop.trf.xlu0
    %v2096 = vpop.trf.xlu0
    %v2097 = vpop.trf.xlu0
    %v2098 = vpop.trf.xlu0
    %v2099 = vpop.trf.xlu0
    %v2100 = vpop.trf.xlu0
    %v2101 = vpop.trf.xlu0
    %v2102 = vpop.trf.xlu0
    %v2103 = vpop.trf.xlu0
    %v2104 = vpop.trf.xlu0
    %v2105 = vpop.trf.xlu0
    %v2106 = vpop.trf.xlu0
    %v2107 = vpop.trf.xlu0
    %v2108 = vpop.trf.xlu0
    %v2109 = vpop.trf.xlu0
    %2111 = vrot.lane.b32.xlu0 %v2072, 64
    %v2112 = vpop.permute.xlu0 %2111
    %v2115 = vsel %vm339, %v2094, 0
    %v2118 = vsel %vm339, %v2095, 0
    %v2121 = vsel %vm339, %v2096, 0
    %v2124 = vsel %vm339, %v2097, 0
    %v2127 = vsel %vm339, %v2098, 0
    %v2130 = vsel %vm339, %v2099, 0
    %v2133 = vsel %vm339, %v2100, 0
    %v2136 = vsel %vm339, %v2101, 0
    %2138 = vmatprep.subr.mxu0 0.0
    %2139 = vmatpush1.msra.mxu0 0.0
    %2140 = vmatprep.subr.mxu0 0.0
    %2141 = vmatpush1.msra.mxu0 0.0
    %2142 = vmatprep.subr.mxu0 0.0
    %2143 = vmatpush1.msra.mxu0 0.0
    %2144 = vmatprep.subr.mxu0 0.0
    %2145 = vmatpush1.msra.mxu0 0.0
    %2146 = vmatprep.subr.mxu0 0.0
    %2147 = vmatpush1.msra.mxu0 0.0
    %2148 = vmatprep.subr.mxu0 0.0
    %2149 = vmatpush1.msra.mxu0 0.0
    %2150 = vmatprep.subr.mxu0 0.0
    %2151 = vmatpush1.msra.mxu0 0.0
    %2152 = vmatprep.subr.mxu0 0.0
    %2153 = vmatpush1.msra.mxu0 0.0
    %2154 = vmatprep.subr.mxu0 0.0
    %2155 = vmatpush1.msra.mxu0 0.0
    %2156 = vmatprep.subr.mxu0 0.0
    %2157 = vmatpush1.msra.mxu0 0.0
    %2158 = vmatprep.subr.mxu0 0.0
    %2159 = vmatpush1.msra.mxu0 0.0
    %2160 = vmatprep.subr.mxu0 0.0
    %2161 = vmatpush1.msra.mxu0 0.0
    %2162 = vmatprep.subr.mxu0 0.0
    %2163 = vmatpush1.msra.mxu0 0.0
    %2164 = vmatprep.subr.mxu0 0.0
    %2165 = vmatpush1.msra.mxu0 0.0
    %2166 = vmatprep.subr.mxu0 0.0
    %2167 = vmatpush1.msra.mxu0 0.0
    %2168 = vmatprep.subr.mxu0 0.0
    %2169 = vmatpush1.msra.mxu0 %v2112
    %2170 = vmatprep.subr.mxu0 0.0
    %2171 = vmatpush2.msra.mxu0 0.0
    %2172 = vmatprep.subr.mxu0 0.0
    %2173 = vmatpush2.msra.mxu0 0.0
    %2174 = vmatprep.subr.mxu0 0.0
    %2175 = vmatpush2.msra.mxu0 0.0
    %2176 = vmatprep.subr.mxu0 0.0
    %2177 = vmatpush2.msra.mxu0 0.0
    %2178 = vmatprep.subr.mxu0 0.0
    %2179 = vmatpush2.msra.mxu0 0.0
    %2180 = vmatprep.subr.mxu0 0.0
    %2181 = vmatpush2.msra.mxu0 0.0
    %2182 = vmatprep.subr.mxu0 0.0
    %2183 = vmatpush2.msra.mxu0 0.0
    %2184 = vmatprep.subr.mxu0 0.0
    %2185 = vmatpush2.msra.mxu0 0.0
    %2186 = vmatprep.subr.mxu0 0.0
    %2187 = vmatpush2.msra.mxu0 0.0
    %2188 = vmatprep.subr.mxu0 0.0
    %2189 = vmatpush2.msra.mxu0 0.0
    %2190 = vmatprep.subr.mxu0 0.0
    %2191 = vmatpush2.msra.mxu0 0.0
    %2192 = vmatprep.subr.mxu0 0.0
    %2193 = vmatpush2.msra.mxu0 0.0
    %2194 = vmatprep.subr.mxu0 0.0
    %2195 = vmatpush2.msra.mxu0 0.0
    %2196 = vmatprep.subr.mxu0 0.0
    %2197 = vmatpush2.msra.mxu0 0.0
    %2198 = vmatprep.subr.mxu0 0.0
    %2199 = vmatpush2.msra.mxu0 0.0
    %2200 = vmatprep.subr.mxu0 0.0
    %2201 = vmatpush2.msra.mxu0 0.0
    %2202 = vmatprep.mubr.f32.mxu0 0.0
    %2203 = vmatmul.mubr.f32.gmra.mxu0 %v2115
    %v2204 = vpop.f32.mrf.mxu0
    %v2205 = vadd.f32 0.0, %v2204
    %v2206 = vpop.f32.mrf.mxu0
    %2207 = vmatprep.mubr.f32.mxu0 0.0
    %2208 = vmatmul.mubr.f32.gmra.mxu0 %v2118
    %v2209 = vpop.f32.mrf.mxu0
    %v2210 = vadd.f32 0.0, %v2209
    %v2211 = vpop.f32.mrf.mxu0
    %2212 = vmatprep.mubr.f32.mxu0 0.0
    %2213 = vmatmul.mubr.f32.gmra.mxu0 %v2121
    %v2214 = vpop.f32.mrf.mxu0
    %v2215 = vadd.f32 0.0, %v2214
    %v2216 = vpop.f32.mrf.mxu0
    %2217 = vmatprep.mubr.f32.mxu0 0.0
    %2218 = vmatmul.mubr.f32.gmra.mxu0 %v2124
    %v2219 = vpop.f32.mrf.mxu0
    %v2220 = vadd.f32 0.0, %v2219
    %v2221 = vpop.f32.mrf.mxu0
    %2222 = vmatprep.mubr.f32.mxu0 0.0
    %2223 = vmatmul.mubr.f32.gmra.mxu0 %v2127
    %v2224 = vpop.f32.mrf.mxu0
    %v2225 = vadd.f32 0.0, %v2224
    %v2226 = vpop.f32.mrf.mxu0
    %2227 = vmatprep.mubr.f32.mxu0 0.0
    %2228 = vmatmul.mubr.f32.gmra.mxu0 %v2130
    %v2229 = vpop.f32.mrf.mxu0
    %v2230 = vadd.f32 0.0, %v2229
    %v2231 = vpop.f32.mrf.mxu0
    %2232 = vmatprep.mubr.f32.mxu0 0.0
    %2233 = vmatmul.mubr.f32.gmra.mxu0 %v2133
    %v2234 = vpop.f32.mrf.mxu0
    %v2235 = vadd.f32 0.0, %v2234
    %v2236 = vpop.f32.mrf.mxu0
    %2237 = vmatprep.mubr.f32.mxu0 0.0
    %2238 = vmatmul.mubr.f32.gmra.mxu0 %v2136
    %v2239 = vpop.f32.mrf.mxu0
    %v2240 = vadd.f32 0.0, %v2239
    %v2241 = vpop.f32.mrf.mxu0
    %2242 = vdwg.mxu0
    %v2243 = vsel %vm469, %v2205, -inf
    %2244 = vmax.xlane.f32.xlu0 %v2243
    %v2245 = vpop.xlane.xlu0 %2244
    %v2246 = vsel %vm469, %v2210, -inf
    %2247 = vmax.xlane.f32.xlu0 %v2246
    %v2248 = vpop.xlane.xlu0 %2247
    %v2249 = vsel %vm469, %v2215, -inf
    %2250 = vmax.xlane.f32.xlu0 %v2249
    %v2251 = vpop.xlane.xlu0 %2250
    %v2252 = vsel %vm469, %v2220, -inf
    %2253 = vmax.xlane.f32.xlu0 %v2252
    %v2254 = vpop.xlane.xlu0 %2253
    %v2255 = vsel %vm469, %v2225, -inf
    %2256 = vmax.xlane.f32.xlu0 %v2255
    %v2257 = vpop.xlane.xlu0 %2256
    %v2258 = vsel %vm469, %v2230, -inf
    %2259 = vmax.xlane.f32.xlu0 %v2258
    %v2260 = vpop.xlane.xlu0 %2259
    %v2261 = vsel %vm469, %v2235, -inf
    %2262 = vmax.xlane.f32.xlu0 %v2261
    %v2263 = vpop.xlane.xlu0 %2262
    %v2264 = vsel %vm469, %v2240, -inf
    %2265 = vmax.xlane.f32.xlu0 %v2264
    %v2266 = vpop.xlane.xlu0 %2265
    %v2267 = vsub.f32 %v2205, %v2245
    %v2268 = vsub.f32 %v2210, %v2248
    %v2269 = vsub.f32 %v2215, %v2251
    %v2270 = vsub.f32 %v2220, %v2254
    %v2271 = vsub.f32 %v2225, %v2257
    %v2272 = vsub.f32 %v2230, %v2260
    %v2273 = vsub.f32 %v2235, %v2263
    %v2274 = vsub.f32 %v2240, %v2266
    %v2275 = vmul.f32 %v2267, 1.442695
    %v2276 = vpow.pop %v2275
    %v2277 = vmul.f32 %v2268, 1.442695
    %v2278 = vpow.pop %v2277
    %v2279 = vmul.f32 %v2269, 1.442695
    %v2280 = vpow.pop %v2279
    %v2281 = vmul.f32 %v2270, 1.442695
    %v2282 = vpow.pop %v2281
    %v2283 = vmul.f32 %v2271, 1.442695
    %v2284 = vpow.pop %v2283
    %v2285 = vmul.f32 %v2272, 1.442695
    %v2286 = vpow.pop %v2285
    %v2287 = vmul.f32 %v2273, 1.442695
    %v2288 = vpow.pop %v2287
    %v2289 = vmul.f32 %v2274, 1.442695
    %v2290 = vpow.pop %v2289
    %v2291 = vsel %vm469, %v2276, 0.0
    %2292 = vadd.xlane.f32.xlu0 %v2291
    %v2293 = vpop.xlane.xlu0 %2292
    %v2294 = vsel %vm469, %v2278, 0.0
    %2295 = vadd.xlane.f32.xlu0 %v2294
    %v2296 = vpop.xlane.xlu0 %2295
    %v2297 = vsel %vm469, %v2280, 0.0
    %2298 = vadd.xlane.f32.xlu0 %v2297
    %v2299 = vpop.xlane.xlu0 %2298
    %v2300 = vsel %vm469, %v2282, 0.0
    %2301 = vadd.xlane.f32.xlu0 %v2300
    %v2302 = vpop.xlane.xlu0 %2301
    %v2303 = vsel %vm469, %v2284, 0.0
    %2304 = vadd.xlane.f32.xlu0 %v2303
    %v2305 = vpop.xlane.xlu0 %2304
    %v2306 = vsel %vm469, %v2286, 0.0
    %2307 = vadd.xlane.f32.xlu0 %v2306
    %v2308 = vpop.xlane.xlu0 %2307
    %v2309 = vsel %vm469, %v2288, 0.0
    %2310 = vadd.xlane.f32.xlu0 %v2309
    %v2311 = vpop.xlane.xlu0 %2310
    %v2312 = vsel %vm469, %v2290, 0.0
    %2313 = vadd.xlane.f32.xlu0 %v2312
    %v2314 = vpop.xlane.xlu0 %2313
    %v2315 = vrcp.pop %v2293
    %v2316 = vrcp.pop %v2296
    %v2317 = vrcp.pop %v2299
    %v2318 = vrcp.pop %v2302
    %v2319 = vrcp.pop %v2305
    %v2320 = vrcp.pop %v2308
    %v2321 = vrcp.pop %v2311
    %v2322 = vrcp.pop %v2314
    %v2323 = vmul.f32 %v2276, %v2315
    %v2324 = vmul.f32 %v2278, %v2316
    %v2325 = vmul.f32 %v2280, %v2317
    %v2326 = vmul.f32 %v2282, %v2318
    %v2327 = vmul.f32 %v2284, %v2319
    %v2328 = vmul.f32 %v2286, %v2320
    %v2329 = vmul.f32 %v2288, %v2321
    %v2330 = vmul.f32 %v2290, %v2322
    %2332 = vrot.lane.b32.xlu0 %v2073, 64
    %v2333 = vpop.permute.xlu0 %2332
    %v2334 = vsel %vm469, %v2333, 0
    %v2337 = vsel %vm469, %v2323, 0
    %v2340 = vsel %vm469, %v2324, 0
    %v2343 = vsel %vm469, %v2325, 0
    %v2346 = vsel %vm469, %v2326, 0
    %v2349 = vsel %vm469, %v2327, 0
    %v2352 = vsel %vm469, %v2328, 0
    %v2355 = vsel %vm469, %v2329, 0
    %v2358 = vsel %vm469, %v2330, 0
    %2360 = vmatprep.subr.mxu0 0.0
    %2361 = vmatpush1.xpose.msra.mxu0 0.0
    %2362 = vmatprep.subr.mxu0 0.0
    %2363 = vmatpush1.xpose.msra.mxu0 0.0
    %2364 = vmatprep.subr.mxu0 0.0
    %2365 = vmatpush1.xpose.msra.mxu0 0.0
    %2366 = vmatprep.subr.mxu0 0.0
    %2367 = vmatpush1.xpose.msra.mxu0 0.0
    %2368 = vmatprep.subr.mxu0 0.0
    %2369 = vmatpush1.xpose.msra.mxu0 0.0
    %2370 = vmatprep.subr.mxu0 0.0
    %2371 = vmatpush1.xpose.msra.mxu0 0.0
    %2372 = vmatprep.subr.mxu0 0.0
    %2373 = vmatpush1.xpose.msra.mxu0 0.0
    %2374 = vmatprep.subr.mxu0 0.0
    %2375 = vmatpush1.xpose.msra.mxu0 0.0
    %2376 = vmatprep.subr.mxu0 0.0
    %2377 = vmatpush1.xpose.msra.mxu0 %v2358
    %2378 = vmatprep.subr.mxu0 0.0
    %2379 = vmatpush1.xpose.msra.mxu0 %v2355
    %2380 = vmatprep.subr.mxu0 0.0
    %2381 = vmatpush1.xpose.msra.mxu0 %v2352
    %2382 = vmatprep.subr.mxu0 0.0
    %2383 = vmatpush1.xpose.msra.mxu0 %v2349
    %2384 = vmatprep.subr.mxu0 0.0
    %2385 = vmatpush1.xpose.msra.mxu0 %v2346
    %2386 = vmatprep.subr.mxu0 0.0
    %2387 = vmatpush1.xpose.msra.mxu0 %v2343
    %2388 = vmatprep.subr.mxu0 0.0
    %2389 = vmatpush1.xpose.msra.mxu0 %v2340
    %2390 = vmatprep.subr.mxu0 0.0
    %2391 = vmatpush1.xpose.msra.mxu0 %v2337
    %2392 = vmatprep.subr.mxu0 0.0
    %2393 = vmatpush2.xpose.msra.mxu0 0.0
    %2394 = vmatprep.subr.mxu0 0.0
    %2395 = vmatpush2.xpose.msra.mxu0 0.0
    %2396 = vmatprep.subr.mxu0 0.0
    %2397 = vmatpush2.xpose.msra.mxu0 0.0
    %2398 = vmatprep.subr.mxu0 0.0
    %2399 = vmatpush2.xpose.msra.mxu0 0.0
    %2400 = vmatprep.subr.mxu0 0.0
    %2401 = vmatpush2.xpose.msra.mxu0 0.0
    %2402 = vmatprep.subr.mxu0 0.0
    %2403 = vmatpush2.xpose.msra.mxu0 0.0
    %2404 = vmatprep.subr.mxu0 0.0
    %2405 = vmatpush2.xpose.msra.mxu0 0.0
    %2406 = vmatprep.subr.mxu0 0.0
    %2407 = vmatpush2.xpose.msra.mxu0 0.0
    %2408 = vmatprep.subr.mxu0 0.0
    %2409 = vmatpush2.xpose.msra.mxu0 0.0
    %2410 = vmatprep.subr.mxu0 0.0
    %2411 = vmatpush2.xpose.msra.mxu0 0.0
    %2412 = vmatprep.subr.mxu0 0.0
    %2413 = vmatpush2.xpose.msra.mxu0 0.0
    %2414 = vmatprep.subr.mxu0 0.0
    %2415 = vmatpush2.xpose.msra.mxu0 0.0
    %2416 = vmatprep.subr.mxu0 0.0
    %2417 = vmatpush2.xpose.msra.mxu0 0.0
    %2418 = vmatprep.subr.mxu0 0.0
    %2419 = vmatpush2.xpose.msra.mxu0 0.0
    %2420 = vmatprep.subr.mxu0 0.0
    %2421 = vmatpush2.xpose.msra.mxu0 0.0
    %2422 = vmatprep.subr.mxu0 0.0
    %2423 = vmatpush2.xpose.msra.mxu0 0.0
    %2424 = vmatprep.mubr.f32.mxu0 0.0
    %2425 = vmatmul.mubr.f32.gmra.mxu0 %v2334
    %v2426 = vpop.f32.mrf.mxu0
    %v2427 = vadd.f32 0.0, %v2426
    %v2428 = vpop.f32.mrf.mxu0
    %2429 = vdwg.mxu0
    %2431 = vrot.lane.b32.xlu0 %v2427, 64
    %v2432 = vpop.permute.xlu0 %2431
    %2434 = vst.msk [vmem:[#allocation3 + $0x8] sm:$0xff] %vm2069, %v2432
    %v2435 = vld [vmem:[#allocation2 + $0x10] sm:$0xff]
    %v2436 = vld [vmem:[#allocation2 + $0x30] sm:$0xff]
    %v2437 = vld [vmem:[#allocation2 + $0x50] sm:$0xff]
    %2439 = vrot.lane.b32.xlu0 %v2435, 64
    %v2440 = vpop.permute.xlu0 %2439
    %2442 = vxpose.xlu0.b32.start [1/16] %v2440, 128
    %2443 = vxpose.xlu0.b32.cont [2/16] 0.0, 128
    %2444 = vxpose.xlu0.b32.cont [3/16] 0.0, 128
    %2445 = vxpose.xlu0.b32.cont [4/16] 0.0, 128
    %2446 = vxpose.xlu0.b32.cont [5/16] 0.0, 128
    %2447 = vxpose.xlu0.b32.cont [6/16] 0.0, 128
    %2448 = vxpose.xlu0.b32.cont [7/16] 0.0, 128
    %2449 = vxpose.xlu0.b32.cont [8/16] 0.0, 128
    %2450 = vxpose.xlu0.b32.cont [9/16] 0.0, 128
    %2451 = vxpose.xlu0.b32.cont [10/16] 0.0, 128
    %2452 = vxpose.xlu0.b32.cont [11/16] 0.0, 128
    %2453 = vxpose.xlu0.b32.cont [12/16] 0.0, 128
    %2454 = vxpose.xlu0.b32.cont [13/16] 0.0, 128
    %2455 = vxpose.xlu0.b32.cont [14/16] 0.0, 128
    %2456 = vxpose.xlu0.b32.cont [15/16] 0.0, 128
    %2457 = vxpose.xlu0.b32.end [16/16] 0.0, 128
    %v2458 = vpop.trf.xlu0
    %v2459 = vpop.trf.xlu0
    %v2460 = vpop.trf.xlu0
    %v2461 = vpop.trf.xlu0
    %v2462 = vpop.trf.xlu0
    %v2463 = vpop.trf.xlu0
    %v2464 = vpop.trf.xlu0
    %v2465 = vpop.trf.xlu0
    %v2466 = vpop.trf.xlu0
    %v2467 = vpop.trf.xlu0
    %v2468 = vpop.trf.xlu0
    %v2469 = vpop.trf.xlu0
    %v2470 = vpop.trf.xlu0
    %v2471 = vpop.trf.xlu0
    %v2472 = vpop.trf.xlu0
    %v2473 = vpop.trf.xlu0
    %2475 = vrot.lane.b32.xlu0 %v2436, 64
    %v2476 = vpop.permute.xlu0 %2475
    %v2479 = vsel %vm339, %v2458, 0
    %v2482 = vsel %vm339, %v2459, 0
    %v2485 = vsel %vm339, %v2460, 0
    %v2488 = vsel %vm339, %v2461, 0
    %v2491 = vsel %vm339, %v2462, 0
    %v2494 = vsel %vm339, %v2463, 0
    %v2497 = vsel %vm339, %v2464, 0
    %v2500 = vsel %vm339, %v2465, 0
    %2502 = vmatprep.subr.mxu0 0.0
    %2503 = vmatpush1.msra.mxu0 0.0
    %2504 = vmatprep.subr.mxu0 0.0
    %2505 = vmatpush1.msra.mxu0 0.0
    %2506 = vmatprep.subr.mxu0 0.0
    %2507 = vmatpush1.msra.mxu0 0.0
    %2508 = vmatprep.subr.mxu0 0.0
    %2509 = vmatpush1.msra.mxu0 0.0
    %2510 = vmatprep.subr.mxu0 0.0
    %2511 = vmatpush1.msra.mxu0 0.0
    %2512 = vmatprep.subr.mxu0 0.0
    %2513 = vmatpush1.msra.mxu0 0.0
    %2514 = vmatprep.subr.mxu0 0.0
    %2515 = vmatpush1.msra.mxu0 0.0
    %2516 = vmatprep.subr.mxu0 0.0
    %2517 = vmatpush1.msra.mxu0 0.0
    %2518 = vmatprep.subr.mxu0 0.0
    %2519 = vmatpush1.msra.mxu0 0.0
    %2520 = vmatprep.subr.mxu0 0.0
    %2521 = vmatpush1.msra.mxu0 0.0
    %2522 = vmatprep.subr.mxu0 0.0
    %2523 = vmatpush1.msra.mxu0 0.0
    %2524 = vmatprep.subr.mxu0 0.0
    %2525 = vmatpush1.msra.mxu0 0.0
    %2526 = vmatprep.subr.mxu0 0.0
    %2527 = vmatpush1.msra.mxu0 0.0
    %2528 = vmatprep.subr.mxu0 0.0
    %2529 = vmatpush1.msra.mxu0 0.0
    %2530 = vmatprep.subr.mxu0 0.0
    %2531 = vmatpush1.msra.mxu0 0.0
    %2532 = vmatprep.subr.mxu0 0.0
    %2533 = vmatpush1.msra.mxu0 %v2476
    %2534 = vmatprep.subr.mxu0 0.0
    %2535 = vmatpush2.msra.mxu0 0.0
    %2536 = vmatprep.subr.mxu0 0.0
    %2537 = vmatpush2.msra.mxu0 0.0
    %2538 = vmatprep.subr.mxu0 0.0
    %2539 = vmatpush2.msra.mxu0 0.0
    %2540 = vmatprep.subr.mxu0 0.0
    %2541 = vmatpush2.msra.mxu0 0.0
    %2542 = vmatprep.subr.mxu0 0.0
    %2543 = vmatpush2.msra.mxu0 0.0
    %2544 = vmatprep.subr.mxu0 0.0
    %2545 = vmatpush2.msra.mxu0 0.0
    %2546 = vmatprep.subr.mxu0 0.0
    %2547 = vmatpush2.msra.mxu0 0.0
    %2548 = vmatprep.subr.mxu0 0.0
    %2549 = vmatpush2.msra.mxu0 0.0
    %2550 = vmatprep.subr.mxu0 0.0
    %2551 = vmatpush2.msra.mxu0 0.0
    %2552 = vmatprep.subr.mxu0 0.0
    %2553 = vmatpush2.msra.mxu0 0.0
    %2554 = vmatprep.subr.mxu0 0.0
    %2555 = vmatpush2.msra.mxu0 0.0
    %2556 = vmatprep.subr.mxu0 0.0
    %2557 = vmatpush2.msra.mxu0 0.0
    %2558 = vmatprep.subr.mxu0 0.0
    %2559 = vmatpush2.msra.mxu0 0.0
    %2560 = vmatprep.subr.mxu0 0.0
    %2561 = vmatpush2.msra.mxu0 0.0
    %2562 = vmatprep.subr.mxu0 0.0
    %2563 = vmatpush2.msra.mxu0 0.0
    %2564 = vmatprep.subr.mxu0 0.0
    %2565 = vmatpush2.msra.mxu0 0.0
    %2566 = vmatprep.mubr.f32.mxu0 0.0
    %2567 = vmatmul.mubr.f32.gmra.mxu0 %v2479
    %v2568 = vpop.f32.mrf.mxu0
    %v2569 = vadd.f32 0.0, %v2568
    %v2570 = vpop.f32.mrf.mxu0
    %2571 = vmatprep.mubr.f32.mxu0 0.0
    %2572 = vmatmul.mubr.f32.gmra.mxu0 %v2482
    %v2573 = vpop.f32.mrf.mxu0
    %v2574 = vadd.f32 0.0, %v2573
    %v2575 = vpop.f32.mrf.mxu0
    %2576 = vmatprep.mubr.f32.mxu0 0.0
    %2577 = vmatmul.mubr.f32.gmra.mxu0 %v2485
    %v2578 = vpop.f32.mrf.mxu0
    %v2579 = vadd.f32 0.0, %v2578
    %v2580 = vpop.f32.mrf.mxu0
    %2581 = vmatprep.mubr.f32.mxu0 0.0
    %2582 = vmatmul.mubr.f32.gmra.mxu0 %v2488
    %v2583 = vpop.f32.mrf.mxu0
    %v2584 = vadd.f32 0.0, %v2583
    %v2585 = vpop.f32.mrf.mxu0
    %2586 = vmatprep.mubr.f32.mxu0 0.0
    %2587 = vmatmul.mubr.f32.gmra.mxu0 %v2491
    %v2588 = vpop.f32.mrf.mxu0
    %v2589 = vadd.f32 0.0, %v2588
    %v2590 = vpop.f32.mrf.mxu0
    %2591 = vmatprep.mubr.f32.mxu0 0.0
    %2592 = vmatmul.mubr.f32.gmra.mxu0 %v2494
    %v2593 = vpop.f32.mrf.mxu0
    %v2594 = vadd.f32 0.0, %v2593
    %v2595 = vpop.f32.mrf.mxu0
    %2596 = vmatprep.mubr.f32.mxu0 0.0
    %2597 = vmatmul.mubr.f32.gmra.mxu0 %v2497
    %v2598 = vpop.f32.mrf.mxu0
    %v2599 = vadd.f32 0.0, %v2598
    %v2600 = vpop.f32.mrf.mxu0
    %2601 = vmatprep.mubr.f32.mxu0 0.0
    %2602 = vmatmul.mubr.f32.gmra.mxu0 %v2500
    %v2603 = vpop.f32.mrf.mxu0
    %v2604 = vadd.f32 0.0, %v2603
    %v2605 = vpop.f32.mrf.mxu0
    %2606 = vdwg.mxu0
    %v2607 = vsel %vm469, %v2569, -inf
    %2608 = vmax.xlane.f32.xlu0 %v2607
    %v2609 = vpop.xlane.xlu0 %2608
    %v2610 = vsel %vm469, %v2574, -inf
    %2611 = vmax.xlane.f32.xlu0 %v2610
    %v2612 = vpop.xlane.xlu0 %2611
    %v2613 = vsel %vm469, %v2579, -inf
    %2614 = vmax.xlane.f32.xlu0 %v2613
    %v2615 = vpop.xlane.xlu0 %2614
    %v2616 = vsel %vm469, %v2584, -inf
    %2617 = vmax.xlane.f32.xlu0 %v2616
    %v2618 = vpop.xlane.xlu0 %2617
    %v2619 = vsel %vm469, %v2589, -inf
    %2620 = vmax.xlane.f32.xlu0 %v2619
    %v2621 = vpop.xlane.xlu0 %2620
    %v2622 = vsel %vm469, %v2594, -inf
    %2623 = vmax.xlane.f32.xlu0 %v2622
    %v2624 = vpop.xlane.xlu0 %2623
    %v2625 = vsel %vm469, %v2599, -inf
    %2626 = vmax.xlane.f32.xlu0 %v2625
    %v2627 = vpop.xlane.xlu0 %2626
    %v2628 = vsel %vm469, %v2604, -inf
    %2629 = vmax.xlane.f32.xlu0 %v2628
    %v2630 = vpop.xlane.xlu0 %2629
    %v2631 = vsub.f32 %v2569, %v2609
    %v2632 = vsub.f32 %v2574, %v2612
    %v2633 = vsub.f32 %v2579, %v2615
    %v2634 = vsub.f32 %v2584, %v2618
    %v2635 = vsub.f32 %v2589, %v2621
    %v2636 = vsub.f32 %v2594, %v2624
    %v2637 = vsub.f32 %v2599, %v2627
    %v2638 = vsub.f32 %v2604, %v2630
    %v2639 = vmul.f32 %v2631, 1.442695
    %v2640 = vpow.pop %v2639
    %v2641 = vmul.f32 %v2632, 1.442695
    %v2642 = vpow.pop %v2641
    %v2643 = vmul.f32 %v2633, 1.442695
    %v2644 = vpow.pop %v2643
    %v2645 = vmul.f32 %v2634, 1.442695
    %v2646 = vpow.pop %v2645
    %v2647 = vmul.f32 %v2635, 1.442695
    %v2648 = vpow.pop %v2647
    %v2649 = vmul.f32 %v2636, 1.442695
    %v2650 = vpow.pop %v2649
    %v2651 = vmul.f32 %v2637, 1.442695
    %v2652 = vpow.pop %v2651
    %v2653 = vmul.f32 %v2638, 1.442695
    %v2654 = vpow.pop %v2653
    %v2655 = vsel %vm469, %v2640, 0.0
    %2656 = vadd.xlane.f32.xlu0 %v2655
    %v2657 = vpop.xlane.xlu0 %2656
    %v2658 = vsel %vm469, %v2642, 0.0
    %2659 = vadd.xlane.f32.xlu0 %v2658
    %v2660 = vpop.xlane.xlu0 %2659
    %v2661 = vsel %vm469, %v2644, 0.0
    %2662 = vadd.xlane.f32.xlu0 %v2661
    %v2663 = vpop.xlane.xlu0 %2662
    %v2664 = vsel %vm469, %v2646, 0.0
    %2665 = vadd.xlane.f32.xlu0 %v2664
    %v2666 = vpop.xlane.xlu0 %2665
    %v2667 = vsel %vm469, %v2648, 0.0
    %2668 = vadd.xlane.f32.xlu0 %v2667
    %v2669 = vpop.xlane.xlu0 %2668
    %v2670 = vsel %vm469, %v2650, 0.0
    %2671 = vadd.xlane.f32.xlu0 %v2670
    %v2672 = vpop.xlane.xlu0 %2671
    %v2673 = vsel %vm469, %v2652, 0.0
    %2674 = vadd.xlane.f32.xlu0 %v2673
    %v2675 = vpop.xlane.xlu0 %2674
    %v2676 = vsel %vm469, %v2654, 0.0
    %2677 = vadd.xlane.f32.xlu0 %v2676
    %v2678 = vpop.xlane.xlu0 %2677
    %v2679 = vrcp.pop %v2657
    %v2680 = vrcp.pop %v2660
    %v2681 = vrcp.pop %v2663
    %v2682 = vrcp.pop %v2666
    %v2683 = vrcp.pop %v2669
    %v2684 = vrcp.pop %v2672
    %v2685 = vrcp.pop %v2675
    %v2686 = vrcp.pop %v2678
    %v2687 = vmul.f32 %v2640, %v2679
    %v2688 = vmul.f32 %v2642, %v2680
    %v2689 = vmul.f32 %v2644, %v2681
    %v2690 = vmul.f32 %v2646, %v2682
    %v2691 = vmul.f32 %v2648, %v2683
    %v2692 = vmul.f32 %v2650, %v2684
    %v2693 = vmul.f32 %v2652, %v2685
    %v2694 = vmul.f32 %v2654, %v2686
    %2696 = vrot.lane.b32.xlu0 %v2437, 64
    %v2697 = vpop.permute.xlu0 %2696
    %v2698 = vsel %vm469, %v2697, 0
    %v2701 = vsel %vm469, %v2687, 0
    %v2704 = vsel %vm469, %v2688, 0
    %v2707 = vsel %vm469, %v2689, 0
    %v2710 = vsel %vm469, %v2690, 0
    %v2713 = vsel %vm469, %v2691, 0
    %v2716 = vsel %vm469, %v2692, 0
    %v2719 = vsel %vm469, %v2693, 0
    %v2722 = vsel %vm469, %v2694, 0
    %2724 = vmatprep.subr.mxu0 0.0
    %2725 = vmatpush1.xpose.msra.mxu0 0.0
    %2726 = vmatprep.subr.mxu0 0.0
    %2727 = vmatpush1.xpose.msra.mxu0 0.0
    %2728 = vmatprep.subr.mxu0 0.0
    %2729 = vmatpush1.xpose.msra.mxu0 0.0
    %2730 = vmatprep.subr.mxu0 0.0
    %2731 = vmatpush1.xpose.msra.mxu0 0.0
    %2732 = vmatprep.subr.mxu0 0.0
    %2733 = vmatpush1.xpose.msra.mxu0 0.0
    %2734 = vmatprep.subr.mxu0 0.0
    %2735 = vmatpush1.xpose.msra.mxu0 0.0
    %2736 = vmatprep.subr.mxu0 0.0
    %2737 = vmatpush1.xpose.msra.mxu0 0.0
    %2738 = vmatprep.subr.mxu0 0.0
    %2739 = vmatpush1.xpose.msra.mxu0 0.0
    %2740 = vmatprep.subr.mxu0 0.0
    %2741 = vmatpush1.xpose.msra.mxu0 %v2722
    %2742 = vmatprep.subr.mxu0 0.0
    %2743 = vmatpush1.xpose.msra.mxu0 %v2719
    %2744 = vmatprep.subr.mxu0 0.0
    %2745 = vmatpush1.xpose.msra.mxu0 %v2716
    %2746 = vmatprep.subr.mxu0 0.0
    %2747 = vmatpush1.xpose.msra.mxu0 %v2713
    %2748 = vmatprep.subr.mxu0 0.0
    %2749 = vmatpush1.xpose.msra.mxu0 %v2710
    %2750 = vmatprep.subr.mxu0 0.0
    %2751 = vmatpush1.xpose.msra.mxu0 %v2707
    %2752 = vmatprep.subr.mxu0 0.0
    %2753 = vmatpush1.xpose.msra.mxu0 %v2704
    %2754 = vmatprep.subr.mxu0 0.0
    %2755 = vmatpush1.xpose.msra.mxu0 %v2701
    %2756 = vmatprep.subr.mxu0 0.0
    %2757 = vmatpush2.xpose.msra.mxu0 0.0
    %2758 = vmatprep.subr.mxu0 0.0
    %2759 = vmatpush2.xpose.msra.mxu0 0.0
    %2760 = vmatprep.subr.mxu0 0.0
    %2761 = vmatpush2.xpose.msra.mxu0 0.0
    %2762 = vmatprep.subr.mxu0 0.0
    %2763 = vmatpush2.xpose.msra.mxu0 0.0
    %2764 = vmatprep.subr.mxu0 0.0
    %2765 = vmatpush2.xpose.msra.mxu0 0.0
    %2766 = vmatprep.subr.mxu0 0.0
    %2767 = vmatpush2.xpose.msra.mxu0 0.0
    %2768 = vmatprep.subr.mxu0 0.0
    %2769 = vmatpush2.xpose.msra.mxu0 0.0
    %2770 = vmatprep.subr.mxu0 0.0
    %2771 = vmatpush2.xpose.msra.mxu0 0.0
    %2772 = vmatprep.subr.mxu0 0.0
    %2773 = vmatpush2.xpose.msra.mxu0 0.0
    %2774 = vmatprep.subr.mxu0 0.0
    %2775 = vmatpush2.xpose.msra.mxu0 0.0
    %2776 = vmatprep.subr.mxu0 0.0
    %2777 = vmatpush2.xpose.msra.mxu0 0.0
    %2778 = vmatprep.subr.mxu0 0.0
    %2779 = vmatpush2.xpose.msra.mxu0 0.0
    %2780 = vmatprep.subr.mxu0 0.0
    %2781 = vmatpush2.xpose.msra.mxu0 0.0
    %2782 = vmatprep.subr.mxu0 0.0
    %2783 = vmatpush2.xpose.msra.mxu0 0.0
    %2784 = vmatprep.subr.mxu0 0.0
    %2785 = vmatpush2.xpose.msra.mxu0 0.0
    %2786 = vmatprep.subr.mxu0 0.0
    %2787 = vmatpush2.xpose.msra.mxu0 0.0
    %2788 = vmatprep.mubr.f32.mxu0 0.0
    %2789 = vmatmul.mubr.f32.gmra.mxu0 %v2698
    %v2790 = vpop.f32.mrf.mxu0
    %v2791 = vadd.f32 0.0, %v2790
    %v2792 = vpop.f32.mrf.mxu0
    %2793 = vdwg.mxu0
    %2795 = vrot.lane.b32.xlu0 %v2791, 64
    %v2796 = vpop.permute.xlu0 %2795
    %2798 = vst.msk [vmem:[#allocation3 + $0x10] sm:$0xff] %vm2069, %v2796
    %v2799 = vld [vmem:[#allocation2 + $0x18] sm:$0xff]
    %v2800 = vld [vmem:[#allocation2 + $0x38] sm:$0xff]
    %v2801 = vld [vmem:[#allocation2 + $0x58] sm:$0xff]
    %2803 = vrot.lane.b32.xlu0 %v2799, 64
    %v2804 = vpop.permute.xlu0 %2803
    %2806 = vxpose.xlu0.b32.start [1/16] %v2804, 128
    %2807 = vxpose.xlu0.b32.cont [2/16] 0.0, 128
    %2808 = vxpose.xlu0.b32.cont [3/16] 0.0, 128
    %2809 = vxpose.xlu0.b32.cont [4/16] 0.0, 128
    %2810 = vxpose.xlu0.b32.cont [5/16] 0.0, 128
    %2811 = vxpose.xlu0.b32.cont [6/16] 0.0, 128
    %2812 = vxpose.xlu0.b32.cont [7/16] 0.0, 128
    %2813 = vxpose.xlu0.b32.cont [8/16] 0.0, 128
    %2814 = vxpose.xlu0.b32.cont [9/16] 0.0, 128
    %2815 = vxpose.xlu0.b32.cont [10/16] 0.0, 128
    %2816 = vxpose.xlu0.b32.cont [11/16] 0.0, 128
    %2817 = vxpose.xlu0.b32.cont [12/16] 0.0, 128
    %2818 = vxpose.xlu0.b32.cont [13/16] 0.0, 128
    %2819 = vxpose.xlu0.b32.cont [14/16] 0.0, 128
    %2820 = vxpose.xlu0.b32.cont [15/16] 0.0, 128
    %2821 = vxpose.xlu0.b32.end [16/16] 0.0, 128
    %v2822 = vpop.trf.xlu0
    %v2823 = vpop.trf.xlu0
    %v2824 = vpop.trf.xlu0
    %v2825 = vpop.trf.xlu0
    %v2826 = vpop.trf.xlu0
    %v2827 = vpop.trf.xlu0
    %v2828 = vpop.trf.xlu0
    %v2829 = vpop.trf.xlu0
    %v2830 = vpop.trf.xlu0
    %v2831 = vpop.trf.xlu0
    %v2832 = vpop.trf.xlu0
    %v2833 = vpop.trf.xlu0
    %v2834 = vpop.trf.xlu0
    %v2835 = vpop.trf.xlu0
    %v2836 = vpop.trf.xlu0
    %v2837 = vpop.trf.xlu0
    %2839 = vrot.lane.b32.xlu0 %v2800, 64
    %v2840 = vpop.permute.xlu0 %2839
    %v2843 = vsel %vm339, %v2822, 0
    %v2846 = vsel %vm339, %v2823, 0
    %v2849 = vsel %vm339, %v2824, 0
    %v2852 = vsel %vm339, %v2825, 0
    %v2855 = vsel %vm339, %v2826, 0
    %v2858 = vsel %vm339, %v2827, 0
    %v2861 = vsel %vm339, %v2828, 0
    %v2864 = vsel %vm339, %v2829, 0
    %2866 = vmatprep.subr.mxu0 0.0
    %2867 = vmatpush1.msra.mxu0 0.0
    %2868 = vmatprep.subr.mxu0 0.0
    %2869 = vmatpush1.msra.mxu0 0.0
    %2870 = vmatprep.subr.mxu0 0.0
    %2871 = vmatpush1.msra.mxu0 0.0
    %2872 = vmatprep.subr.mxu0 0.0
    %2873 = vmatpush1.msra.mxu0 0.0
    %2874 = vmatprep.subr.mxu0 0.0
    %2875 = vmatpush1.msra.mxu0 0.0
    %2876 = vmatprep.subr.mxu0 0.0
    %2877 = vmatpush1.msra.mxu0 0.0
    %2878 = vmatprep.subr.mxu0 0.0
    %2879 = vmatpush1.msra.mxu0 0.0
    %2880 = vmatprep.subr.mxu0 0.0
    %2881 = vmatpush1.msra.mxu0 0.0
    %2882 = vmatprep.subr.mxu0 0.0
    %2883 = vmatpush1.msra.mxu0 0.0
    %2884 = vmatprep.subr.mxu0 0.0
    %2885 = vmatpush1.msra.mxu0 0.0
    %2886 = vmatprep.subr.mxu0 0.0
    %2887 = vmatpush1.msra.mxu0 0.0
    %2888 = vmatprep.subr.mxu0 0.0
    %2889 = vmatpush1.msra.mxu0 0.0
    %2890 = vmatprep.subr.mxu0 0.0
    %2891 = vmatpush1.msra.mxu0 0.0
    %2892 = vmatprep.subr.mxu0 0.0
    %2893 = vmatpush1.msra.mxu0 0.0
    %2894 = vmatprep.subr.mxu0 0.0
    %2895 = vmatpush1.msra.mxu0 0.0
    %2896 = vmatprep.subr.mxu0 0.0
    %2897 = vmatpush1.msra.mxu0 %v2840
    %2898 = vmatprep.subr.mxu0 0.0
    %2899 = vmatpush2.msra.mxu0 0.0
    %2900 = vmatprep.subr.mxu0 0.0
    %2901 = vmatpush2.msra.mxu0 0.0
    %2902 = vmatprep.subr.mxu0 0.0
    %2903 = vmatpush2.msra.mxu0 0.0
    %2904 = vmatprep.subr.mxu0 0.0
    %2905 = vmatpush2.msra.mxu0 0.0
    %2906 = vmatprep.subr.mxu0 0.0
    %2907 = vmatpush2.msra.mxu0 0.0
    %2908 = vmatprep.subr.mxu0 0.0
    %2909 = vmatpush2.msra.mxu0 0.0
    %2910 = vmatprep.subr.mxu0 0.0
    %2911 = vmatpush2.msra.mxu0 0.0
    %2912 = vmatprep.subr.mxu0 0.0
    %2913 = vmatpush2.msra.mxu0 0.0
    %2914 = vmatprep.subr.mxu0 0.0
    %2915 = vmatpush2.msra.mxu0 0.0
    %2916 = vmatprep.subr.mxu0 0.0
    %2917 = vmatpush2.msra.mxu0 0.0
    %2918 = vmatprep.subr.mxu0 0.0
    %2919 = vmatpush2.msra.mxu0 0.0
    %2920 = vmatprep.subr.mxu0 0.0
    %2921 = vmatpush2.msra.mxu0 0.0
    %2922 = vmatprep.subr.mxu0 0.0
    %2923 = vmatpush2.msra.mxu0 0.0
    %2924 = vmatprep.subr.mxu0 0.0
    %2925 = vmatpush2.msra.mxu0 0.0
    %2926 = vmatprep.subr.mxu0 0.0
    %2927 = vmatpush2.msra.mxu0 0.0
    %2928 = vmatprep.subr.mxu0 0.0
    %2929 = vmatpush2.msra.mxu0 0.0
    %2930 = vmatprep.mubr.f32.mxu0 0.0
    %2931 = vmatmul.mubr.f32.gmra.mxu0 %v2843
    %v2932 = vpop.f32.mrf.mxu0
    %v2933 = vadd.f32 0.0, %v2932
    %v2934 = vpop.f32.mrf.mxu0
    %2935 = vmatprep.mubr.f32.mxu0 0.0
    %2936 = vmatmul.mubr.f32.gmra.mxu0 %v2846
    %v2937 = vpop.f32.mrf.mxu0
    %v2938 = vadd.f32 0.0, %v2937
    %v2939 = vpop.f32.mrf.mxu0
    %2940 = vmatprep.mubr.f32.mxu0 0.0
    %2941 = vmatmul.mubr.f32.gmra.mxu0 %v2849
    %v2942 = vpop.f32.mrf.mxu0
    %v2943 = vadd.f32 0.0, %v2942
    %v2944 = vpop.f32.mrf.mxu0
    %2945 = vmatprep.mubr.f32.mxu0 0.0
    %2946 = vmatmul.mubr.f32.gmra.mxu0 %v2852
    %v2947 = vpop.f32.mrf.mxu0
    %v2948 = vadd.f32 0.0, %v2947
    %v2949 = vpop.f32.mrf.mxu0
    %2950 = vmatprep.mubr.f32.mxu0 0.0
    %2951 = vmatmul.mubr.f32.gmra.mxu0 %v2855
    %v2952 = vpop.f32.mrf.mxu0
    %v2953 = vadd.f32 0.0, %v2952
    %v2954 = vpop.f32.mrf.mxu0
    %2955 = vmatprep.mubr.f32.mxu0 0.0
    %2956 = vmatmul.mubr.f32.gmra.mxu0 %v2858
    %v2957 = vpop.f32.mrf.mxu0
    %v2958 = vadd.f32 0.0, %v2957
    %v2959 = vpop.f32.mrf.mxu0
    %2960 = vmatprep.mubr.f32.mxu0 0.0
    %2961 = vmatmul.mubr.f32.gmra.mxu0 %v2861
    %v2962 = vpop.f32.mrf.mxu0
    %v2963 = vadd.f32 0.0, %v2962
    %v2964 = vpop.f32.mrf.mxu0
    %2965 = vmatprep.mubr.f32.mxu0 0.0
    %2966 = vmatmul.mubr.f32.gmra.mxu0 %v2864
    %v2967 = vpop.f32.mrf.mxu0
    %v2968 = vadd.f32 0.0, %v2967
    %v2969 = vpop.f32.mrf.mxu0
    %2970 = vdwg.mxu0
    %v2971 = vsel %vm469, %v2933, -inf
    %2972 = vmax.xlane.f32.xlu0 %v2971
    %v2973 = vpop.xlane.xlu0 %2972
    %v2974 = vsel %vm469, %v2938, -inf
    %2975 = vmax.xlane.f32.xlu0 %v2974
    %v2976 = vpop.xlane.xlu0 %2975
    %v2977 = vsel %vm469, %v2943, -inf
    %2978 = vmax.xlane.f32.xlu0 %v2977
    %v2979 = vpop.xlane.xlu0 %2978
    %v2980 = vsel %vm469, %v2948, -inf
    %2981 = vmax.xlane.f32.xlu0 %v2980
    %v2982 = vpop.xlane.xlu0 %2981
    %v2983 = vsel %vm469, %v2953, -inf
    %2984 = vmax.xlane.f32.xlu0 %v2983
    %v2985 = vpop.xlane.xlu0 %2984
    %v2986 = vsel %vm469, %v2958, -inf
    %2987 = vmax.xlane.f32.xlu0 %v2986
    %v2988 = vpop.xlane.xlu0 %2987
    %v2989 = vsel %vm469, %v2963, -inf
    %2990 = vmax.xlane.f32.xlu0 %v2989
    %v2991 = vpop.xlane.xlu0 %2990
    %v2992 = vsel %vm469, %v2968, -inf
    %2993 = vmax.xlane.f32.xlu0 %v2992
    %v2994 = vpop.xlane.xlu0 %2993
    %v2995 = vsub.f32 %v2933, %v2973
    %v2996 = vsub.f32 %v2938, %v2976
    %v2997 = vsub.f32 %v2943, %v2979
    %v2998 = vsub.f32 %v2948, %v2982
    %v2999 = vsub.f32 %v2953, %v2985
    %v3000 = vsub.f32 %v2958, %v2988
    %v3001 = vsub.f32 %v2963, %v2991
    %v3002 = vsub.f32 %v2968, %v2994
    %v3003 = vmul.f32 %v2995, 1.442695
    %v3004 = vpow.pop %v3003
    %v3005 = vmul.f32 %v2996, 1.442695
    %v3006 = vpow.pop %v3005
    %v3007 = vmul.f32 %v2997, 1.442695
    %v3008 = vpow.pop %v3007
    %v3009 = vmul.f32 %v2998, 1.442695
    %v3010 = vpow.pop %v3009
    %v3011 = vmul.f32 %v2999, 1.442695
    %v3012 = vpow.pop %v3011
    %v3013 = vmul.f32 %v3000, 1.442695
    %v3014 = vpow.pop %v3013
    %v3015 = vmul.f32 %v3001, 1.442695
    %v3016 = vpow.pop %v3015
    %v3017 = vmul.f32 %v3002, 1.442695
    %v3018 = vpow.pop %v3017
    %v3019 = vsel %vm469, %v3004, 0.0
    %3020 = vadd.xlane.f32.xlu0 %v3019
    %v3021 = vpop.xlane.xlu0 %3020
    %v3022 = vsel %vm469, %v3006, 0.0
    %3023 = vadd.xlane.f32.xlu0 %v3022
    %v3024 = vpop.xlane.xlu0 %3023
    %v3025 = vsel %vm469, %v3008, 0.0
    %3026 = vadd.xlane.f32.xlu0 %v3025
    %v3027 = vpop.xlane.xlu0 %3026
    %v3028 = vsel %vm469, %v3010, 0.0
    %3029 = vadd.xlane.f32.xlu0 %v3028
    %v3030 = vpop.xlane.xlu0 %3029
    %v3031 = vsel %vm469, %v3012, 0.0
    %3032 = vadd.xlane.f32.xlu0 %v3031
    %v3033 = vpop.xlane.xlu0 %3032
    %v3034 = vsel %vm469, %v3014, 0.0
    %3035 = vadd.xlane.f32.xlu0 %v3034
    %v3036 = vpop.xlane.xlu0 %3035
    %v3037 = vsel %vm469, %v3016, 0.0
    %3038 = vadd.xlane.f32.xlu0 %v3037
    %v3039 = vpop.xlane.xlu0 %3038
    %v3040 = vsel %vm469, %v3018, 0.0
    %3041 = vadd.xlane.f32.xlu0 %v3040
    %v3042 = vpop.xlane.xlu0 %3041
    %v3043 = vrcp.pop %v3021
    %v3044 = vrcp.pop %v3024
    %v3045 = vrcp.pop %v3027
    %v3046 = vrcp.pop %v3030
    %v3047 = vrcp.pop %v3033
    %v3048 = vrcp.pop %v3036
    %v3049 = vrcp.pop %v3039
    %v3050 = vrcp.pop %v3042
    %v3051 = vmul.f32 %v3004, %v3043
    %v3052 = vmul.f32 %v3006, %v3044
    %v3053 = vmul.f32 %v3008, %v3045
    %v3054 = vmul.f32 %v3010, %v3046
    %v3055 = vmul.f32 %v3012, %v3047
    %v3056 = vmul.f32 %v3014, %v3048
    %v3057 = vmul.f32 %v3016, %v3049
    %v3058 = vmul.f32 %v3018, %v3050
    %3060 = vrot.lane.b32.xlu0 %v2801, 64
    %v3061 = vpop.permute.xlu0 %3060
    %v3062 = vsel %vm469, %v3061, 0
    %v3065 = vsel %vm469, %v3051, 0
    %v3068 = vsel %vm469, %v3052, 0
    %v3071 = vsel %vm469, %v3053, 0
    %v3074 = vsel %vm469, %v3054, 0
    %v3077 = vsel %vm469, %v3055, 0
    %v3080 = vsel %vm469, %v3056, 0
    %v3083 = vsel %vm469, %v3057, 0
    %v3086 = vsel %vm469, %v3058, 0
    %3088 = vmatprep.subr.mxu0 0.0
    %3089 = vmatpush1.xpose.msra.mxu0 0.0
    %3090 = vmatprep.subr.mxu0 0.0
    %3091 = vmatpush1.xpose.msra.mxu0 0.0
    %3092 = vmatprep.subr.mxu0 0.0
    %3093 = vmatpush1.xpose.msra.mxu0 0.0
    %3094 = vmatprep.subr.mxu0 0.0
    %3095 = vmatpush1.xpose.msra.mxu0 0.0
    %3096 = vmatprep.subr.mxu0 0.0
    %3097 = vmatpush1.xpose.msra.mxu0 0.0
    %3098 = vmatprep.subr.mxu0 0.0
    %3099 = vmatpush1.xpose.msra.mxu0 0.0
    %3100 = vmatprep.subr.mxu0 0.0
    %3101 = vmatpush1.xpose.msra.mxu0 0.0
    %3102 = vmatprep.subr.mxu0 0.0
    %3103 = vmatpush1.xpose.msra.mxu0 0.0
    %3104 = vmatprep.subr.mxu0 0.0
    %3105 = vmatpush1.xpose.msra.mxu0 %v3086
    %3106 = vmatprep.subr.mxu0 0.0
    %3107 = vmatpush1.xpose.msra.mxu0 %v3083
    %3108 = vmatprep.subr.mxu0 0.0
    %3109 = vmatpush1.xpose.msra.mxu0 %v3080
    %3110 = vmatprep.subr.mxu0 0.0
    %3111 = vmatpush1.xpose.msra.mxu0 %v3077
    %3112 = vmatprep.subr.mxu0 0.0
    %3113 = vmatpush1.xpose.msra.mxu0 %v3074
    %3114 = vmatprep.subr.mxu0 0.0
    %3115 = vmatpush1.xpose.msra.mxu0 %v3071
    %3116 = vmatprep.subr.mxu0 0.0
    %3117 = vmatpush1.xpose.msra.mxu0 %v3068
    %3118 = vmatprep.subr.mxu0 0.0
    %3119 = vmatpush1.xpose.msra.mxu0 %v3065
    %3120 = vmatprep.subr.mxu0 0.0
    %3121 = vmatpush2.xpose.msra.mxu0 0.0
    %3122 = vmatprep.subr.mxu0 0.0
    %3123 = vmatpush2.xpose.msra.mxu0 0.0
    %3124 = vmatprep.subr.mxu0 0.0
    %3125 = vmatpush2.xpose.msra.mxu0 0.0
    %3126 = vmatprep.subr.mxu0 0.0
    %3127 = vmatpush2.xpose.msra.mxu0 0.0
    %3128 = vmatprep.subr.mxu0 0.0
    %3129 = vmatpush2.xpose.msra.mxu0 0.0
    %3130 = vmatprep.subr.mxu0 0.0
    %3131 = vmatpush2.xpose.msra.mxu0 0.0
    %3132 = vmatprep.subr.mxu0 0.0
    %3133 = vmatpush2.xpose.msra.mxu0 0.0
    %3134 = vmatprep.subr.mxu0 0.0
    %3135 = vmatpush2.xpose.msra.mxu0 0.0
    %3136 = vmatprep.subr.mxu0 0.0
    %3137 = vmatpush2.xpose.msra.mxu0 0.0
    %3138 = vmatprep.subr.mxu0 0.0
    %3139 = vmatpush2.xpose.msra.mxu0 0.0
    %3140 = vmatprep.subr.mxu0 0.0
    %3141 = vmatpush2.xpose.msra.mxu0 0.0
    %3142 = vmatprep.subr.mxu0 0.0
    %3143 = vmatpush2.xpose.msra.mxu0 0.0
    %3144 = vmatprep.subr.mxu0 0.0
    %3145 = vmatpush2.xpose.msra.mxu0 0.0
    %3146 = vmatprep.subr.mxu0 0.0
    %3147 = vmatpush2.xpose.msra.mxu0 0.0
    %3148 = vmatprep.subr.mxu0 0.0
    %3149 = vmatpush2.xpose.msra.mxu0 0.0
    %3150 = vmatprep.subr.mxu0 0.0
    %3151 = vmatpush2.xpose.msra.mxu0 0.0
    %3152 = vmatprep.mubr.f32.mxu0 0.0
    %3153 = vmatmul.mubr.f32.gmra.mxu0 %v3062
    %v3154 = vpop.f32.mrf.mxu0
    %v3155 = vadd.f32 0.0, %v3154
    %v3156 = vpop.f32.mrf.mxu0
    %3157 = vdwg.mxu0
    %3159 = vrot.lane.b32.xlu0 %v3155, 64
    %v3160 = vpop.permute.xlu0 %3159
    %3162 = vst.msk [vmem:[#allocation3 + $0x18] sm:$0xff] %vm2069, %v3160
    %v3163 = vld [vmem:[%s3] sm:$0xff]
    %v3164 = vld [vmem:[%s3 + $0x8] sm:$0xff]
    %v3165 = vld [vmem:[%s3 + $0x10] sm:$0xff]
    %v3166 = vld [vmem:[%s3 + $0x18] sm:$0xff]
    %v3167 = vld [vmem:[#allocation3] sm:$0xff]
    %v3168 = vld [vmem:[#allocation3 + $0x8] sm:$0xff]
    %v3169 = vld [vmem:[#allocation3 + $0x10] sm:$0xff]
    %v3170 = vld [vmem:[#allocation3 + $0x18] sm:$0xff]
    %v3171 = vld [vmem:[%s4] sm:$0xff]
    %v3172 = vld [vmem:[%s4 + $0x8] sm:$0xff]
    %v3173 = vld [vmem:[%s4 + $0x10] sm:$0xff]
    %v3174 = vld [vmem:[%s4 + $0x18] sm:$0xff]
    %3176 = vset.pattern.permute.xlu0 0
    %3177 = vperm.xlu0 %3176, %v3171
    %v3178 = vpop.permute.xlu0 %3177
    %3181 = vset.pattern.permute.xlu0 0
    %3182 = vperm.xlu0 %3181, %v3172
    %v3183 = vpop.permute.xlu0 %3182
    %3186 = vset.pattern.permute.xlu0 0
    %3187 = vperm.xlu0 %3186, %v3173
    %v3188 = vpop.permute.xlu0 %3187
    %3191 = vset.pattern.permute.xlu0 0
    %3192 = vperm.xlu0 %3191, %v3174
    %v3193 = vpop.permute.xlu0 %3192
    %v3196 = vsel %vm130, %v3163, 0
    %v3199 = vsel %vm130, %v3164, 0
    %v3202 = vsel %vm130, %v3165, 0
    %v3205 = vsel %vm130, %v3166, 0
    %3207 = vmatprep.subr.mxu0 0.0
    %3208 = vmatpush1.msra.mxu0 0.0
    %3209 = vmatprep.subr.mxu0 0.0
    %3210 = vmatpush1.msra.mxu0 0.0
    %3211 = vmatprep.subr.mxu0 0.0
    %3212 = vmatpush1.msra.mxu0 0.0
    %3213 = vmatprep.subr.mxu0 0.0
    %3214 = vmatpush1.msra.mxu0 0.0
    %3215 = vmatprep.subr.mxu0 0.0
    %3216 = vmatpush1.msra.mxu0 0.0
    %3217 = vmatprep.subr.mxu0 0.0
    %3218 = vmatpush1.msra.mxu0 0.0
    %3219 = vmatprep.subr.mxu0 0.0
    %3220 = vmatpush1.msra.mxu0 0.0
    %3221 = vmatprep.subr.mxu0 0.0
    %3222 = vmatpush1.msra.mxu0 0.0
    %3223 = vmatprep.subr.mxu0 0.0
    %3224 = vmatpush1.msra.mxu0 0.0
    %3225 = vmatprep.subr.mxu0 0.0
    %3226 = vmatpush1.msra.mxu0 0.0
    %3227 = vmatprep.subr.mxu0 0.0
    %3228 = vmatpush1.msra.mxu0 0.0
    %3229 = vmatprep.subr.mxu0 0.0
    %3230 = vmatpush1.msra.mxu0 0.0
    %3231 = vmatprep.subr.mxu0 0.0
    %3232 = vmatpush1.msra.mxu0 %v3170
    %3233 = vmatprep.subr.mxu0 0.0
    %3234 = vmatpush1.msra.mxu0 %v3169
    %3235 = vmatprep.subr.mxu0 0.0
    %3236 = vmatpush1.msra.mxu0 %v3168
    %3237 = vmatprep.subr.mxu0 0.0
    %3238 = vmatpush1.msra.mxu0 %v3167
    %3239 = vmatprep.subr.mxu0 0.0
    %3240 = vmatpush2.msra.mxu0 0.0
    %3241 = vmatprep.subr.mxu0 0.0
    %3242 = vmatpush2.msra.mxu0 0.0
    %3243 = vmatprep.subr.mxu0 0.0
    %3244 = vmatpush2.msra.mxu0 0.0
    %3245 = vmatprep.subr.mxu0 0.0
    %3246 = vmatpush2.msra.mxu0 0.0
    %3247 = vmatprep.subr.mxu0 0.0
    %3248 = vmatpush2.msra.mxu0 0.0
    %3249 = vmatprep.subr.mxu0 0.0
    %3250 = vmatpush2.msra.mxu0 0.0
    %3251 = vmatprep.subr.mxu0 0.0
    %3252 = vmatpush2.msra.mxu0 0.0
    %3253 = vmatprep.subr.mxu0 0.0
    %3254 = vmatpush2.msra.mxu0 0.0
    %3255 = vmatprep.subr.mxu0 0.0
    %3256 = vmatpush2.msra.mxu0 0.0
    %3257 = vmatprep.subr.mxu0 0.0
    %3258 = vmatpush2.msra.mxu0 0.0
    %3259 = vmatprep.subr.mxu0 0.0
    %3260 = vmatpush2.msra.mxu0 0.0
    %3261 = vmatprep.subr.mxu0 0.0
    %3262 = vmatpush2.msra.mxu0 0.0
    %3263 = vmatprep.subr.mxu0 0.0
    %3264 = vmatpush2.msra.mxu0 0.0
    %3265 = vmatprep.subr.mxu0 0.0
    %3266 = vmatpush2.msra.mxu0 0.0
    %3267 = vmatprep.subr.mxu0 0.0
    %3268 = vmatpush2.msra.mxu0 0.0
    %3269 = vmatprep.subr.mxu0 0.0
    %3270 = vmatpush2.msra.mxu0 0.0
    %3271 = vmatprep.mubr.f32.mxu0 0.0
    %3272 = vmatmul.mubr.f32.gmra.mxu0 %v3196
    %v3273 = vpop.f32.mrf.mxu0
    %v3274 = vadd.f32 %v3178, %v3273
    %v3275 = vpop.f32.mrf.mxu0
    %3276 = vmatprep.mubr.f32.mxu0 0.0
    %3277 = vmatmul.mubr.f32.gmra.mxu0 %v3199
    %v3278 = vpop.f32.mrf.mxu0
    %v3279 = vadd.f32 %v3183, %v3278
    %v3280 = vpop.f32.mrf.mxu0
    %3281 = vmatprep.mubr.f32.mxu0 0.0
    %3282 = vmatmul.mubr.f32.gmra.mxu0 %v3202
    %v3283 = vpop.f32.mrf.mxu0
    %v3284 = vadd.f32 %v3188, %v3283
    %v3285 = vpop.f32.mrf.mxu0
    %3286 = vmatprep.mubr.f32.mxu0 0.0
    %3287 = vmatmul.mubr.f32.gmra.mxu0 %v3205
    %v3288 = vpop.f32.mrf.mxu0
    %v3289 = vadd.f32 %v3193, %v3288
    %v3290 = vpop.f32.mrf.mxu0
    %3291 = vdwg.mxu0
    %v3292 = vld [vmem:[%s5] sm:$0xff]
    %v3293 = vld [vmem:[%s5 + $0x8] sm:$0xff]
    %v3294 = vld [vmem:[%s5 + $0x10] sm:$0xff]
    %v3295 = vld [vmem:[%s5 + $0x18] sm:$0xff]
    %v3296 = vld [vmem:[%s5 + $0x20] sm:$0xff]
    %v3297 = vld [vmem:[%s5 + $0x28] sm:$0xff]
    %v3298 = vld [vmem:[%s5 + $0x30] sm:$0xff]
    %v3299 = vld [vmem:[%s5 + $0x38] sm:$0xff]
    %v3300 = vld [vmem:[%s6] sm:$0xff]
    %v3301 = vld [vmem:[%s6 + $0x8] sm:$0xff]
    %v3302 = vld [vmem:[%s6 + $0x10] sm:$0xff]
    %v3303 = vld [vmem:[%s6 + $0x18] sm:$0xff]
    %v3304 = vld [vmem:[%s6 + $0x20] sm:$0xff]
    %v3305 = vld [vmem:[%s6 + $0x28] sm:$0xff]
    %v3306 = vld [vmem:[%s6 + $0x30] sm:$0xff]
    %v3307 = vld [vmem:[%s6 + $0x38] sm:$0xff]
    %v3309 = vsel %vm130, %v3300, 0
    %v3312 = vsel %vm130, %v3301, 0
    %v3315 = vsel %vm130, %v3302, 0
    %v3318 = vsel %vm130, %v3303, 0
    %v3321 = vsel %vm130, %v3304, 0
    %v3324 = vsel %vm130, %v3305, 0
    %v3327 = vsel %vm130, %v3306, 0
    %v3330 = vsel %vm130, %v3307, 0
    %3332 = vmatprep.subr.mxu0 0.0
    %3333 = vmatpush1.msra.mxu0 0.0
    %3334 = vmatprep.subr.mxu0 0.0
    %3335 = vmatpush1.msra.mxu0 0.0
    %3336 = vmatprep.subr.mxu0 0.0
    %3337 = vmatpush1.msra.mxu0 0.0
    %3338 = vmatprep.subr.mxu0 0.0
    %3339 = vmatpush1.msra.mxu0 0.0
    %3340 = vmatprep.subr.mxu0 0.0
    %3341 = vmatpush1.msra.mxu0 0.0
    %3342 = vmatprep.subr.mxu0 0.0
    %3343 = vmatpush1.msra.mxu0 0.0
    %3344 = vmatprep.subr.mxu0 0.0
    %3345 = vmatpush1.msra.mxu0 0.0
    %3346 = vmatprep.subr.mxu0 0.0
    %3347 = vmatpush1.msra.mxu0 0.0
    %3348 = vmatprep.subr.mxu0 0.0
    %3349 = vmatpush1.msra.mxu0 0.0
    %3350 = vmatprep.subr.mxu0 0.0
    %3351 = vmatpush1.msra.mxu0 0.0
    %3352 = vmatprep.subr.mxu0 0.0
    %3353 = vmatpush1.msra.mxu0 0.0
    %3354 = vmatprep.subr.mxu0 0.0
    %3355 = vmatpush1.msra.mxu0 0.0
    %3356 = vmatprep.subr.mxu0 0.0
    %3357 = vmatpush1.msra.mxu0 %v3289
    %3358 = vmatprep.subr.mxu0 0.0
    %3359 = vmatpush1.msra.mxu0 %v3284
    %3360 = vmatprep.subr.mxu0 0.0
    %3361 = vmatpush1.msra.mxu0 %v3279
    %3362 = vmatprep.subr.mxu0 0.0
    %3363 = vmatpush1.msra.mxu0 %v3274
    %3364 = vmatprep.subr.mxu0 0.0
    %3365 = vmatpush2.msra.mxu0 0.0
    %3366 = vmatprep.subr.mxu0 0.0
    %3367 = vmatpush2.msra.mxu0 0.0
    %3368 = vmatprep.subr.mxu0 0.0
    %3369 = vmatpush2.msra.mxu0 0.0
    %3370 = vmatprep.subr.mxu0 0.0
    %3371 = vmatpush2.msra.mxu0 0.0
    %3372 = vmatprep.subr.mxu0 0.0
    %3373 = vmatpush2.msra.mxu0 0.0
    %3374 = vmatprep.subr.mxu0 0.0
    %3375 = vmatpush2.msra.mxu0 0.0
    %3376 = vmatprep.subr.mxu0 0.0
    %3377 = vmatpush2.msra.mxu0 0.0
    %3378 = vmatprep.subr.mxu0 0.0
    %3379 = vmatpush2.msra.mxu0 0.0
    %3380 = vmatprep.subr.mxu0 0.0
    %3381 = vmatpush2.msra.mxu0 0.0
    %3382 = vmatprep.subr.mxu0 0.0
    %3383 = vmatpush2.msra.mxu0 0.0
    %3384 = vmatprep.subr.mxu0 0.0
    %3385 = vmatpush2.msra.mxu0 0.0
    %3386 = vmatprep.subr.mxu0 0.0
    %3387 = vmatpush2.msra.mxu0 0.0
    %3388 = vmatprep.subr.mxu0 0.0
    %3389 = vmatpush2.msra.mxu0 0.0
    %3390 = vmatprep.subr.mxu0 0.0
    %3391 = vmatpush2.msra.mxu0 0.0
    %3392 = vmatprep.subr.mxu0 0.0
    %3393 = vmatpush2.msra.mxu0 0.0
    %3394 = vmatprep.subr.mxu0 0.0
    %3395 = vmatpush2.msra.mxu0 0.0
    %3396 = vmatprep.mubr.f32.mxu0 0.0
    %3397 = vmatmul.mubr.f32.gmra.mxu0 %v3309
    %v3398 = vpop.f32.mrf.mxu0
    %v3399 = vadd.f32 0.0, %v3398
    %v3400 = vpop.f32.mrf.mxu0
    %3401 = vmatprep.mubr.f32.mxu0 0.0
    %3402 = vmatmul.mubr.f32.gmra.mxu0 %v3312
    %v3403 = vpop.f32.mrf.mxu0
    %v3404 = vadd.f32 0.0, %v3403
    %v3405 = vpop.f32.mrf.mxu0
    %3406 = vmatprep.mubr.f32.mxu0 0.0
    %3407 = vmatmul.mubr.f32.gmra.mxu0 %v3315
    %v3408 = vpop.f32.mrf.mxu0
    %v3409 = vadd.f32 0.0, %v3408
    %v3410 = vpop.f32.mrf.mxu0
    %3411 = vmatprep.mubr.f32.mxu0 0.0
    %3412 = vmatmul.mubr.f32.gmra.mxu0 %v3318
    %v3413 = vpop.f32.mrf.mxu0
    %v3414 = vadd.f32 0.0, %v3413
    %v3415 = vpop.f32.mrf.mxu0
    %3416 = vmatprep.mubr.f32.mxu0 0.0
    %3417 = vmatmul.mubr.f32.gmra.mxu0 %v3321
    %v3418 = vpop.f32.mrf.mxu0
    %v3419 = vadd.f32 0.0, %v3418
    %v3420 = vpop.f32.mrf.mxu0
    %3421 = vmatprep.mubr.f32.mxu0 0.0
    %3422 = vmatmul.mubr.f32.gmra.mxu0 %v3324
    %v3423 = vpop.f32.mrf.mxu0
    %v3424 = vadd.f32 0.0, %v3423
    %v3425 = vpop.f32.mrf.mxu0
    %3426 = vmatprep.mubr.f32.mxu0 0.0
    %3427 = vmatmul.mubr.f32.gmra.mxu0 %v3327
    %v3428 = vpop.f32.mrf.mxu0
    %v3429 = vadd.f32 0.0, %v3428
    %v3430 = vpop.f32.mrf.mxu0
    %3431 = vmatprep.mubr.f32.mxu0 0.0
    %3432 = vmatmul.mubr.f32.gmra.mxu0 %v3330
    %v3433 = vpop.f32.mrf.mxu0
    %v3434 = vadd.f32 0.0, %v3433
    %v3435 = vpop.f32.mrf.mxu0
    %3436 = vdwg.mxu0
    %v3438 = vsel %vm130, %v3292, 0
    %v3441 = vsel %vm130, %v3293, 0
    %v3444 = vsel %vm130, %v3294, 0
    %v3447 = vsel %vm130, %v3295, 0
    %v3450 = vsel %vm130, %v3296, 0
    %v3453 = vsel %vm130, %v3297, 0
    %v3456 = vsel %vm130, %v3298, 0
    %v3459 = vsel %vm130, %v3299, 0
    %3461 = vmatprep.subr.mxu0 0.0
    %3462 = vmatpush1.msra.mxu0 0.0
    %3463 = vmatprep.subr.mxu0 0.0
    %3464 = vmatpush1.msra.mxu0 0.0
    %3465 = vmatprep.subr.mxu0 0.0
    %3466 = vmatpush1.msra.mxu0 0.0
    %3467 = vmatprep.subr.mxu0 0.0
    %3468 = vmatpush1.msra.mxu0 0.0
    %3469 = vmatprep.subr.mxu0 0.0
    %3470 = vmatpush1.msra.mxu0 0.0
    %3471 = vmatprep.subr.mxu0 0.0
    %3472 = vmatpush1.msra.mxu0 0.0
    %3473 = vmatprep.subr.mxu0 0.0
    %3474 = vmatpush1.msra.mxu0 0.0
    %3475 = vmatprep.subr.mxu0 0.0
    %3476 = vmatpush1.msra.mxu0 0.0
    %3477 = vmatprep.subr.mxu0 0.0
    %3478 = vmatpush1.msra.mxu0 0.0
    %3479 = vmatprep.subr.mxu0 0.0
    %3480 = vmatpush1.msra.mxu0 0.0
    %3481 = vmatprep.subr.mxu0 0.0
    %3482 = vmatpush1.msra.mxu0 0.0
    %3483 = vmatprep.subr.mxu0 0.0
    %3484 = vmatpush1.msra.mxu0 0.0
    %3485 = vmatprep.subr.mxu0 0.0
    %3486 = vmatpush1.msra.mxu0 %v45
    %3487 = vmatprep.subr.mxu0 0.0
    %3488 = vmatpush1.msra.mxu0 %v44
    %3489 = vmatprep.subr.mxu0 0.0
    %3490 = vmatpush1.msra.mxu0 %v43
    %3491 = vmatprep.subr.mxu0 0.0
    %3492 = vmatpush1.msra.mxu0 %v42
    %3493 = vmatprep.subr.mxu0 0.0
    %3494 = vmatpush2.msra.mxu0 0.0
    %3495 = vmatprep.subr.mxu0 0.0
    %3496 = vmatpush2.msra.mxu0 0.0
    %3497 = vmatprep.subr.mxu0 0.0
    %3498 = vmatpush2.msra.mxu0 0.0
    %3499 = vmatprep.subr.mxu0 0.0
    %3500 = vmatpush2.msra.mxu0 0.0
    %3501 = vmatprep.subr.mxu0 0.0
    %3502 = vmatpush2.msra.mxu0 0.0
    %3503 = vmatprep.subr.mxu0 0.0
    %3504 = vmatpush2.msra.mxu0 0.0
    %3505 = vmatprep.subr.mxu0 0.0
    %3506 = vmatpush2.msra.mxu0 0.0
    %3507 = vmatprep.subr.mxu0 0.0
    %3508 = vmatpush2.msra.mxu0 0.0
    %3509 = vmatprep.subr.mxu0 0.0
    %3510 = vmatpush2.msra.mxu0 0.0
    %3511 = vmatprep.subr.mxu0 0.0
    %3512 = vmatpush2.msra.mxu0 0.0
    %3513 = vmatprep.subr.mxu0 0.0
    %3514 = vmatpush2.msra.mxu0 0.0
    %3515 = vmatprep.subr.mxu0 0.0
    %3516 = vmatpush2.msra.mxu0 0.0
    %3517 = vmatprep.subr.mxu0 0.0
    %3518 = vmatpush2.msra.mxu0 0.0
    %3519 = vmatprep.subr.mxu0 0.0
    %3520 = vmatpush2.msra.mxu0 0.0
    %3521 = vmatprep.subr.mxu0 0.0
    %3522 = vmatpush2.msra.mxu0 0.0
    %3523 = vmatprep.subr.mxu0 0.0
    %3524 = vmatpush2.msra.mxu0 0.0
    %3525 = vmatprep.mubr.f32.mxu0 0.0
    %3526 = vmatmul.mubr.f32.gmra.mxu0 %v3438
    %v3527 = vpop.f32.mrf.mxu0
    %v3528 = vadd.f32 %v3399, %v3527
    %v3529 = vpop.f32.mrf.mxu0
    %3530 = vmatprep.mubr.f32.mxu0 0.0
    %3531 = vmatmul.mubr.f32.gmra.mxu0 %v3441
    %v3532 = vpop.f32.mrf.mxu0
    %v3533 = vadd.f32 %v3404, %v3532
    %v3534 = vpop.f32.mrf.mxu0
    %3535 = vmatprep.mubr.f32.mxu0 0.0
    %3536 = vmatmul.mubr.f32.gmra.mxu0 %v3444
    %v3537 = vpop.f32.mrf.mxu0
    %v3538 = vadd.f32 %v3409, %v3537
    %v3539 = vpop.f32.mrf.mxu0
    %3540 = vmatprep.mubr.f32.mxu0 0.0
    %3541 = vmatmul.mubr.f32.gmra.mxu0 %v3447
    %v3542 = vpop.f32.mrf.mxu0
    %v3543 = vadd.f32 %v3414, %v3542
    %v3544 = vpop.f32.mrf.mxu0
    %3545 = vmatprep.mubr.f32.mxu0 0.0
    %3546 = vmatmul.mubr.f32.gmra.mxu0 %v3450
    %v3547 = vpop.f32.mrf.mxu0
    %v3548 = vadd.f32 %v3419, %v3547
    %v3549 = vpop.f32.mrf.mxu0
    %3550 = vmatprep.mubr.f32.mxu0 0.0
    %3551 = vmatmul.mubr.f32.gmra.mxu0 %v3453
    %v3552 = vpop.f32.mrf.mxu0
    %v3553 = vadd.f32 %v3424, %v3552
    %v3554 = vpop.f32.mrf.mxu0
    %3555 = vmatprep.mubr.f32.mxu0 0.0
    %3556 = vmatmul.mubr.f32.gmra.mxu0 %v3456
    %v3557 = vpop.f32.mrf.mxu0
    %v3558 = vadd.f32 %v3429, %v3557
    %v3559 = vpop.f32.mrf.mxu0
    %3560 = vmatprep.mubr.f32.mxu0 0.0
    %3561 = vmatmul.mubr.f32.gmra.mxu0 %v3459
    %v3562 = vpop.f32.mrf.mxu0
    %v3563 = vadd.f32 %v3434, %v3562
    %v3564 = vpop.f32.mrf.mxu0
    %3565 = vdwg.mxu0
    %v3566 = vld [vmem:[%s7] sm:$0xff]
    %v3567 = vld [vmem:[%s7 + $0x8] sm:$0xff]
    %v3568 = vld [vmem:[%s7 + $0x10] sm:$0xff]
    %v3569 = vld [vmem:[%s7 + $0x18] sm:$0xff]
    %v3570 = vld [vmem:[%s7 + $0x20] sm:$0xff]
    %v3571 = vld [vmem:[%s7 + $0x28] sm:$0xff]
    %v3572 = vld [vmem:[%s7 + $0x30] sm:$0xff]
    %v3573 = vld [vmem:[%s7 + $0x38] sm:$0xff]
    %3575 = vset.pattern.permute.xlu0 0
    %3576 = vperm.xlu0 %3575, %v3566
    %v3577 = vpop.permute.xlu0 %3576
    %3580 = vset.pattern.permute.xlu0 0
    %3581 = vperm.xlu0 %3580, %v3567
    %v3582 = vpop.permute.xlu0 %3581
    %3585 = vset.pattern.permute.xlu0 0
    %3586 = vperm.xlu0 %3585, %v3568
    %v3587 = vpop.permute.xlu0 %3586
    %3590 = vset.pattern.permute.xlu0 0
    %3591 = vperm.xlu0 %3590, %v3569
    %v3592 = vpop.permute.xlu0 %3591
    %3595 = vset.pattern.permute.xlu0 0
    %3596 = vperm.xlu0 %3595, %v3570
    %v3597 = vpop.permute.xlu0 %3596
    %3600 = vset.pattern.permute.xlu0 0
    %3601 = vperm.xlu0 %3600, %v3571
    %v3602 = vpop.permute.xlu0 %3601
    %3605 = vset.pattern.permute.xlu0 0
    %3606 = vperm.xlu0 %3605, %v3572
    %v3607 = vpop.permute.xlu0 %3606
    %3610 = vset.pattern.permute.xlu0 0
    %3611 = vperm.xlu0 %3610, %v3573
    %v3612 = vpop.permute.xlu0 %3611
    %v3614 = vadd.f32 %v3528, %v3577
    %v3615 = vadd.f32 %v3533, %v3582
    %v3616 = vadd.f32 %v3538, %v3587
    %v3617 = vadd.f32 %v3543, %v3592
    %v3618 = vadd.f32 %v3548, %v3597
    %v3619 = vadd.f32 %v3553, %v3602
    %v3620 = vadd.f32 %v3558, %v3607
    %v3621 = vadd.f32 %v3563, %v3612
    %3622 = vst [vmem:[#allocation4] sm:$0xff] %v3614
    %3623 = vst [vmem:[#allocation4 + $0x8] sm:$0xff] %v3615
    %3624 = vst [vmem:[#allocation4 + $0x10] sm:$0xff] %v3616
    %3625 = vst [vmem:[#allocation4 + $0x18] sm:$0xff] %v3617
    %3626 = vst [vmem:[#allocation4 + $0x20] sm:$0xff] %v3618
    %3627 = vst [vmem:[#allocation4 + $0x28] sm:$0xff] %v3619
    %3628 = vst [vmem:[#allocation4 + $0x30] sm:$0xff] %v3620
    %3629 = vst [vmem:[#allocation4 + $0x38] sm:$0xff] %v3621
    %v3630 = vld [vmem:[#allocation4] sm:$0xff]
    %v3631 = vld [vmem:[#allocation4 + $0x8] sm:$0xff]
    %v3632 = vld [vmem:[#allocation4 + $0x10] sm:$0xff]
    %v3633 = vld [vmem:[#allocation4 + $0x18] sm:$0xff]
    %v3634 = vld [vmem:[#allocation4 + $0x20] sm:$0xff]
    %v3635 = vld [vmem:[#allocation4 + $0x28] sm:$0xff]
    %v3636 = vld [vmem:[#allocation4 + $0x30] sm:$0xff]
    %v3637 = vld [vmem:[#allocation4 + $0x38] sm:$0xff]
    %3638 = vadd.xlane.f32.xlu0 %v3630
    %v3639 = vpop.xlane.xlu0 %3638
    %3640 = vadd.xlane.f32.xlu0 %v3631
    %v3641 = vpop.xlane.xlu0 %3640
    %3642 = vadd.xlane.f32.xlu0 %v3632
    %v3643 = vpop.xlane.xlu0 %3642
    %3644 = vadd.xlane.f32.xlu0 %v3633
    %v3645 = vpop.xlane.xlu0 %3644
    %3646 = vadd.xlane.f32.xlu0 %v3634
    %v3647 = vpop.xlane.xlu0 %3646
    %3648 = vadd.xlane.f32.xlu0 %v3635
    %v3649 = vpop.xlane.xlu0 %3648
    %3650 = vadd.xlane.f32.xlu0 %v3636
    %v3651 = vpop.xlane.xlu0 %3650
    %3652 = vadd.xlane.f32.xlu0 %v3637
    %v3653 = vpop.xlane.xlu0 %3652
    %v3654 = vmul.f32 %v3639, 0.0078125
    %v3655 = vmul.f32 %v3641, 0.0078125
    %v3656 = vmul.f32 %v3643, 0.0078125
    %v3657 = vmul.f32 %v3645, 0.0078125
    %v3658 = vmul.f32 %v3647, 0.0078125
    %v3659 = vmul.f32 %v3649, 0.0078125
    %v3660 = vmul.f32 %v3651, 0.0078125
    %v3661 = vmul.f32 %v3653, 0.0078125
    %v3662 = vsub.f32 %v3630, %v3654
    %v3663 = vsub.f32 %v3631, %v3655
    %v3664 = vsub.f32 %v3632, %v3656
    %v3665 = vsub.f32 %v3633, %v3657
    %v3666 = vsub.f32 %v3634, %v3658
    %v3667 = vsub.f32 %v3635, %v3659
    %v3668 = vsub.f32 %v3636, %v3660
    %v3669 = vsub.f32 %v3637, %v3661
    %v3670 = vmul.f32 %v3662, %v3662
    %v3671 = vmul.f32 %v3663, %v3663
    %v3672 = vmul.f32 %v3664, %v3664
    %v3673 = vmul.f32 %v3665, %v3665
    %v3674 = vmul.f32 %v3666, %v3666
    %v3675 = vmul.f32 %v3667, %v3667
    %v3676 = vmul.f32 %v3668, %v3668
    %v3677 = vmul.f32 %v3669, %v3669
    %3678 = vadd.xlane.f32.xlu0 %v3670
    %v3679 = vpop.xlane.xlu0 %3678
    %3680 = vadd.xlane.f32.xlu0 %v3671
    %v3681 = vpop.xlane.xlu0 %3680
    %3682 = vadd.xlane.f32.xlu0 %v3672
    %v3683 = vpop.xlane.xlu0 %3682
    %3684 = vadd.xlane.f32.xlu0 %v3673
    %v3685 = vpop.xlane.xlu0 %3684
    %3686 = vadd.xlane.f32.xlu0 %v3674
    %v3687 = vpop.xlane.xlu0 %3686
    %3688 = vadd.xlane.f32.xlu0 %v3675
    %v3689 = vpop.xlane.xlu0 %3688
    %3690 = vadd.xlane.f32.xlu0 %v3676
    %v3691 = vpop.xlane.xlu0 %3690
    %3692 = vadd.xlane.f32.xlu0 %v3677
    %v3693 = vpop.xlane.xlu0 %3692
    %v3694 = vmul.f32 %v3679, 0.0078125
    %v3695 = vmul.f32 %v3681, 0.0078125
    %v3696 = vmul.f32 %v3683, 0.0078125
    %v3697 = vmul.f32 %v3685, 0.0078125
    %v3698 = vmul.f32 %v3687, 0.0078125
    %v3699 = vmul.f32 %v3689, 0.0078125
    %v3700 = vmul.f32 %v3691, 0.0078125
    %v3701 = vmul.f32 %v3693, 0.0078125
    %v3702 = vadd.f32 %v3694, 1e-05
    %v3703 = vadd.f32 %v3695, 1e-05
    %v3704 = vadd.f32 %v3696, 1e-05
    %v3705 = vadd.f32 %v3697, 1e-05
    %v3706 = vadd.f32 %v3698, 1e-05
    %v3707 = vadd.f32 %v3699, 1e-05
    %v3708 = vadd.f32 %v3700, 1e-05
    %v3709 = vadd.f32 %v3701, 1e-05
    %v3710 = vrsqrt.pop %v3702
    %v3711 = vrsqrt.pop %v3703
    %v3712 = vrsqrt.pop %v3704
    %v3713 = vrsqrt.pop %v3705
    %v3714 = vrsqrt.pop %v3706
    %v3715 = vrsqrt.pop %v3707
    %v3716 = vrsqrt.pop %v3708
    %v3717 = vrsqrt.pop %v3709
    %v3718 = vld [vmem:[%s8] sm:$0xff]
    %v3719 = vld [vmem:[%s8 + $0x8] sm:$0xff]
    %v3720 = vld [vmem:[%s8 + $0x10] sm:$0xff]
    %v3721 = vld [vmem:[%s8 + $0x18] sm:$0xff]
    %v3722 = vld [vmem:[%s8 + $0x20] sm:$0xff]
    %v3723 = vld [vmem:[%s8 + $0x28] sm:$0xff]
    %v3724 = vld [vmem:[%s8 + $0x30] sm:$0xff]
    %v3725 = vld [vmem:[%s8 + $0x38] sm:$0xff]
    %v3726 = vmul.f32 %v3710, %v3718
    %v3727 = vmul.f32 %v3711, %v3719
    %v3728 = vmul.f32 %v3712, %v3720
    %v3729 = vmul.f32 %v3713, %v3721
    %v3730 = vmul.f32 %v3714, %v3722
    %v3731 = vmul.f32 %v3715, %v3723
    %v3732 = vmul.f32 %v3716, %v3724
    %v3733 = vmul.f32 %v3717, %v3725
    %3735 = vset.pattern.permute.xlu0 0
    %3736 = vperm.xlu0 %3735, %v3726
    %v3737 = vpop.permute.xlu0 %3736
    %3740 = vset.pattern.permute.xlu0 0
    %3741 = vperm.xlu0 %3740, %v3727
    %v3742 = vpop.permute.xlu0 %3741
    %3745 = vset.pattern.permute.xlu0 0
    %3746 = vperm.xlu0 %3745, %v3728
    %v3747 = vpop.permute.xlu0 %3746
    %3750 = vset.pattern.permute.xlu0 0
    %3751 = vperm.xlu0 %3750, %v3729
    %v3752 = vpop.permute.xlu0 %3751
    %3755 = vset.pattern.permute.xlu0 0
    %3756 = vperm.xlu0 %3755, %v3730
    %v3757 = vpop.permute.xlu0 %3756
    %3760 = vset.pattern.permute.xlu0 0
    %3761 = vperm.xlu0 %3760, %v3731
    %v3762 = vpop.permute.xlu0 %3761
    %3765 = vset.pattern.permute.xlu0 0
    %3766 = vperm.xlu0 %3765, %v3732
    %v3767 = vpop.permute.xlu0 %3766
    %3770 = vset.pattern.permute.xlu0 0
    %3771 = vperm.xlu0 %3770, %v3733
    %v3772 = vpop.permute.xlu0 %3771
    %v3774 = vmul.f32 %v3662, %v3737
    %v3775 = vmul.f32 %v3663, %v3742
    %v3776 = vmul.f32 %v3664, %v3747
    %v3777 = vmul.f32 %v3665, %v3752
    %v3778 = vmul.f32 %v3666, %v3757
    %v3779 = vmul.f32 %v3667, %v3762
    %v3780 = vmul.f32 %v3668, %v3767
    %v3781 = vmul.f32 %v3669, %v3772
    %v3782 = vld [vmem:[%s9] sm:$0xff]
    %v3783 = vld [vmem:[%s9 + $0x8] sm:$0xff]
    %v3784 = vld [vmem:[%s9 + $0x10] sm:$0xff]
    %v3785 = vld [vmem:[%s9 + $0x18] sm:$0xff]
    %v3786 = vld [vmem:[%s9 + $0x20] sm:$0xff]
    %v3787 = vld [vmem:[%s9 + $0x28] sm:$0xff]
    %v3788 = vld [vmem:[%s9 + $0x30] sm:$0xff]
    %v3789 = vld [vmem:[%s9 + $0x38] sm:$0xff]
    %3791 = vset.pattern.permute.xlu0 0
    %3792 = vperm.xlu0 %3791, %v3782
    %v3793 = vpop.permute.xlu0 %3792
    %3796 = vset.pattern.permute.xlu0 0
    %3797 = vperm.xlu0 %3796, %v3783
    %v3798 = vpop.permute.xlu0 %3797
    %3801 = vset.pattern.permute.xlu0 0
    %3802 = vperm.xlu0 %3801, %v3784
    %v3803 = vpop.permute.xlu0 %3802
    %3806 = vset.pattern.permute.xlu0 0
    %3807 = vperm.xlu0 %3806, %v3785
    %v3808 = vpop.permute.xlu0 %3807
    %3811 = vset.pattern.permute.xlu0 0
    %3812 = vperm.xlu0 %3811, %v3786
    %v3813 = vpop.permute.xlu0 %3812
    %3816 = vset.pattern.permute.xlu0 0
    %3817 = vperm.xlu0 %3816, %v3787
    %v3818 = vpop.permute.xlu0 %3817
    %3821 = vset.pattern.permute.xlu0 0
    %3822 = vperm.xlu0 %3821, %v3788
    %v3823 = vpop.permute.xlu0 %3822
    %3826 = vset.pattern.permute.xlu0 0
    %3827 = vperm.xlu0 %3826, %v3789
    %v3828 = vpop.permute.xlu0 %3827
    %v3830 = vadd.f32 %v3774, %v3793
    %v3831 = vadd.f32 %v3775, %v3798
    %v3832 = vadd.f32 %v3776, %v3803
    %v3833 = vadd.f32 %v3777, %v3808
    %v3834 = vadd.f32 %v3778, %v3813
    %v3835 = vadd.f32 %v3779, %v3818
    %v3836 = vadd.f32 %v3780, %v3823
    %v3837 = vadd.f32 %v3781, %v3828
    %v3838 = vmax.f32 %v3830, 0.0
    %v3839 = vmax.f32 %v3831, 0.0
    %v3840 = vmax.f32 %v3832, 0.0
    %v3841 = vmax.f32 %v3833, 0.0
    %v3842 = vmax.f32 %v3834, 0.0
    %v3843 = vmax.f32 %v3835, 0.0
    %v3844 = vmax.f32 %v3836, 0.0
    %v3845 = vmax.f32 %v3837, 0.0
    %v3846 = vld [vmem:[%s10] sm:$0xff]
    %v3847 = vld [vmem:[%s10 + $0x8] sm:$0xff]
    %v3848 = vld [vmem:[%s10 + $0x10] sm:$0xff]
    %v3849 = vld [vmem:[%s10 + $0x18] sm:$0xff]
    %v3850 = vld [vmem:[%s11] sm:$0xff]
    %v3851 = vld [vmem:[%s11 + $0x8] sm:$0xff]
    %v3852 = vld [vmem:[%s11 + $0x10] sm:$0xff]
    %v3853 = vld [vmem:[%s11 + $0x18] sm:$0xff]
    %3855 = vset.pattern.permute.xlu0 0
    %3856 = vperm.xlu0 %3855, %v3850
    %v3857 = vpop.permute.xlu0 %3856
    %3860 = vset.pattern.permute.xlu0 0
    %3861 = vperm.xlu0 %3860, %v3851
    %v3862 = vpop.permute.xlu0 %3861
    %3865 = vset.pattern.permute.xlu0 0
    %3866 = vperm.xlu0 %3865, %v3852
    %v3867 = vpop.permute.xlu0 %3866
    %3870 = vset.pattern.permute.xlu0 0
    %3871 = vperm.xlu0 %3870, %v3853
    %v3872 = vpop.permute.xlu0 %3871
    %v3875 = vsel %vm469, %v3846, 0
    %v3878 = vsel %vm469, %v3847, 0
    %v3881 = vsel %vm469, %v3848, 0
    %v3884 = vsel %vm469, %v3849, 0
    %3886 = vmatprep.subr.mxu0 0.0
    %3887 = vmatpush1.msra.mxu0 0.0
    %3888 = vmatprep.subr.mxu0 0.0
    %3889 = vmatpush1.msra.mxu0 0.0
    %3890 = vmatprep.subr.mxu0 0.0
    %3891 = vmatpush1.msra.mxu0 0.0
    %3892 = vmatprep.subr.mxu0 0.0
    %3893 = vmatpush1.msra.mxu0 0.0
    %3894 = vmatprep.subr.mxu0 0.0
    %3895 = vmatpush1.msra.mxu0 0.0
    %3896 = vmatprep.subr.mxu0 0.0
    %3897 = vmatpush1.msra.mxu0 0.0
    %3898 = vmatprep.subr.mxu0 0.0
    %3899 = vmatpush1.msra.mxu0 0.0
    %3900 = vmatprep.subr.mxu0 0.0
    %3901 = vmatpush1.msra.mxu0 0.0
    %3902 = vmatprep.subr.mxu0 0.0
    %3903 = vmatpush1.msra.mxu0 %v3845
    %3904 = vmatprep.subr.mxu0 0.0
    %3905 = vmatpush1.msra.mxu0 %v3844
    %3906 = vmatprep.subr.mxu0 0.0
    %3907 = vmatpush1.msra.mxu0 %v3843
    %3908 = vmatprep.subr.mxu0 0.0
    %3909 = vmatpush1.msra.mxu0 %v3842
    %3910 = vmatprep.subr.mxu0 0.0
    %3911 = vmatpush1.msra.mxu0 %v3841
    %3912 = vmatprep.subr.mxu0 0.0
    %3913 = vmatpush1.msra.mxu0 %v3840
    %3914 = vmatprep.subr.mxu0 0.0
    %3915 = vmatpush1.msra.mxu0 %v3839
    %3916 = vmatprep.subr.mxu0 0.0
    %3917 = vmatpush1.msra.mxu0 %v3838
    %3918 = vmatprep.subr.mxu0 0.0
    %3919 = vmatpush2.msra.mxu0 0.0
    %3920 = vmatprep.subr.mxu0 0.0
    %3921 = vmatpush2.msra.mxu0 0.0
    %3922 = vmatprep.subr.mxu0 0.0
    %3923 = vmatpush2.msra.mxu0 0.0
    %3924 = vmatprep.subr.mxu0 0.0
    %3925 = vmatpush2.msra.mxu0 0.0
    %3926 = vmatprep.subr.mxu0 0.0
    %3927 = vmatpush2.msra.mxu0 0.0
    %3928 = vmatprep.subr.mxu0 0.0
    %3929 = vmatpush2.msra.mxu0 0.0
    %3930 = vmatprep.subr.mxu0 0.0
    %3931 = vmatpush2.msra.mxu0 0.0
    %3932 = vmatprep.subr.mxu0 0.0
    %3933 = vmatpush2.msra.mxu0 0.0
    %3934 = vmatprep.subr.mxu0 0.0
    %3935 = vmatpush2.msra.mxu0 0.0
    %3936 = vmatprep.subr.mxu0 0.0
    %3937 = vmatpush2.msra.mxu0 0.0
    %3938 = vmatprep.subr.mxu0 0.0
    %3939 = vmatpush2.msra.mxu0 0.0
    %3940 = vmatprep.subr.mxu0 0.0
    %3941 = vmatpush2.msra.mxu0 0.0
    %3942 = vmatprep.subr.mxu0 0.0
    %3943 = vmatpush2.msra.mxu0 0.0
    %3944 = vmatprep.subr.mxu0 0.0
    %3945 = vmatpush2.msra.mxu0 0.0
    %3946 = vmatprep.subr.mxu0 0.0
    %3947 = vmatpush2.msra.mxu0 0.0
    %3948 = vmatprep.subr.mxu0 0.0
    %3949 = vmatpush2.msra.mxu0 0.0
    %3950 = vmatprep.mubr.f32.mxu0 0.0
    %3951 = vmatmul.mubr.f32.gmra.mxu0 %v3875
    %v3952 = vpop.f32.mrf.mxu0
    %v3953 = vadd.f32 %v3857, %v3952
    %v3954 = vpop.f32.mrf.mxu0
    %3955 = vmatprep.mubr.f32.mxu0 0.0
    %3956 = vmatmul.mubr.f32.gmra.mxu0 %v3878
    %v3957 = vpop.f32.mrf.mxu0
    %v3958 = vadd.f32 %v3862, %v3957
    %v3959 = vpop.f32.mrf.mxu0
    %3960 = vmatprep.mubr.f32.mxu0 0.0
    %3961 = vmatmul.mubr.f32.gmra.mxu0 %v3881
    %v3962 = vpop.f32.mrf.mxu0
    %v3963 = vadd.f32 %v3867, %v3962
    %v3964 = vpop.f32.mrf.mxu0
    %3965 = vmatprep.mubr.f32.mxu0 0.0
    %3966 = vmatmul.mubr.f32.gmra.mxu0 %v3884
    %v3967 = vpop.f32.mrf.mxu0
    %v3968 = vadd.f32 %v3872, %v3967
    %v3969 = vpop.f32.mrf.mxu0
    %3970 = vdwg.mxu0
    %3971 = vst [vmem:[#allocation5] sm:$0xff] %v3953
    %3972 = vst [vmem:[#allocation5 + $0x8] sm:$0xff] %v3958
    %3973 = vst [vmem:[#allocation5 + $0x10] sm:$0xff] %v3963
    %3974 = vst [vmem:[#allocation5 + $0x18] sm:$0xff] %v3968
    // Predicated region
    $region50: #{tpu_custom_call.1} parent=1 // pred_check
      _
    $region51: #{tpu_custom_call.1} parent=1 // pred_check_branch
      %3976 = sbr.rel (0) target = $region53
    $region52: #{tpu_custom_call.1} parent=1 // pred_region
      %s3978 = ssub.s32 512, 512
      %3979 = vsyncadd [#allocation6], %s3978
      %s3980 = sshll.u32 [#allocation5], 4
      %s3981 = int_to_ptr.vmem [resolvable:$true] %s3980
      %3986 = dma.vmem_to_hbm [thread:$0]  %s3981, 512, %s12, [#allocation6], 128, 128, 8
    $region53: #{tpu_custom_call.1} parent=1 // pred_fallthru
      _
    // Predicated region
    $region54: #{tpu_custom_call.1} parent=1 // pred_check
      _
    $region55: #{tpu_custom_call.1} parent=1 // pred_check_branch
      %3988 = sbr.rel (0) target = $region57
    $region56: #{tpu_custom_call.1} parent=1 // pred_region
      %3989 = dma.done [#allocation6], 512
    $region57: #{tpu_custom_call.1} parent=1 // pred_fallthru
      _
    %3990 = vsyncpa [#allocation6], 1

</llo_original>
